<compile_context>
chip_gen: v6e
topology: v6e:2x2x1
jax: 0.10.0
libtpu: 0.0.40
codegen_flags: <defaults>
</compile_context>

<pallas_src>
import functools

import jax
import jax.numpy as jnp
from jax.experimental import pallas as pl
from jax.experimental.pallas import tpu as pltpu


# ---------------------------------------------------------------------------
# Pallas kernel 1: fused "concat([x, x - avg_pool3x3(reflect_pad(x))])".
#   * reflect pad is built in-kernel (no padded HBM array),
#   * 3x3 box sum is separable (vertical then horizontal pass),
#   * output is written channels-first (2, C, B, H, W) in bf16, which is exactly the
#     layout the transposed conv GEMMs consume (kills the standalone transpose pass).
# ---------------------------------------------------------------------------
def _concat_residual_kernel(x_ref, o_ref):
    x = x_ref[0, 0].astype(jnp.float32)                          # (H, W)
    H, W = x.shape
    # reflect-pad by 1 px in-kernel: row -1 == row 1, row H == row H-2 (same in W)
    xp_h = jnp.concatenate([x[1:2, :], x, x[H - 2:H - 1, :]], axis=0)      # (H+2, W)
    xp = jnp.concatenate([xp_h[:, 1:2], xp_h, xp_h[:, W - 2:W - 1]], axis=1)  # (H+2, W+2)
    # separable 3x3 box sum
    v = xp[0:H, :] + xp[1:H + 1, :] + xp[2:H + 2, :]             # (H, W+2)
    s = v[:, 0:W] + v[:, 1:W + 1] + v[:, 2:W + 2]                # (H, W)
    o_ref[0, 0, 0] = x.astype(o_ref.dtype)                       # copy branch
    o_ref[1, 0, 0] = (x - s * (1.0 / 9.0)).astype(o_ref.dtype)   # residual branch


def concat_avg_residual(x, out_dtype=jnp.bfloat16):
    """x: [B, C, H, W] fp32 -> [2C, B, H, W] bf16 (channels-first); channels 0..C-1 are
    x, channels C..2C-1 are x - avg_pool2d(reflect_pad1(x), 3, stride=1)."""
    B, C, H, W = x.shape
    # TODO(synk): tile over H (with a 1-row halo) for very large frames; one (H, W)
    # plane per grid step is fine at discriminator resolutions.
    out = pl.pallas_call(
        _concat_residual_kernel,
        out_shape=jax.ShapeDtypeStruct((2, C, B, H, W), out_dtype),
        grid=(B, C),
        in_specs=[pl.BlockSpec((1, 1, H, W), lambda b, c: (b, c, 0, 0))],
        out_specs=pl.BlockSpec((2, 1, 1, H, W), lambda b, c: (0, c, b, 0, 0)),
        compiler_params=pltpu.CompilerParams(
            dimension_semantics=("parallel", "parallel")),
    )(x)
    return out.reshape(2 * C, B, H, W)


# ---------------------------------------------------------------------------
# Pallas kernel 2: transposed GEMM (bf16 operands, fp32 MXU accumulation) with
# fused LeakyReLU and bf16 epilogue.  Single pass over K (no accumulator scratch);
# output lane dim is M (multiple of 128) -> lane-dense unmasked stores.
# ---------------------------------------------------------------------------
def _make_gemm_t_kernel(slope, out_dtype):
    def kernel(w_ref, a_ref, o_ref):
        acc = jnp.dot(w_ref[...], a_ref[...], preferred_element_type=jnp.float32)
        if slope is not None:
            acc = jnp.where(acc >= 0, acc, slope * acc)
        o_ref[...] = acc.astype(out_dtype)
    return kernel


def _largest_divisor_tile(dim, quantum, cap):
    """Largest multiple of `quantum` dividing `dim` with value <= cap (None if none)."""
    best = None
    t = quantum
    cap = min(cap, dim)
    while t <= cap:
        if dim % t == 0:
            best = t
        t += quantum
    return best


def matmul_leaky_t(w_t, cols_t, *, slope, out_dtype=jnp.bfloat16):
    """out^T = LeakyReLU(w_t @ cols_t): (N, K) @ (K, M) -> (N, M) in out_dtype."""
    N, K = w_t.shape
    K2, M = cols_t.shape
    assert K == K2
    elt = 2  # bf16 operand bytes

    tm = tn = None
    if M >= 128 and M % 128 == 0:
        # keep the double-buffered cols^T tile around ~3 MiB (safe on v5e/v7x defaults)
        tm_cap = max(128, min(2048, ((3 << 20) // (elt * K)) // 128 * 128))
        tm = _largest_divisor_tile(M, 128, tm_cap)
        if tm is not None and M // tm == 1 and tm % 256 == 0:
            tm //= 2                    # keep >= 2 parallel steps: feed v7x's 2nd core
        # Cout tile: full if it fits the budget, else a multiple-of-16 divisor
        if N * K * elt <= (2 << 20):
            tn = N
        else:
            tn = _largest_divisor_tile(N, 16, max(16, (2 << 20) // (elt * K)))

    if tm is None or tn is None:
        # tiny / awkward shapes: a pallas_call would be pure launch overhead
        out = jnp.dot(w_t, cols_t, preferred_element_type=jnp.float32)
        if slope is not None:
            out = jnp.where(out >= 0, out, slope * out)
        return out.astype(out_dtype)

    grid = (N // tn, M // tm)
    return pl.pallas_call(
        _make_gemm_t_kernel(slope, out_dtype),
        out_shape=jax.ShapeDtypeStruct((N, M), out_dtype),
        grid=grid,
        in_specs=[pl.BlockSpec((tn, K), lambda n, m: (n, 0)),
                  pl.BlockSpec((K, tm), lambda n, m: (0, m))],
        out_specs=pl.BlockSpec((tn, tm), lambda n, m: (n, m)),
        compiler_params=pltpu.CompilerParams(
            dimension_semantics=("parallel", "parallel")),
    )(w_t, cols_t)


# ---------------------------------------------------------------------------
# Conv2d (no bias), channels-first, as a transposed im2col GEMM + fused LeakyReLU.
# ---------------------------------------------------------------------------
def conv2d_cfirst(x, w_t, *, stride, padding, slope, kh=4, kw=4):
    """x: [Cin, B, H, W] bf16, w_t: [Cout, kh*kw*Cin] bf16 (K order = (kh, kw, Cin)).
    Returns [Cout, B, Hout, Wout] bf16."""
    Cin, B, H, W = x.shape
    Cout, K = w_t.shape
    assert K == kh * kw * Cin
    if padding:
        x = jnp.pad(x, ((0, 0), (0, 0), (padding, padding), (padding, padding)))
    Hp, Wp = H + 2 * padding, W + 2 * padding
    Hout = (Hp - kh) // stride + 1
    Wout = (Wp - kw) // stride + 1

    # TODO(synk): cols^T is still materialized by XLA (~4x the activation volume, bf16);
    # a fully fused conv would stream padded activation slabs per GEMM tile and extract
    # the 4x4/stride-2 patches in-kernel.
    parts = []
    for i in range(kh):
        for j in range(kw):
            parts.append(x[:, :, i:i + stride * (Hout - 1) + 1:stride,
                             j:j + stride * (Wout - 1) + 1:stride])
    cols_t = jnp.stack(parts, axis=0).reshape(K, B * Hout * Wout)   # K order (kh,kw,Cin)
    out = matmul_leaky_t(w_t, cols_t, slope=slope)                  # (Cout, M) bf16
    return out.reshape(Cout, B, Hout, Wout)


# ---------------------------------------------------------------------------
# DiscriminatorLinear: params + forward
# ---------------------------------------------------------------------------
def init_params(key, in_chn, ndf):
    """in_chn is the channel count AFTER the concat (i.e. 2 * image channels).
    Conv weights are stored pre-transposed/reshaped to (Cout, kh*kw*Cin) in bf16."""
    chs = [in_chn, ndf, ndf * 2, ndf * 4, ndf * 8, ndf * 16, ndf * 32]
    keys = jax.random.split(key, 7)
    convs = []
    for li in range(6):
        cin, cout = chs[li], chs[li + 1]
        w = 0.02 * jax.random.normal(keys[li], (cout, cin, 4, 4), jnp.float32)
        w_t = jnp.transpose(w, (0, 2, 3, 1)).reshape(cout, 16 * cin).astype(jnp.bfloat16)
        convs.append(w_t)
    return {
        "convs": convs,
        "lin_w": 0.02 * jax.random.normal(keys[6], (1, ndf * 32), jnp.float32),
        "lin_b": jnp.zeros((1,), jnp.float32),
    }


def discriminator_forward(x, params, *, ndf, slope=0.2):
    # x = cat([x, x - avg_pool2d(reflect_pad(x), 3, 1)], dim=1), emitted channels-first
    h = concat_avg_residual(x)                               # [2C, B, H, W] bf16

    # 5x (conv k4 s2 p1, no bias -> LeakyReLU) + (conv k4 s1 p0, no bias -> LeakyReLU)
    strides = (2, 2, 2, 2, 2, 1)
    pads = (1, 1, 1, 1, 1, 0)
    for w_t, st, pd in zip(params["convs"], strides, pads):
        h = conv2d_cfirst(h, w_t, stride=st, padding=pd, slope=slope)

    # feature.view(-1, ndf*32) ; Linear(ndf*32, 1) ; view(-1)   (tiny -> plain XLA, fp32)
    feat = jnp.transpose(h, (1, 0, 2, 3)).reshape(-1, ndf * 32).astype(jnp.float32)
    out = jnp.dot(feat, params["lin_w"].T,
                  preferred_element_type=jnp.float32) + params["lin_b"][None, :]
    return out.reshape(-1)


if __name__ == "__main__":
    # Image channels C=2 => in_chn (after concat) = 4, ndf=8.  Spatial 128 is the
    # smallest size for which the 5 stride-2 downs + final 4x4 valid conv yield a 1x1
    # feature map, as the module intends.
    B, C, H, W = 2, 2, 128, 128
    ndf = 8
    slope = 0.2

    key = jax.random.PRNGKey(0)
    kx, kp = jax.random.split(key)
    x = jax.random.normal(kx, (B, C, H, W), jnp.float32)
    params = init_params(kp, in_chn=2 * C, ndf=ndf)

    fwd = jax.jit(functools.partial(discriminator_forward, ndf=ndf, slope=slope))
    out = fwd(x, params)
    jax.block_until_ready(out)
    assert out.shape == (B,), out.shape
    assert bool(jnp.all(jnp.isfinite(out))), "non-finite output"
    print("KERNEL_OK")
</pallas_src>

<mosaic_0001>
module attributes {stable_mosaic.version = 11 : i64} {
  func.func @_concat_residual_kernel(%arg0: i32, %arg1: i32, %arg2: memref<1x1x128x128xf32, #tpu.memory_space<vmem>>, %arg3: memref<2x1x1x128x128xbf16, #tpu.memory_space<vmem>>) attributes {dimension_semantics = [#tpu.dimension_semantics<parallel>, #tpu.dimension_semantics<parallel>], iteration_bounds = array<i64: 2, 2>, scalar_prefetch = 0 : i64, scratch_operands = 0 : i64, tpu.core_type = #tpu.core_type<tc>, window_params = [{transform_indices = @transform_0, window_bounds = array<i64: 1, 1, 128, 128>}, {transform_indices = @transform_1, window_bounds = array<i64: 2, 1, 1, 128, 128>}]} {
    %c0 = arith.constant 0 : index
    %c0_0 = arith.constant 0 : index
    %c0_1 = arith.constant 0 : index
    %c0_2 = arith.constant 0 : index
    %0 = vector.load %arg2[%c0, %c0_0, %c0_1, %c0_2] : memref<1x1x128x128xf32, #tpu.memory_space<vmem>>, vector<1x1x128x128xf32>
    %1 = vector.shape_cast %0 : vector<1x1x128x128xf32> to vector<128x128xf32>
    %2 = vector.extract_strided_slice %1 {offsets = [1, 0], sizes = [1, 128], strides = [1, 1]} : vector<128x128xf32> to vector<1x128xf32>
    %3 = vector.extract_strided_slice %1 {offsets = [126, 0], sizes = [1, 128], strides = [1, 1]} : vector<128x128xf32> to vector<1x128xf32>
    %4 = tpu.concatenate %2, %1, %3 in 0 : vector<1x128xf32>, vector<128x128xf32>, vector<1x128xf32> -> vector<130x128xf32>
    %5 = vector.extract_strided_slice %4 {offsets = [0, 1], sizes = [130, 1], strides = [1, 1]} : vector<130x128xf32> to vector<130x1xf32>
    %6 = vector.extract_strided_slice %4 {offsets = [0, 126], sizes = [130, 1], strides = [1, 1]} : vector<130x128xf32> to vector<130x1xf32>
    %7 = tpu.concatenate %5, %4, %6 in 1 : vector<130x1xf32>, vector<130x128xf32>, vector<130x1xf32> -> vector<130x130xf32>
    %8 = vector.extract_strided_slice %7 {offsets = [0, 0], sizes = [128, 130], strides = [1, 1]} : vector<130x130xf32> to vector<128x130xf32>
    %9 = vector.extract_strided_slice %7 {offsets = [1, 0], sizes = [128, 130], strides = [1, 1]} : vector<130x130xf32> to vector<128x130xf32>
    %10 = arith.addf %8, %9 : vector<128x130xf32>
    %11 = vector.extract_strided_slice %7 {offsets = [2, 0], sizes = [128, 130], strides = [1, 1]} : vector<130x130xf32> to vector<128x130xf32>
    %12 = arith.addf %10, %11 : vector<128x130xf32>
    %13 = vector.extract_strided_slice %12 {offsets = [0, 0], sizes = [128, 128], strides = [1, 1]} : vector<128x130xf32> to vector<128x128xf32>
    %14 = vector.extract_strided_slice %12 {offsets = [0, 1], sizes = [128, 128], strides = [1, 1]} : vector<128x130xf32> to vector<128x128xf32>
    %15 = arith.addf %13, %14 : vector<128x128xf32>
    %16 = vector.extract_strided_slice %12 {offsets = [0, 2], sizes = [128, 128], strides = [1, 1]} : vector<128x130xf32> to vector<128x128xf32>
    %17 = arith.addf %15, %16 : vector<128x128xf32>
    %18 = arith.truncf %1 : vector<128x128xf32> to vector<128x128xbf16>
    %c0_3 = arith.constant 0 : index
    %c0_4 = arith.constant 0 : index
    %c0_5 = arith.constant 0 : index
    %c0_6 = arith.constant 0 : index
    %c0_7 = arith.constant 0 : index
    %19 = vector.load %arg3[%c0_3, %c0_4, %c0_5, %c0_6, %c0_7] : memref<2x1x1x128x128xbf16, #tpu.memory_space<vmem>>, vector<1x1x1x128x128xbf16>
    %20 = vector.shape_cast %19 : vector<1x1x1x128x128xbf16> to vector<128x128xbf16>
    %21 = vector.shape_cast %18 : vector<128x128xbf16> to vector<1x1x1x128x128xbf16>
    tpu.vector_store %arg3[%c0_3, %c0_4, %c0_5, %c0_6, %c0_7], %21 {strides = array<i32>} : memref<2x1x1x128x128xbf16, #tpu.memory_space<vmem>>, vector<1x1x1x128x128xbf16>,
    %cst = arith.constant 0.111111112 : f32
    %22 = vector.broadcast %cst : f32 to vector<128x128xf32>
    %23 = arith.mulf %17, %22 : vector<128x128xf32>
    %24 = arith.subf %1, %23 : vector<128x128xf32>
    %25 = arith.truncf %24 : vector<128x128xf32> to vector<128x128xbf16>
    %c1 = arith.constant 1 : index
    %c0_8 = arith.constant 0 : index
    %c0_9 = arith.constant 0 : index
    %c0_10 = arith.constant 0 : index
    %c0_11 = arith.constant 0 : index
    %26 = vector.load %arg3[%c1, %c0_8, %c0_9, %c0_10, %c0_11] : memref<2x1x1x128x128xbf16, #tpu.memory_space<vmem>>, vector<1x1x1x128x128xbf16>
    %27 = vector.shape_cast %26 : vector<1x1x1x128x128xbf16> to vector<128x128xbf16>
    %28 = vector.shape_cast %25 : vector<128x128xbf16> to vector<1x1x1x128x128xbf16>
    tpu.vector_store %arg3[%c1, %c0_8, %c0_9, %c0_10, %c0_11], %28 {strides = array<i32>} : memref<2x1x1x128x128xbf16, #tpu.memory_space<vmem>>, vector<1x1x1x128x128xbf16>,
    return
  }
  func.func @transform_0(%arg0: i32, %arg1: i32) -> (i32, i32, i32, i32) {
    %c0_i32 = arith.constant 0 : i32
    %c0_i32_0 = arith.constant 0 : i32
    %c0_i32_1 = arith.constant 0 : i32
    return %arg0, %arg1, %c0_i32, %c0_i32_0 : i32, i32, i32, i32
  }
  func.func @transform_1(%arg0: i32, %arg1: i32) -> (i32, i32, i32, i32, i32) {
    %c0_i32 = arith.constant 0 : i32
    %c0_i32_0 = arith.constant 0 : i32
    %c0_i32_1 = arith.constant 0 : i32
    %c0_i32_2 = arith.constant 0 : i32
    return %c0_i32, %arg1, %arg0, %c0_i32_0, %c0_i32_1 : i32, i32, i32, i32, i32
  }
}

module attributes {stable_mosaic.version = 11 : i64} {
  func.func @kernel(%arg0: i32, %arg1: i32, %arg2: memref<8x64xbf16, #tpu.memory_space<vmem>>, %arg3: memref<64x2048xbf16, #tpu.memory_space<vmem>>, %arg4: memref<8x2048xbf16, #tpu.memory_space<vmem>>) attributes {dimension_semantics = [#tpu.dimension_semantics<parallel>, #tpu.dimension_semantics<parallel>], iteration_bounds = array<i64: 1, 4>, scalar_prefetch = 0 : i64, scratch_operands = 0 : i64, tpu.core_type = #tpu.core_type<tc>, window_params = [{transform_indices = @transform_0, window_bounds = array<i64: 8, 64>}, {transform_indices = @transform_1, window_bounds = array<i64: 64, 2048>}, {transform_indices = @transform_2, window_bounds = array<i64: 8, 2048>}]} {
    %c0 = arith.constant 0 : index
    %c0_0 = arith.constant 0 : index
    %0 = vector.load %arg2[%c0, %c0_0] : memref<8x64xbf16, #tpu.memory_space<vmem>>, vector<8x64xbf16>
    %c0_1 = arith.constant 0 : index
    %c0_2 = arith.constant 0 : index
    %1 = vector.load %arg3[%c0_1, %c0_2] : memref<64x2048xbf16, #tpu.memory_space<vmem>>, vector<64x2048xbf16>
    %cst = arith.constant dense<0.000000e+00> : vector<8x2048xf32>
    %2 = tpu.matmul %0, %1, %cst {dimension_numbers = #tpu.dot_dimension_numbers<[1], [0], [0], [1], [0, 0, 1, 1], [], []>} : vector<8x64xbf16>, vector<64x2048xbf16>, vector<8x2048xf32> -> vector<8x2048xf32>
    %cst_3 = arith.constant 0.000000e+00 : f32
    %3 = vector.broadcast %cst_3 : f32 to vector<8x2048xf32>
    %4 = arith.cmpf oge, %2, %3 : vector<8x2048xf32>
    %cst_4 = arith.constant 2.000000e-01 : f32
    %5 = vector.broadcast %cst_4 : f32 to vector<8x2048xf32>
    %6 = arith.mulf %5, %2 : vector<8x2048xf32>
    %7 = arith.select %4, %2, %6 : vector<8x2048xi1>, vector<8x2048xf32>
    %8 = arith.truncf %7 : vector<8x2048xf32> to vector<8x2048xbf16>
    %c0_5 = arith.constant 0 : index
    %c0_6 = arith.constant 0 : index
    %9 = vector.load %arg4[%c0_5, %c0_6] : memref<8x2048xbf16, #tpu.memory_space<vmem>>, vector<8x2048xbf16>
    tpu.vector_store %arg4[%c0_5, %c0_6], %8 {strides = array<i32>} : memref<8x2048xbf16, #tpu.memory_space<vmem>>, vector<8x2048xbf16>,
    return
  }
  func.func @transform_0(%arg0: i32, %arg1: i32) -> (i32, i32) {
    %c0_i32 = arith.constant 0 : i32
    %c0_i32_0 = arith.constant 0 : i32
    return %arg0, %c0_i32 : i32, i32
  }
  func.func @transform_1(%arg0: i32, %arg1: i32) -> (i32, i32) {
    %c0_i32 = arith.constant 0 : i32
    %c0_i32_0 = arith.constant 0 : i32
    return %c0_i32, %arg1 : i32, i32
  }
  func.func @transform_2(%arg0: i32, %arg1: i32) -> (i32, i32) {
    %c0_i32 = arith.constant 0 : i32
    return %arg0, %arg1 : i32, i32
  }
}

module attributes {stable_mosaic.version = 11 : i64} {
  func.func @kernel(%arg0: i32, %arg1: i32, %arg2: memref<16x128xbf16, #tpu.memory_space<vmem>>, %arg3: memref<128x1024xbf16, #tpu.memory_space<vmem>>, %arg4: memref<16x1024xbf16, #tpu.memory_space<vmem>>) attributes {dimension_semantics = [#tpu.dimension_semantics<parallel>, #tpu.dimension_semantics<parallel>], iteration_bounds = array<i64: 1, 2>, scalar_prefetch = 0 : i64, scratch_operands = 0 : i64, tpu.core_type = #tpu.core_type<tc>, window_params = [{transform_indices = @transform_0, window_bounds = array<i64: 16, 128>}, {transform_indices = @transform_1, window_bounds = array<i64: 128, 1024>}, {transform_indices = @transform_2, window_bounds = array<i64: 16, 1024>}]} {
    %c0 = arith.constant 0 : index
    %c0_0 = arith.constant 0 : index
    %0 = vector.load %arg2[%c0, %c0_0] : memref<16x128xbf16, #tpu.memory_space<vmem>>, vector<16x128xbf16>
    %c0_1 = arith.constant 0 : index
    %c0_2 = arith.constant 0 : index
    %1 = vector.load %arg3[%c0_1, %c0_2] : memref<128x1024xbf16, #tpu.memory_space<vmem>>, vector<128x1024xbf16>
    %cst = arith.constant dense<0.000000e+00> : vector<16x1024xf32>
    %2 = tpu.matmul %0, %1, %cst {dimension_numbers = #tpu.dot_dimension_numbers<[1], [0], [0], [1], [0, 0, 1, 1], [], []>} : vector<16x128xbf16>, vector<128x1024xbf16>, vector<16x1024xf32> -> vector<16x1024xf32>
    %cst_3 = arith.constant 0.000000e+00 : f32
    %3 = vector.broadcast %cst_3 : f32 to vector<16x1024xf32>
    %4 = arith.cmpf oge, %2, %3 : vector<16x1024xf32>
    %cst_4 = arith.constant 2.000000e-01 : f32
    %5 = vector.broadcast %cst_4 : f32 to vector<16x1024xf32>
    %6 = arith.mulf %5, %2 : vector<16x1024xf32>
    %7 = arith.select %4, %2, %6 : vector<16x1024xi1>, vector<16x1024xf32>
    %8 = arith.truncf %7 : vector<16x1024xf32> to vector<16x1024xbf16>
    %c0_5 = arith.constant 0 : index
    %c0_6 = arith.constant 0 : index
    %9 = vector.load %arg4[%c0_5, %c0_6] : memref<16x1024xbf16, #tpu.memory_space<vmem>>, vector<16x1024xbf16>
    tpu.vector_store %arg4[%c0_5, %c0_6], %8 {strides = array<i32>} : memref<16x1024xbf16, #tpu.memory_space<vmem>>, vector<16x1024xbf16>,
    return
  }
  func.func @transform_0(%arg0: i32, %arg1: i32) -> (i32, i32) {
    %c0_i32 = arith.constant 0 : i32
    %c0_i32_0 = arith.constant 0 : i32
    return %arg0, %c0_i32 : i32, i32
  }
  func.func @transform_1(%arg0: i32, %arg1: i32) -> (i32, i32) {
    %c0_i32 = arith.constant 0 : i32
    %c0_i32_0 = arith.constant 0 : i32
    return %c0_i32, %arg1 : i32, i32
  }
  func.func @transform_2(%arg0: i32, %arg1: i32) -> (i32, i32) {
    %c0_i32 = arith.constant 0 : i32
    return %arg0, %arg1 : i32, i32
  }
}

module attributes {stable_mosaic.version = 11 : i64} {
  func.func @kernel(%arg0: i32, %arg1: i32, %arg2: memref<32x256xbf16, #tpu.memory_space<vmem>>, %arg3: memref<256x256xbf16, #tpu.memory_space<vmem>>, %arg4: memref<32x256xbf16, #tpu.memory_space<vmem>>) attributes {dimension_semantics = [#tpu.dimension_semantics<parallel>, #tpu.dimension_semantics<parallel>], iteration_bounds = array<i64: 1, 2>, scalar_prefetch = 0 : i64, scratch_operands = 0 : i64, tpu.core_type = #tpu.core_type<tc>, window_params = [{transform_indices = @transform_0, window_bounds = array<i64: 32, 256>}, {transform_indices = @transform_1, window_bounds = array<i64: 256, 256>}, {transform_indices = @transform_2, window_bounds = array<i64: 32, 256>}]} {
    %c0 = arith.constant 0 : index
    %c0_0 = arith.constant 0 : index
    %0 = vector.load %arg2[%c0, %c0_0] : memref<32x256xbf16, #tpu.memory_space<vmem>>, vector<32x256xbf16>
    %c0_1 = arith.constant 0 : index
    %c0_2 = arith.constant 0 : index
    %1 = vector.load %arg3[%c0_1, %c0_2] : memref<256x256xbf16, #tpu.memory_space<vmem>>, vector<256x256xbf16>
    %cst = arith.constant dense<0.000000e+00> : vector<32x256xf32>
    %2 = tpu.matmul %0, %1, %cst {dimension_numbers = #tpu.dot_dimension_numbers<[1], [0], [0], [1], [0, 0, 1, 1], [], []>} : vector<32x256xbf16>, vector<256x256xbf16>, vector<32x256xf32> -> vector<32x256xf32>
    %cst_3 = arith.constant 0.000000e+00 : f32
    %3 = vector.broadcast %cst_3 : f32 to vector<32x256xf32>
    %4 = arith.cmpf oge, %2, %3 : vector<32x256xf32>
    %cst_4 = arith.constant 2.000000e-01 : f32
    %5 = vector.broadcast %cst_4 : f32 to vector<32x256xf32>
    %6 = arith.mulf %5, %2 : vector<32x256xf32>
    %7 = arith.select %4, %2, %6 : vector<32x256xi1>, vector<32x256xf32>
    %8 = arith.truncf %7 : vector<32x256xf32> to vector<32x256xbf16>
    %c0_5 = arith.constant 0 : index
    %c0_6 = arith.constant 0 : index
    %9 = vector.load %arg4[%c0_5, %c0_6] : memref<32x256xbf16, #tpu.memory_space<vmem>>, vector<32x256xbf16>
    tpu.vector_store %arg4[%c0_5, %c0_6], %8 {strides = array<i32>} : memref<32x256xbf16, #tpu.memory_space<vmem>>, vector<32x256xbf16>,
    return
  }
  func.func @transform_0(%arg0: i32, %arg1: i32) -> (i32, i32) {
    %c0_i32 = arith.constant 0 : i32
    %c0_i32_0 = arith.constant 0 : i32
    return %arg0, %c0_i32 : i32, i32
  }
  func.func @transform_1(%arg0: i32, %arg1: i32) -> (i32, i32) {
    %c0_i32 = arith.constant 0 : i32
    %c0_i32_0 = arith.constant 0 : i32
    return %c0_i32, %arg1 : i32, i32
  }
  func.func @transform_2(%arg0: i32, %arg1: i32) -> (i32, i32) {
    %c0_i32 = arith.constant 0 : i32
    return %arg0, %arg1 : i32, i32
  }
}

module attributes {stable_mosaic.version = 11 : i64} {
  func.func @kernel(%arg0: i32, %arg1: i32, %arg2: memref<64x512xbf16, #tpu.memory_space<vmem>>, %arg3: memref<512x128xbf16, #tpu.memory_space<vmem>>, %arg4: memref<64x128xbf16, #tpu.memory_space<vmem>>) attributes {dimension_semantics = [#tpu.dimension_semantics<parallel>, #tpu.dimension_semantics<parallel>], iteration_bounds = array<i64: 1, 1>, scalar_prefetch = 0 : i64, scratch_operands = 0 : i64, tpu.core_type = #tpu.core_type<tc>, window_params = [{transform_indices = @transform_0, window_bounds = array<i64: 64, 512>}, {transform_indices = @transform_1, window_bounds = array<i64: 512, 128>}, {transform_indices = @transform_2, window_bounds = array<i64: 64, 128>}]} {
    %c0 = arith.constant 0 : index
    %c0_0 = arith.constant 0 : index
    %0 = vector.load %arg2[%c0, %c0_0] : memref<64x512xbf16, #tpu.memory_space<vmem>>, vector<64x512xbf16>
    %c0_1 = arith.constant 0 : index
    %c0_2 = arith.constant 0 : index
    %1 = vector.load %arg3[%c0_1, %c0_2] : memref<512x128xbf16, #tpu.memory_space<vmem>>, vector<512x128xbf16>
    %cst = arith.constant dense<0.000000e+00> : vector<64x128xf32>
    %2 = tpu.matmul %0, %1, %cst {dimension_numbers = #tpu.dot_dimension_numbers<[1], [0], [0], [1], [0, 0, 1, 1], [], []>} : vector<64x512xbf16>, vector<512x128xbf16>, vector<64x128xf32> -> vector<64x128xf32>
    %cst_3 = arith.constant 0.000000e+00 : f32
    %3 = vector.broadcast %cst_3 : f32 to vector<64x128xf32>
    %4 = arith.cmpf oge, %2, %3 : vector<64x128xf32>
    %cst_4 = arith.constant 2.000000e-01 : f32
    %5 = vector.broadcast %cst_4 : f32 to vector<64x128xf32>
    %6 = arith.mulf %5, %2 : vector<64x128xf32>
    %7 = arith.select %4, %2, %6 : vector<64x128xi1>, vector<64x128xf32>
    %8 = arith.truncf %7 : vector<64x128xf32> to vector<64x128xbf16>
    %c0_5 = arith.constant 0 : index
    %c0_6 = arith.constant 0 : index
    %9 = vector.load %arg4[%c0_5, %c0_6] : memref<64x128xbf16, #tpu.memory_space<vmem>>, vector<64x128xbf16>
    tpu.vector_store %arg4[%c0_5, %c0_6], %8 {strides = array<i32>} : memref<64x128xbf16, #tpu.memory_space<vmem>>, vector<64x128xbf16>,
    return
  }
  func.func @transform_0(%arg0: i32, %arg1: i32) -> (i32, i32) {
    %c0_i32 = arith.constant 0 : i32
    %c0_i32_0 = arith.constant 0 : i32
    return %arg0, %c0_i32 : i32, i32
  }
  func.func @transform_1(%arg0: i32, %arg1: i32) -> (i32, i32) {
    %c0_i32 = arith.constant 0 : i32
    %c0_i32_0 = arith.constant 0 : i32
    return %c0_i32, %arg1 : i32, i32
  }
  func.func @transform_2(%arg0: i32, %arg1: i32) -> (i32, i32) {
    %c0_i32 = arith.constant 0 : i32
    return %arg0, %arg1 : i32, i32
  }
}

</mosaic_0001>

<llo_original>
// kernel: discriminator_forward.5
$region0: #{discriminator_forward.5}
  #allocation0 [shape = 'u32[]', space=smem, size = 0x4, offset = 0x4, fixed_abs, tag = 'smem constant byte address 0x4 - core index']
  #allocation1 [shape = 'u32[144,128]{1,0:T(1,128)}', space=vmem, size = 0x12000, scoped, tag = 'internal scratch']
  %s0 = inlined_call_operand.hbm [shape: f32[2,2,128,128], index: 0, kind: input, shape index: {}]
  %s1 = inlined_call_operand.vmem [shape: bf16[2,2,2,128,128], index: 1, kind: output, shape index: {}]
  %s2 = sld [smem:[#allocation0]]
  $region78: #{discriminator_forward.5} parent=0
    _
  %s4 = ssub.s32 1, %s2
  %s5 = scalar_select 0, %s4, %s2
  $region1: #{discriminator_forward.5} parent=0
    #allocation2 [shape = 'u8[131072]{0}', space=vmem, size = 0x20000, scoped, tag = 'input window, operand 0']
    #allocation3 [shape = 's32[2]{0}', space=sflag, size = 0x8, scoped, tag = 'scoped memory for discriminator_forward.5']
    #allocation4 [shape = 'u8[131072]{0}', space=vmem, size = 0x20000, scoped, tag = 'output window, operand 0']
    %6 = vsyncpa [#allocation3], 0
    %s7 = scalar_lea.sflag [#allocation3], 1
    %8 = vsyncpa %s7, 0
    loop: start=0, step=1, limit=6
    $region2: #{discriminator_forward.5} parent=1 // loop_pre_header
      _
    $region3: #{discriminator_forward.5} parent=1 // loop_header
      %s10 = sphi 0, %s14
      %p11 = scmp.ge.s32.totalorder %s10, 6
      %s17 = sphi 0, %s29
      %s18 = sphi 0, %s25
      %s19 = sphi 0, %s17
      %s20 = sphi 0, %s18
      %s21 = sphi 0, %s19
      %s22 = sphi 0, %s20
      %s34 = sphi 0, %s36
      %s37 = sphi 0, %s34
      %s38 = sphi 0, %s37
      %s54 = sphi 0, %s38
      %s62 = sphi 0, %s64
      %s65 = sphi 0, %s62
      %s66 = sphi 0, %s65
      %s82 = sphi 0, %s66
    $region4: #{discriminator_forward.5} parent=1 // loop_header_branch
      %13 = sbr.rel (%p11) target = $region8
    $region5: #{discriminator_forward.5} parent=1 // loop_body
      %s15 = ssub.s32 %s10, 1
      %s16 = ssub.s32 %s10, 2
      %s23 = sadd.s32 1, %s18
      %p24 = scmp.ge.s32.totalorder %s23, 2
      %s25 = scalar_select %p24, 0, %s23
      %s26 = sadd.s32 1, %s17
      %s27 = scalar_select %p24, %s26, %s17
      %p28 = scmp.ge.s32.totalorder %s27, 2
      %s29 = scalar_select %p28, 0, %s27
      %s30 = ssub.s32 %s17, %s29
      %s31 = ssub.s32 %s18, %s25
      %s32 = sor.u32 %s30, %s31
      %p33 = scmp.eq.s32.totalorder %s32, 0
      %s35 = sadd.s32 %s34, 1
      %s36 = scalar_select %p33, %s34, %s35
      %p39 = pneg %p33
      %p40 = scmp.eq.s32.totalorder %s10, 3
      %p41 = por %p39, %p40
      %p42 = scmp.ne.s32.totalorder %s34, %s37
      %p43 = scmp.eq.s32.totalorder %s10, 0
      %p44 = por %p42, %p43
      %p45 = scmp.ne.s32.totalorder %s34, %s37
      %p46 = scmp.eq.s32.totalorder %s15, 3
      %p47 = por %p45, %p46
      %p48 = scmp.ne.s32.totalorder %s37, %s38
      %p49 = scmp.eq.s32.totalorder %s15, 0
      %p50 = por %p48, %p49
      %p51 = scmp.ne.s32.totalorder %s37, %s38
      %p52 = scmp.eq.s32.totalorder %s16, 3
      %p53 = por %p51, %p52
      %p55 = scmp.ne.s32.totalorder %s38, %s54
      %p56 = scmp.eq.s32.totalorder %s16, 0
      %p57 = por %p55, %p56
      %s58 = ssub.s32 %s18, %s25
      %s59 = ssub.s32 %s17, %s29
      %s60 = sor.u32 %s58, %s59
      %p61 = scmp.eq.s32.totalorder %s60, 0
      %s63 = sadd.s32 %s62, 1
      %s64 = scalar_select %p61, %s62, %s63
      %p67 = pneg %p61
      %p68 = scmp.eq.s32.totalorder %s10, 3
      %p69 = por %p67, %p68
      %p70 = scmp.ne.s32.totalorder %s62, %s65
      %p71 = scmp.eq.s32.totalorder %s10, 0
      %p72 = por %p70, %p71
      %p73 = scmp.ne.s32.totalorder %s62, %s65
      %p74 = scmp.eq.s32.totalorder %s15, 3
      %p75 = por %p73, %p74
      %p76 = scmp.ne.s32.totalorder %s65, %s66
      %p77 = scmp.eq.s32.totalorder %s15, 0
      %p78 = por %p76, %p77
      %p79 = scmp.ne.s32.totalorder %s65, %s66
      %p80 = scmp.eq.s32.totalorder %s16, 3
      %p81 = por %p79, %p80
      %p83 = scmp.ne.s32.totalorder %s66, %s82
      %p84 = scmp.eq.s32.totalorder %s16, 0
      %p85 = por %p83, %p84
      %p86 = scmp.le.s32.totalorder 1, %s10
      %p87 = scmp.lt.s32.totalorder %s10, 5
      %p88 = pnand %p86, %p87
      %p89 = pneg %p88
      // Predicated region
      $region9: #{discriminator_forward.5} parent=5 // pred_check
        _
      $region10: #{discriminator_forward.5} parent=5 // pred_check_branch
        %91 = sbr.rel (%p88) target = $region12
      $region11: #{discriminator_forward.5} parent=5 // pred_region
        %s92 = ssub.s32 %s10, 1
      $region12: #{discriminator_forward.5} parent=5 // pred_fallthru
        _
      %p93 = scmp.lt.s32.totalorder %s10, 4
      // Predicated region
      $region13: #{discriminator_forward.5} parent=5 // pred_check
        %p94 = pneg %p93
      $region14: #{discriminator_forward.5} parent=5 // pred_check_branch
        %96 = sbr.rel (%p94) target = $region16
      $region15: #{discriminator_forward.5} parent=5 // pred_region
        // Predicated region
        $region17: #{discriminator_forward.5} parent=15 // pred_check
          %p97 = pneg %p44
        $region18: #{discriminator_forward.5} parent=15 // pred_check_branch
          %99 = sbr.rel (%p97) target = $region20
        $region19: #{discriminator_forward.5} parent=15 // pred_region
          %s100 = sand.u32 %s34, 1
          %s101 = scalar_lea.sflag [#allocation3], %s100
          %s102 = sand.u32 %s34, 1
          %s103 = smul.addr %s102, 128
          %s104 = scalar_lea.vmem [#allocation2], %s103
          %s106 = ssub.s32 2048, 2048
          %107 = vsyncadd %s101, %s106
          %s108 = smul.addr %s18, 16
          %s109 = smul.addr %s17, 32
          %s110 = sadd.s32 %s108, %s109
          %s111 = smul.addr %s110, 128
          %s112 = scalar_lea.hbm %s0, %s111
          %s113 = sshll.u32 %s104, 4
          %s114 = int_to_ptr.vmem [resolvable:$true] %s113
          %119 = dma.hbm_to_vmem [thread:$0]  %s112, 2048, %s114, %s101, 128, 128, 8
        $region20: #{discriminator_forward.5} parent=15 // pred_fallthru
          _
      $region16: #{discriminator_forward.5} parent=5 // pred_fallthru
        _
      %p120 = scmp.le.s32.totalorder 1, %s10
      %p121 = scmp.lt.s32.totalorder %s10, 5
      %p122 = pnand %p120, %p121
      %p123 = pneg %p122
      // Predicated region
      $region21: #{discriminator_forward.5} parent=5 // pred_check
        _
      $region22: #{discriminator_forward.5} parent=5 // pred_check_branch
        %125 = sbr.rel (%p122) target = $region24
      $region23: #{discriminator_forward.5} parent=5 // pred_region
        %s126 = ssub.s32 %s10, 1
        %s127 = sand.u32 %s37, 1
        %s128 = scalar_lea.sflag [#allocation3], %s127
        %s129 = sand.u32 %s37, 1
        %s130 = smul.addr %s129, 128
        %s131 = scalar_lea.vmem [#allocation2], %s130
        // Predicated region
        $region25: #{discriminator_forward.5} parent=23 // pred_check
          %p132 = pneg %p50
        $region26: #{discriminator_forward.5} parent=23 // pred_check_branch
          %134 = sbr.rel (%p132) target = $region28
        $region27: #{discriminator_forward.5} parent=23 // pred_region
          %135 = dma.done %s128, 2048
        $region28: #{discriminator_forward.5} parent=23 // pred_fallthru
          _
        %s136 = sand.u32 %s37, 1
        %s137 = scalar_lea.sflag [#allocation3], %s136
        %s138 = sand.u32 %s37, 1
        %s139 = smul.addr %s138, 128
        %s140 = scalar_lea.vmem [#allocation2], %s139
        %p141 = pneg %p50
        %p142 = pneg %p47
        %p143 = pneg %p78
        %p144 = pneg %p75
        %s145 = sand.u32 %s65, 1
        %s146 = sand.u32 %s65, 1
        %s147 = smul.addr %s146, 128
        %s148 = scalar_lea.vmem [#allocation4], %s147
        %v149 = vld [vmem:[%s131] sm:$0xff]
        %v150 = vld [vmem:[%s131 + $0x8] sm:$0xff]
        %v151 = vld [vmem:[%s131 + $0x10] sm:$0xff]
        %v152 = vld [vmem:[%s131 + $0x18] sm:$0xff]
        %v153 = vld [vmem:[%s131 + $0x20] sm:$0xff]
        %v154 = vld [vmem:[%s131 + $0x28] sm:$0xff]
        %v155 = vld [vmem:[%s131 + $0x30] sm:$0xff]
        %v156 = vld [vmem:[%s131 + $0x38] sm:$0xff]
        %v157 = vld [vmem:[%s131 + $0x40] sm:$0xff]
        %v158 = vld [vmem:[%s131 + $0x48] sm:$0xff]
        %v159 = vld [vmem:[%s131 + $0x50] sm:$0xff]
        %v160 = vld [vmem:[%s131 + $0x58] sm:$0xff]
        %v161 = vld [vmem:[%s131 + $0x60] sm:$0xff]
        %v162 = vld [vmem:[%s131 + $0x68] sm:$0xff]
        %v163 = vld [vmem:[%s131 + $0x70] sm:$0xff]
        %v164 = vld [vmem:[%s131 + $0x78] sm:$0xff]
        %v166 = vrot.slane %v149, 1
        %vm183 = vcmask 1040384
        %v184 = vrot.slane %v149, 7
        %v185 = vrot.slane %v150, 7
        %v186 = vsel %vm183, %v184, %v185
        %v187 = vrot.slane %v151, 7
        %v188 = vsel %vm183, %v185, %v187
        %v189 = vrot.slane %v152, 7
        %v190 = vsel %vm183, %v187, %v189
        %v191 = vrot.slane %v153, 7
        %v192 = vsel %vm183, %v189, %v191
        %v193 = vrot.slane %v154, 7
        %v194 = vsel %vm183, %v191, %v193
        %v195 = vrot.slane %v155, 7
        %v196 = vsel %vm183, %v193, %v195
        %v197 = vrot.slane %v156, 7
        %v198 = vsel %vm183, %v195, %v197
        %v199 = vrot.slane %v157, 7
        %v200 = vsel %vm183, %v197, %v199
        %v201 = vrot.slane %v158, 7
        %v202 = vsel %vm183, %v199, %v201
        %v203 = vrot.slane %v159, 7
        %v204 = vsel %vm183, %v201, %v203
        %v205 = vrot.slane %v160, 7
        %v206 = vsel %vm183, %v203, %v205
        %v207 = vrot.slane %v161, 7
        %v208 = vsel %vm183, %v205, %v207
        %v209 = vrot.slane %v162, 7
        %v210 = vsel %vm183, %v207, %v209
        %v211 = vrot.slane %v163, 7
        %v212 = vsel %vm183, %v209, %v211
        %v213 = vrot.slane %v164, 7
        %v214 = vsel %vm183, %v211, %v213
        %v217 = vrot.slane %v164, 5
        %v219 = vsel %vm183, %v166, %v184
        %v220 = vsel %vm183, %v213, %v217
        %223 = vrot.lane.b32.xlu0 %v219, 127
        %v224 = vpop.permute.xlu0 %223
        %225 = vrot.lane.b32.xlu0 %v186, 127
        %v226 = vpop.permute.xlu0 %225
        %227 = vrot.lane.b32.xlu0 %v188, 127
        %v228 = vpop.permute.xlu0 %227
        %229 = vrot.lane.b32.xlu0 %v190, 127
        %v230 = vpop.permute.xlu0 %229
        %231 = vrot.lane.b32.xlu0 %v192, 127
        %v232 = vpop.permute.xlu0 %231
        %233 = vrot.lane.b32.xlu0 %v194, 127
        %v234 = vpop.permute.xlu0 %233
        %235 = vrot.lane.b32.xlu0 %v196, 127
        %v236 = vpop.permute.xlu0 %235
        %237 = vrot.lane.b32.xlu0 %v198, 127
        %v238 = vpop.permute.xlu0 %237
        %239 = vrot.lane.b32.xlu0 %v200, 127
        %v240 = vpop.permute.xlu0 %239
        %241 = vrot.lane.b32.xlu0 %v202, 127
        %v242 = vpop.permute.xlu0 %241
        %243 = vrot.lane.b32.xlu0 %v204, 127
        %v244 = vpop.permute.xlu0 %243
        %245 = vrot.lane.b32.xlu0 %v206, 127
        %v246 = vpop.permute.xlu0 %245
        %247 = vrot.lane.b32.xlu0 %v208, 127
        %v248 = vpop.permute.xlu0 %247
        %249 = vrot.lane.b32.xlu0 %v210, 127
        %v250 = vpop.permute.xlu0 %249
        %251 = vrot.lane.b32.xlu0 %v212, 127
        %v252 = vpop.permute.xlu0 %251
        %253 = vrot.lane.b32.xlu0 %v214, 127
        %v254 = vpop.permute.xlu0 %253
        %255 = vrot.lane.b32.xlu0 %v220, 127
        %v256 = vpop.permute.xlu0 %255
        %274 = vrot.lane.b32.xlu0 %v219, 1
        %v275 = vpop.permute.xlu0 %274
        %276 = vrot.lane.b32.xlu0 %v186, 1
        %v277 = vpop.permute.xlu0 %276
        %278 = vrot.lane.b32.xlu0 %v188, 1
        %v279 = vpop.permute.xlu0 %278
        %280 = vrot.lane.b32.xlu0 %v190, 1
        %v281 = vpop.permute.xlu0 %280
        %282 = vrot.lane.b32.xlu0 %v192, 1
        %v283 = vpop.permute.xlu0 %282
        %284 = vrot.lane.b32.xlu0 %v194, 1
        %v285 = vpop.permute.xlu0 %284
        %286 = vrot.lane.b32.xlu0 %v196, 1
        %v287 = vpop.permute.xlu0 %286
        %288 = vrot.lane.b32.xlu0 %v198, 1
        %v289 = vpop.permute.xlu0 %288
        %290 = vrot.lane.b32.xlu0 %v200, 1
        %v291 = vpop.permute.xlu0 %290
        %292 = vrot.lane.b32.xlu0 %v202, 1
        %v293 = vpop.permute.xlu0 %292
        %294 = vrot.lane.b32.xlu0 %v204, 1
        %v295 = vpop.permute.xlu0 %294
        %296 = vrot.lane.b32.xlu0 %v206, 1
        %v297 = vpop.permute.xlu0 %296
        %298 = vrot.lane.b32.xlu0 %v208, 1
        %v299 = vpop.permute.xlu0 %298
        %300 = vrot.lane.b32.xlu0 %v210, 1
        %v301 = vpop.permute.xlu0 %300
        %302 = vrot.lane.b32.xlu0 %v212, 1
        %v303 = vpop.permute.xlu0 %302
        %304 = vrot.lane.b32.xlu0 %v214, 1
        %v305 = vpop.permute.xlu0 %304
        %306 = vrot.lane.b32.xlu0 %v220, 1
        %v307 = vpop.permute.xlu0 %306
        %325 = vrot.lane.b32.xlu0 %v219, 3
        %v326 = vpop.permute.xlu0 %325
        %327 = vrot.lane.b32.xlu0 %v186, 3
        %v328 = vpop.permute.xlu0 %327
        %329 = vrot.lane.b32.xlu0 %v188, 3
        %v330 = vpop.permute.xlu0 %329
        %331 = vrot.lane.b32.xlu0 %v190, 3
        %v332 = vpop.permute.xlu0 %331
        %333 = vrot.lane.b32.xlu0 %v192, 3
        %v334 = vpop.permute.xlu0 %333
        %335 = vrot.lane.b32.xlu0 %v194, 3
        %v336 = vpop.permute.xlu0 %335
        %337 = vrot.lane.b32.xlu0 %v196, 3
        %v338 = vpop.permute.xlu0 %337
        %339 = vrot.lane.b32.xlu0 %v198, 3
        %v340 = vpop.permute.xlu0 %339
        %341 = vrot.lane.b32.xlu0 %v200, 3
        %v342 = vpop.permute.xlu0 %341
        %343 = vrot.lane.b32.xlu0 %v202, 3
        %v344 = vpop.permute.xlu0 %343
        %345 = vrot.lane.b32.xlu0 %v204, 3
        %v346 = vpop.permute.xlu0 %345
        %347 = vrot.lane.b32.xlu0 %v206, 3
        %v348 = vpop.permute.xlu0 %347
        %349 = vrot.lane.b32.xlu0 %v208, 3
        %v350 = vpop.permute.xlu0 %349
        %351 = vrot.lane.b32.xlu0 %v210, 3
        %v352 = vpop.permute.xlu0 %351
        %353 = vrot.lane.b32.xlu0 %v212, 3
        %v354 = vpop.permute.xlu0 %353
        %355 = vrot.lane.b32.xlu0 %v214, 3
        %v356 = vpop.permute.xlu0 %355
        %357 = vrot.lane.b32.xlu0 %v220, 3
        %v358 = vpop.permute.xlu0 %357
        %vm376 = vcmask 7168
        %v377 = vsel %vm376, %v224, %v275
        %v378 = vsel %vm376, %v226, %v277
        %v379 = vsel %vm376, %v228, %v279
        %v380 = vsel %vm376, %v230, %v281
        %v381 = vsel %vm376, %v232, %v283
        %v382 = vsel %vm376, %v234, %v285
        %v383 = vsel %vm376, %v236, %v287
        %v384 = vsel %vm376, %v238, %v289
        %v385 = vsel %vm376, %v240, %v291
        %v386 = vsel %vm376, %v242, %v293
        %v387 = vsel %vm376, %v244, %v295
        %v388 = vsel %vm376, %v246, %v297
        %v389 = vsel %vm376, %v248, %v299
        %v390 = vsel %vm376, %v250, %v301
        %v391 = vsel %vm376, %v252, %v303
        %v392 = vsel %vm376, %v254, %v305
        %v393 = vsel %vm376, %v256, %v307
        %v394 = vsel %vm376, %v275, %v326
        %v395 = vsel %vm376, %v277, %v328
        %v396 = vsel %vm376, %v279, %v330
        %v397 = vsel %vm376, %v281, %v332
        %v398 = vsel %vm376, %v283, %v334
        %v399 = vsel %vm376, %v285, %v336
        %v400 = vsel %vm376, %v287, %v338
        %v401 = vsel %vm376, %v289, %v340
        %v402 = vsel %vm376, %v291, %v342
        %v403 = vsel %vm376, %v293, %v344
        %v404 = vsel %vm376, %v295, %v346
        %v405 = vsel %vm376, %v297, %v348
        %v406 = vsel %vm376, %v299, %v350
        %v407 = vsel %vm376, %v301, %v352
        %v408 = vsel %vm376, %v303, %v354
        %v409 = vsel %vm376, %v305, %v356
        %v410 = vsel %vm376, %v307, %v358
        %vm445 = vcmask 1046528
        %v446 = vrot.slane %v377, 1
        %v447 = vrot.slane %v378, 1
        %v448 = vsel %vm445, %v446, %v447
        %v449 = vrot.slane %v394, 1
        %v450 = vrot.slane %v395, 1
        %v451 = vsel %vm445, %v449, %v450
        %v452 = vrot.slane %v379, 1
        %v453 = vsel %vm445, %v447, %v452
        %v454 = vrot.slane %v396, 1
        %v455 = vsel %vm445, %v450, %v454
        %v456 = vrot.slane %v380, 1
        %v457 = vsel %vm445, %v452, %v456
        %v458 = vrot.slane %v397, 1
        %v459 = vsel %vm445, %v454, %v458
        %v460 = vrot.slane %v381, 1
        %v461 = vsel %vm445, %v456, %v460
        %v462 = vrot.slane %v398, 1
        %v463 = vsel %vm445, %v458, %v462
        %v464 = vrot.slane %v382, 1
        %v465 = vsel %vm445, %v460, %v464
        %v466 = vrot.slane %v399, 1
        %v467 = vsel %vm445, %v462, %v466
        %v468 = vrot.slane %v383, 1
        %v469 = vsel %vm445, %v464, %v468
        %v470 = vrot.slane %v400, 1
        %v471 = vsel %vm445, %v466, %v470
        %v472 = vrot.slane %v384, 1
        %v473 = vsel %vm445, %v468, %v472
        %v474 = vrot.slane %v401, 1
        %v475 = vsel %vm445, %v470, %v474
        %v476 = vrot.slane %v385, 1
        %v477 = vsel %vm445, %v472, %v476
        %v478 = vrot.slane %v402, 1
        %v479 = vsel %vm445, %v474, %v478
        %v480 = vrot.slane %v386, 1
        %v481 = vsel %vm445, %v476, %v480
        %v482 = vrot.slane %v403, 1
        %v483 = vsel %vm445, %v478, %v482
        %v484 = vrot.slane %v387, 1
        %v485 = vsel %vm445, %v480, %v484
        %v486 = vrot.slane %v404, 1
        %v487 = vsel %vm445, %v482, %v486
        %v488 = vrot.slane %v388, 1
        %v489 = vsel %vm445, %v484, %v488
        %v490 = vrot.slane %v405, 1
        %v491 = vsel %vm445, %v486, %v490
        %v492 = vrot.slane %v389, 1
        %v493 = vsel %vm445, %v488, %v492
        %v494 = vrot.slane %v406, 1
        %v495 = vsel %vm445, %v490, %v494
        %v496 = vrot.slane %v390, 1
        %v497 = vsel %vm445, %v492, %v496
        %v498 = vrot.slane %v407, 1
        %v499 = vsel %vm445, %v494, %v498
        %v500 = vrot.slane %v391, 1
        %v501 = vsel %vm445, %v496, %v500
        %v502 = vrot.slane %v408, 1
        %v503 = vsel %vm445, %v498, %v502
        %v504 = vrot.slane %v392, 1
        %v505 = vsel %vm445, %v500, %v504
        %v506 = vrot.slane %v409, 1
        %v507 = vsel %vm445, %v502, %v506
        %v508 = vrot.slane %v393, 1
        %v509 = vsel %vm445, %v504, %v508
        %v510 = vrot.slane %v410, 1
        %v511 = vsel %vm445, %v506, %v510
        %v544 = vadd.f32 %v377, %v448
        %v545 = vadd.f32 %v394, %v451
        %v546 = vadd.f32 %v378, %v453
        %v547 = vadd.f32 %v395, %v455
        %v548 = vadd.f32 %v379, %v457
        %v549 = vadd.f32 %v396, %v459
        %v550 = vadd.f32 %v380, %v461
        %v551 = vadd.f32 %v397, %v463
        %v552 = vadd.f32 %v381, %v465
        %v553 = vadd.f32 %v398, %v467
        %v554 = vadd.f32 %v382, %v469
        %v555 = vadd.f32 %v399, %v471
        %v556 = vadd.f32 %v383, %v473
        %v557 = vadd.f32 %v400, %v475
        %v558 = vadd.f32 %v384, %v477
        %v559 = vadd.f32 %v401, %v479
        %v560 = vadd.f32 %v385, %v481
        %v561 = vadd.f32 %v402, %v483
        %v562 = vadd.f32 %v386, %v485
        %v563 = vadd.f32 %v403, %v487
        %v564 = vadd.f32 %v387, %v489
        %v565 = vadd.f32 %v404, %v491
        %v566 = vadd.f32 %v388, %v493
        %v567 = vadd.f32 %v405, %v495
        %v568 = vadd.f32 %v389, %v497
        %v569 = vadd.f32 %v406, %v499
        %v570 = vadd.f32 %v390, %v501
        %v571 = vadd.f32 %v407, %v503
        %v572 = vadd.f32 %v391, %v505
        %v573 = vadd.f32 %v408, %v507
        %v574 = vadd.f32 %v392, %v509
        %v575 = vadd.f32 %v409, %v511
        %vm576 = vcmask 1045504
        %v577 = vrot.slane %v377, 2
        %v578 = vrot.slane %v378, 2
        %v579 = vsel %vm576, %v577, %v578
        %v580 = vrot.slane %v394, 2
        %v581 = vrot.slane %v395, 2
        %v582 = vsel %vm576, %v580, %v581
        %v583 = vrot.slane %v379, 2
        %v584 = vsel %vm576, %v578, %v583
        %v585 = vrot.slane %v396, 2
        %v586 = vsel %vm576, %v581, %v585
        %v587 = vrot.slane %v380, 2
        %v588 = vsel %vm576, %v583, %v587
        %v589 = vrot.slane %v397, 2
        %v590 = vsel %vm576, %v585, %v589
        %v591 = vrot.slane %v381, 2
        %v592 = vsel %vm576, %v587, %v591
        %v593 = vrot.slane %v398, 2
        %v594 = vsel %vm576, %v589, %v593
        %v595 = vrot.slane %v382, 2
        %v596 = vsel %vm576, %v591, %v595
        %v597 = vrot.slane %v399, 2
        %v598 = vsel %vm576, %v593, %v597
        %v599 = vrot.slane %v383, 2
        %v600 = vsel %vm576, %v595, %v599
        %v601 = vrot.slane %v400, 2
        %v602 = vsel %vm576, %v597, %v601
        %v603 = vrot.slane %v384, 2
        %v604 = vsel %vm576, %v599, %v603
        %v605 = vrot.slane %v401, 2
        %v606 = vsel %vm576, %v601, %v605
        %v607 = vrot.slane %v385, 2
        %v608 = vsel %vm576, %v603, %v607
        %v609 = vrot.slane %v402, 2
        %v610 = vsel %vm576, %v605, %v609
        %v611 = vrot.slane %v386, 2
        %v612 = vsel %vm576, %v607, %v611
        %v613 = vrot.slane %v403, 2
        %v614 = vsel %vm576, %v609, %v613
        %v615 = vrot.slane %v387, 2
        %v616 = vsel %vm576, %v611, %v615
        %v617 = vrot.slane %v404, 2
        %v618 = vsel %vm576, %v613, %v617
        %v619 = vrot.slane %v388, 2
        %v620 = vsel %vm576, %v615, %v619
        %v621 = vrot.slane %v405, 2
        %v622 = vsel %vm576, %v617, %v621
        %v623 = vrot.slane %v389, 2
        %v624 = vsel %vm576, %v619, %v623
        %v625 = vrot.slane %v406, 2
        %v626 = vsel %vm576, %v621, %v625
        %v627 = vrot.slane %v390, 2
        %v628 = vsel %vm576, %v623, %v627
        %v629 = vrot.slane %v407, 2
        %v630 = vsel %vm576, %v625, %v629
        %v631 = vrot.slane %v391, 2
        %v632 = vsel %vm576, %v627, %v631
        %v633 = vrot.slane %v408, 2
        %v634 = vsel %vm576, %v629, %v633
        %v635 = vrot.slane %v392, 2
        %v636 = vsel %vm576, %v631, %v635
        %v637 = vrot.slane %v409, 2
        %v638 = vsel %vm576, %v633, %v637
        %v639 = vrot.slane %v393, 2
        %v640 = vsel %vm576, %v635, %v639
        %v641 = vrot.slane %v410, 2
        %v642 = vsel %vm576, %v637, %v641
        %v675 = vadd.f32 %v544, %v579
        %v676 = vadd.f32 %v545, %v582
        %v677 = vadd.f32 %v546, %v584
        %v678 = vadd.f32 %v547, %v586
        %v679 = vadd.f32 %v548, %v588
        %v680 = vadd.f32 %v549, %v590
        %v681 = vadd.f32 %v550, %v592
        %v682 = vadd.f32 %v551, %v594
        %v683 = vadd.f32 %v552, %v596
        %v684 = vadd.f32 %v553, %v598
        %v685 = vadd.f32 %v554, %v600
        %v686 = vadd.f32 %v555, %v602
        %v687 = vadd.f32 %v556, %v604
        %v688 = vadd.f32 %v557, %v606
        %v689 = vadd.f32 %v558, %v608
        %v690 = vadd.f32 %v559, %v610
        %v691 = vadd.f32 %v560, %v612
        %v692 = vadd.f32 %v561, %v614
        %v693 = vadd.f32 %v562, %v616
        %v694 = vadd.f32 %v563, %v618
        %v695 = vadd.f32 %v564, %v620
        %v696 = vadd.f32 %v565, %v622
        %v697 = vadd.f32 %v566, %v624
        %v698 = vadd.f32 %v567, %v626
        %v699 = vadd.f32 %v568, %v628
        %v700 = vadd.f32 %v569, %v630
        %v701 = vadd.f32 %v570, %v632
        %v702 = vadd.f32 %v571, %v634
        %v703 = vadd.f32 %v572, %v636
        %v704 = vadd.f32 %v573, %v638
        %v705 = vadd.f32 %v574, %v640
        %v706 = vadd.f32 %v575, %v642
        %739 = vrot.lane.b32.xlu0 %v675, 127
        %v740 = vpop.permute.xlu0 %739
        %741 = vrot.lane.b32.xlu0 %v676, 127
        %v742 = vpop.permute.xlu0 %741
        %743 = vrot.lane.b32.xlu0 %v677, 127
        %v744 = vpop.permute.xlu0 %743
        %745 = vrot.lane.b32.xlu0 %v678, 127
        %v746 = vpop.permute.xlu0 %745
        %747 = vrot.lane.b32.xlu0 %v679, 127
        %v748 = vpop.permute.xlu0 %747
        %749 = vrot.lane.b32.xlu0 %v680, 127
        %v750 = vpop.permute.xlu0 %749
        %751 = vrot.lane.b32.xlu0 %v681, 127
        %v752 = vpop.permute.xlu0 %751
        %753 = vrot.lane.b32.xlu0 %v682, 127
        %v754 = vpop.permute.xlu0 %753
        %755 = vrot.lane.b32.xlu0 %v683, 127
        %v756 = vpop.permute.xlu0 %755
        %757 = vrot.lane.b32.xlu0 %v684, 127
        %v758 = vpop.permute.xlu0 %757
        %759 = vrot.lane.b32.xlu0 %v685, 127
        %v760 = vpop.permute.xlu0 %759
        %761 = vrot.lane.b32.xlu0 %v686, 127
        %v762 = vpop.permute.xlu0 %761
        %763 = vrot.lane.b32.xlu0 %v687, 127
        %v764 = vpop.permute.xlu0 %763
        %765 = vrot.lane.b32.xlu0 %v688, 127
        %v766 = vpop.permute.xlu0 %765
        %767 = vrot.lane.b32.xlu0 %v689, 127
        %v768 = vpop.permute.xlu0 %767
        %769 = vrot.lane.b32.xlu0 %v690, 127
        %v770 = vpop.permute.xlu0 %769
        %771 = vrot.lane.b32.xlu0 %v691, 127
        %v772 = vpop.permute.xlu0 %771
        %773 = vrot.lane.b32.xlu0 %v692, 127
        %v774 = vpop.permute.xlu0 %773
        %775 = vrot.lane.b32.xlu0 %v693, 127
        %v776 = vpop.permute.xlu0 %775
        %777 = vrot.lane.b32.xlu0 %v694, 127
        %v778 = vpop.permute.xlu0 %777
        %779 = vrot.lane.b32.xlu0 %v695, 127
        %v780 = vpop.permute.xlu0 %779
        %781 = vrot.lane.b32.xlu0 %v696, 127
        %v782 = vpop.permute.xlu0 %781
        %783 = vrot.lane.b32.xlu0 %v697, 127
        %v784 = vpop.permute.xlu0 %783
        %785 = vrot.lane.b32.xlu0 %v698, 127
        %v786 = vpop.permute.xlu0 %785
        %787 = vrot.lane.b32.xlu0 %v699, 127
        %v788 = vpop.permute.xlu0 %787
        %789 = vrot.lane.b32.xlu0 %v700, 127
        %v790 = vpop.permute.xlu0 %789
        %791 = vrot.lane.b32.xlu0 %v701, 127
        %v792 = vpop.permute.xlu0 %791
        %793 = vrot.lane.b32.xlu0 %v702, 127
        %v794 = vpop.permute.xlu0 %793
        %795 = vrot.lane.b32.xlu0 %v703, 127
        %v796 = vpop.permute.xlu0 %795
        %797 = vrot.lane.b32.xlu0 %v704, 127
        %v798 = vpop.permute.xlu0 %797
        %799 = vrot.lane.b32.xlu0 %v705, 127
        %v800 = vpop.permute.xlu0 %799
        %801 = vrot.lane.b32.xlu0 %v706, 127
        %v802 = vpop.permute.xlu0 %801
        %vm803 = vcmask 1039360
        %v804 = vsel %vm803, %v740, %v742
        %v805 = vsel %vm803, %v744, %v746
        %v806 = vsel %vm803, %v748, %v750
        %v807 = vsel %vm803, %v752, %v754
        %v808 = vsel %vm803, %v756, %v758
        %v809 = vsel %vm803, %v760, %v762
        %v810 = vsel %vm803, %v764, %v766
        %v811 = vsel %vm803, %v768, %v770
        %v812 = vsel %vm803, %v772, %v774
        %v813 = vsel %vm803, %v776, %v778
        %v814 = vsel %vm803, %v780, %v782
        %v815 = vsel %vm803, %v784, %v786
        %v816 = vsel %vm803, %v788, %v790
        %v817 = vsel %vm803, %v792, %v794
        %v818 = vsel %vm803, %v796, %v798
        %v819 = vsel %vm803, %v800, %v802
        %v836 = vadd.f32 %v675, %v804
        %v837 = vadd.f32 %v677, %v805
        %v838 = vadd.f32 %v679, %v806
        %v839 = vadd.f32 %v681, %v807
        %v840 = vadd.f32 %v683, %v808
        %v841 = vadd.f32 %v685, %v809
        %v842 = vadd.f32 %v687, %v810
        %v843 = vadd.f32 %v689, %v811
        %v844 = vadd.f32 %v691, %v812
        %v845 = vadd.f32 %v693, %v813
        %v846 = vadd.f32 %v695, %v814
        %v847 = vadd.f32 %v697, %v815
        %v848 = vadd.f32 %v699, %v816
        %v849 = vadd.f32 %v701, %v817
        %v850 = vadd.f32 %v703, %v818
        %v851 = vadd.f32 %v705, %v819
        %852 = vrot.lane.b32.xlu0 %v675, 126
        %v853 = vpop.permute.xlu0 %852
        %854 = vrot.lane.b32.xlu0 %v676, 126
        %v855 = vpop.permute.xlu0 %854
        %856 = vrot.lane.b32.xlu0 %v677, 126
        %v857 = vpop.permute.xlu0 %856
        %858 = vrot.lane.b32.xlu0 %v678, 126
        %v859 = vpop.permute.xlu0 %858
        %860 = vrot.lane.b32.xlu0 %v679, 126
        %v861 = vpop.permute.xlu0 %860
        %862 = vrot.lane.b32.xlu0 %v680, 126
        %v863 = vpop.permute.xlu0 %862
        %864 = vrot.lane.b32.xlu0 %v681, 126
        %v865 = vpop.permute.xlu0 %864
        %866 = vrot.lane.b32.xlu0 %v682, 126
        %v867 = vpop.permute.xlu0 %866
        %868 = vrot.lane.b32.xlu0 %v683, 126
        %v869 = vpop.permute.xlu0 %868
        %870 = vrot.lane.b32.xlu0 %v684, 126
        %v871 = vpop.permute.xlu0 %870
        %872 = vrot.lane.b32.xlu0 %v685, 126
        %v873 = vpop.permute.xlu0 %872
        %874 = vrot.lane.b32.xlu0 %v686, 126
        %v875 = vpop.permute.xlu0 %874
        %876 = vrot.lane.b32.xlu0 %v687, 126
        %v877 = vpop.permute.xlu0 %876
        %878 = vrot.lane.b32.xlu0 %v688, 126
        %v879 = vpop.permute.xlu0 %878
        %880 = vrot.lane.b32.xlu0 %v689, 126
        %v881 = vpop.permute.xlu0 %880
        %882 = vrot.lane.b32.xlu0 %v690, 126
        %v883 = vpop.permute.xlu0 %882
        %884 = vrot.lane.b32.xlu0 %v691, 126
        %v885 = vpop.permute.xlu0 %884
        %886 = vrot.lane.b32.xlu0 %v692, 126
        %v887 = vpop.permute.xlu0 %886
        %888 = vrot.lane.b32.xlu0 %v693, 126
        %v889 = vpop.permute.xlu0 %888
        %890 = vrot.lane.b32.xlu0 %v694, 126
        %v891 = vpop.permute.xlu0 %890
        %892 = vrot.lane.b32.xlu0 %v695, 126
        %v893 = vpop.permute.xlu0 %892
        %894 = vrot.lane.b32.xlu0 %v696, 126
        %v895 = vpop.permute.xlu0 %894
        %896 = vrot.lane.b32.xlu0 %v697, 126
        %v897 = vpop.permute.xlu0 %896
        %898 = vrot.lane.b32.xlu0 %v698, 126
        %v899 = vpop.permute.xlu0 %898
        %900 = vrot.lane.b32.xlu0 %v699, 126
        %v901 = vpop.permute.xlu0 %900
        %902 = vrot.lane.b32.xlu0 %v700, 126
        %v903 = vpop.permute.xlu0 %902
        %904 = vrot.lane.b32.xlu0 %v701, 126
        %v905 = vpop.permute.xlu0 %904
        %906 = vrot.lane.b32.xlu0 %v702, 126
        %v907 = vpop.permute.xlu0 %906
        %908 = vrot.lane.b32.xlu0 %v703, 126
        %v909 = vpop.permute.xlu0 %908
        %910 = vrot.lane.b32.xlu0 %v704, 126
        %v911 = vpop.permute.xlu0 %910
        %912 = vrot.lane.b32.xlu0 %v705, 126
        %v913 = vpop.permute.xlu0 %912
        %914 = vrot.lane.b32.xlu0 %v706, 126
        %v915 = vpop.permute.xlu0 %914
        %vm916 = vcmask 1031168
        %v917 = vsel %vm916, %v853, %v855
        %v918 = vsel %vm916, %v857, %v859
        %v919 = vsel %vm916, %v861, %v863
        %v920 = vsel %vm916, %v865, %v867
        %v921 = vsel %vm916, %v869, %v871
        %v922 = vsel %vm916, %v873, %v875
        %v923 = vsel %vm916, %v877, %v879
        %v924 = vsel %vm916, %v881, %v883
        %v925 = vsel %vm916, %v885, %v887
        %v926 = vsel %vm916, %v889, %v891
        %v927 = vsel %vm916, %v893, %v895
        %v928 = vsel %vm916, %v897, %v899
        %v929 = vsel %vm916, %v901, %v903
        %v930 = vsel %vm916, %v905, %v907
        %v931 = vsel %vm916, %v909, %v911
        %v932 = vsel %vm916, %v913, %v915
        %v949 = vadd.f32 %v836, %v917
        %v950 = vadd.f32 %v837, %v918
        %v951 = vadd.f32 %v838, %v919
        %v952 = vadd.f32 %v839, %v920
        %v953 = vadd.f32 %v840, %v921
        %v954 = vadd.f32 %v841, %v922
        %v955 = vadd.f32 %v842, %v923
        %v956 = vadd.f32 %v843, %v924
        %v957 = vadd.f32 %v844, %v925
        %v958 = vadd.f32 %v845, %v926
        %v959 = vadd.f32 %v846, %v927
        %v960 = vadd.f32 %v847, %v928
        %v961 = vadd.f32 %v848, %v929
        %v962 = vadd.f32 %v849, %v930
        %v963 = vadd.f32 %v850, %v931
        %v964 = vadd.f32 %v851, %v932
        %v965 = vpack.c.bf16 %v150, %v149
        %v966 = vpack.c.bf16 %v152, %v151
        %v967 = vpack.c.bf16 %v154, %v153
        %v968 = vpack.c.bf16 %v156, %v155
        %v969 = vpack.c.bf16 %v158, %v157
        %v970 = vpack.c.bf16 %v160, %v159
        %v971 = vpack.c.bf16 %v162, %v161
        %v972 = vpack.c.bf16 %v164, %v163
        %v981 = vunpack.c.l.b16 %v965
        %v982 = vunpack.c.h.b16 %v965
        %v983 = vunpack.c.l.b16 %v966
        %v984 = vunpack.c.h.b16 %v966
        %v985 = vunpack.c.l.b16 %v967
        %v986 = vunpack.c.h.b16 %v967
        %v987 = vunpack.c.l.b16 %v968
        %v988 = vunpack.c.h.b16 %v968
        %v989 = vunpack.c.l.b16 %v969
        %v990 = vunpack.c.h.b16 %v969
        %v991 = vunpack.c.l.b16 %v970
        %v992 = vunpack.c.h.b16 %v970
        %v993 = vunpack.c.l.b16 %v971
        %v994 = vunpack.c.h.b16 %v971
        %v995 = vunpack.c.l.b16 %v972
        %v996 = vunpack.c.h.b16 %v972
        %v997 = vpack.c.b16 %v981, %v981
        %v998 = vpack.c.b16 %v982, %v982
        %v999 = vpack.c.b16 %v983, %v983
        %v1000 = vpack.c.b16 %v984, %v984
        %v1001 = vpack.c.b16 %v985, %v985
        %v1002 = vpack.c.b16 %v986, %v986
        %v1003 = vpack.c.b16 %v987, %v987
        %v1004 = vpack.c.b16 %v988, %v988
        %v1005 = vpack.c.b16 %v989, %v989
        %v1006 = vpack.c.b16 %v990, %v990
        %v1007 = vpack.c.b16 %v991, %v991
        %v1008 = vpack.c.b16 %v992, %v992
        %v1009 = vpack.c.b16 %v993, %v993
        %v1010 = vpack.c.b16 %v994, %v994
        %v1011 = vpack.c.b16 %v995, %v995
        %v1012 = vpack.c.b16 %v996, %v996
        %1029 = vst [vmem:[%s148] sm:$0xf] %v997
        %1030 = vst [vmem:[%s148 + $0x4] sm:$0xf] %v998
        %1031 = vst [vmem:[%s148 + $0x8] sm:$0xf] %v999
        %1032 = vst [vmem:[%s148 + $0xc] sm:$0xf] %v1000
        %1033 = vst [vmem:[%s148 + $0x10] sm:$0xf] %v1001
        %1034 = vst [vmem:[%s148 + $0x14] sm:$0xf] %v1002
        %1035 = vst [vmem:[%s148 + $0x18] sm:$0xf] %v1003
        %1036 = vst [vmem:[%s148 + $0x1c] sm:$0xf] %v1004
        %1037 = vst [vmem:[%s148 + $0x20] sm:$0xf] %v1005
        %1038 = vst [vmem:[%s148 + $0x24] sm:$0xf] %v1006
        %1039 = vst [vmem:[%s148 + $0x28] sm:$0xf] %v1007
        %1040 = vst [vmem:[%s148 + $0x2c] sm:$0xf] %v1008
        %1041 = vst [vmem:[%s148 + $0x30] sm:$0xf] %v1009
        %1042 = vst [vmem:[%s148 + $0x34] sm:$0xf] %v1010
        %1043 = vst [vmem:[%s148 + $0x38] sm:$0xf] %v1011
        %1044 = vst [vmem:[%s148 + $0x3c] sm:$0xf] %v1012
        %v1045 = vmul.f32 %v949, 0.11111111
        %v1046 = vmul.f32 %v950, 0.11111111
        %v1047 = vmul.f32 %v951, 0.11111111
        %v1048 = vmul.f32 %v952, 0.11111111
        %v1049 = vmul.f32 %v953, 0.11111111
        %v1050 = vmul.f32 %v954, 0.11111111
        %v1051 = vmul.f32 %v955, 0.11111111
        %v1052 = vmul.f32 %v956, 0.11111111
        %v1053 = vmul.f32 %v957, 0.11111111
        %v1054 = vmul.f32 %v958, 0.11111111
        %v1055 = vmul.f32 %v959, 0.11111111
        %v1056 = vmul.f32 %v960, 0.11111111
        %v1057 = vmul.f32 %v961, 0.11111111
        %v1058 = vmul.f32 %v962, 0.11111111
        %v1059 = vmul.f32 %v963, 0.11111111
        %v1060 = vmul.f32 %v964, 0.11111111
        %v1061 = vsub.f32 %v149, %v1045
        %v1062 = vsub.f32 %v150, %v1046
        %v1063 = vsub.f32 %v151, %v1047
        %v1064 = vsub.f32 %v152, %v1048
        %v1065 = vsub.f32 %v153, %v1049
        %v1066 = vsub.f32 %v154, %v1050
        %v1067 = vsub.f32 %v155, %v1051
        %v1068 = vsub.f32 %v156, %v1052
        %v1069 = vsub.f32 %v157, %v1053
        %v1070 = vsub.f32 %v158, %v1054
        %v1071 = vsub.f32 %v159, %v1055
        %v1072 = vsub.f32 %v160, %v1056
        %v1073 = vsub.f32 %v161, %v1057
        %v1074 = vsub.f32 %v162, %v1058
        %v1075 = vsub.f32 %v163, %v1059
        %v1076 = vsub.f32 %v164, %v1060
        %v1077 = vpack.c.bf16 %v1062, %v1061
        %v1078 = vpack.c.bf16 %v1064, %v1063
        %v1079 = vpack.c.bf16 %v1066, %v1065
        %v1080 = vpack.c.bf16 %v1068, %v1067
        %v1081 = vpack.c.bf16 %v1070, %v1069
        %v1082 = vpack.c.bf16 %v1072, %v1071
        %v1083 = vpack.c.bf16 %v1074, %v1073
        %v1084 = vpack.c.bf16 %v1076, %v1075
        %v1093 = vunpack.c.l.b16 %v1077
        %v1094 = vunpack.c.h.b16 %v1077
        %v1095 = vunpack.c.l.b16 %v1078
        %v1096 = vunpack.c.h.b16 %v1078
        %v1097 = vunpack.c.l.b16 %v1079
        %v1098 = vunpack.c.h.b16 %v1079
        %v1099 = vunpack.c.l.b16 %v1080
        %v1100 = vunpack.c.h.b16 %v1080
        %v1101 = vunpack.c.l.b16 %v1081
        %v1102 = vunpack.c.h.b16 %v1081
        %v1103 = vunpack.c.l.b16 %v1082
        %v1104 = vunpack.c.h.b16 %v1082
        %v1105 = vunpack.c.l.b16 %v1083
        %v1106 = vunpack.c.h.b16 %v1083
        %v1107 = vunpack.c.l.b16 %v1084
        %v1108 = vunpack.c.h.b16 %v1084
        %v1109 = vpack.c.b16 %v1093, %v1093
        %v1110 = vpack.c.b16 %v1094, %v1094
        %v1111 = vpack.c.b16 %v1095, %v1095
        %v1112 = vpack.c.b16 %v1096, %v1096
        %v1113 = vpack.c.b16 %v1097, %v1097
        %v1114 = vpack.c.b16 %v1098, %v1098
        %v1115 = vpack.c.b16 %v1099, %v1099
        %v1116 = vpack.c.b16 %v1100, %v1100
        %v1117 = vpack.c.b16 %v1101, %v1101
        %v1118 = vpack.c.b16 %v1102, %v1102
        %v1119 = vpack.c.b16 %v1103, %v1103
        %v1120 = vpack.c.b16 %v1104, %v1104
        %v1121 = vpack.c.b16 %v1105, %v1105
        %v1122 = vpack.c.b16 %v1106, %v1106
        %v1123 = vpack.c.b16 %v1107, %v1107
        %v1124 = vpack.c.b16 %v1108, %v1108
        %s1141 = scalar_lea.vmem %s148, 64 [#allocation4]
        %1142 = vst [vmem:[%s1141] sm:$0xf] %v1109
        %1143 = vst [vmem:[%s1141 + $0x4] sm:$0xf] %v1110
        %1144 = vst [vmem:[%s1141 + $0x8] sm:$0xf] %v1111
        %1145 = vst [vmem:[%s1141 + $0xc] sm:$0xf] %v1112
        %1146 = vst [vmem:[%s1141 + $0x10] sm:$0xf] %v1113
        %1147 = vst [vmem:[%s1141 + $0x14] sm:$0xf] %v1114
        %1148 = vst [vmem:[%s1141 + $0x18] sm:$0xf] %v1115
        %1149 = vst [vmem:[%s1141 + $0x1c] sm:$0xf] %v1116
        %1150 = vst [vmem:[%s1141 + $0x20] sm:$0xf] %v1117
        %1151 = vst [vmem:[%s1141 + $0x24] sm:$0xf] %v1118
        %1152 = vst [vmem:[%s1141 + $0x28] sm:$0xf] %v1119
        %1153 = vst [vmem:[%s1141 + $0x2c] sm:$0xf] %v1120
        %1154 = vst [vmem:[%s1141 + $0x30] sm:$0xf] %v1121
        %1155 = vst [vmem:[%s1141 + $0x34] sm:$0xf] %v1122
        %1156 = vst [vmem:[%s1141 + $0x38] sm:$0xf] %v1123
        %1157 = vst [vmem:[%s1141 + $0x3c] sm:$0xf] %v1124
        %s1158 = sand.u32 %s65, 1
        %s1159 = sand.u32 %s65, 1
        %s1160 = smul.addr %s1159, 128
        %s1161 = scalar_lea.vmem [#allocation4], %s1160
        // Predicated region
        $region29: #{discriminator_forward.5} parent=23 // pred_check
          %p1162 = pneg %p75
        $region30: #{discriminator_forward.5} parent=23 // pred_check_branch
          %1164 = sbr.rel (%p1162) target = $region32
        $region31: #{discriminator_forward.5} parent=23 // pred_region
          %s1165 = smul.addr %s19, 16
          %s1166 = smul.addr %s20, 32
          %s1167 = sadd.s32 %s1165, %s1166
          %s1168 = smul.addr %s1167, 4
          %s1169 = scalar_lea.vmem %s1, %s1168
          // Predicated region
          $region33: #{discriminator_forward.5} parent=31 // pred_check
            _
          $region34: #{discriminator_forward.5} parent=31 // pred_check_branch
            %1171 = sbr.rel (0) target = $region36
          $region35: #{discriminator_forward.5} parent=31 // pred_region
            // Predicated region
            $region37: #{discriminator_forward.5} parent=35 // pred_check
              _
            $region38: #{discriminator_forward.5} parent=35 // pred_check_branch
              %1173 = sbr.rel target = $region40
            $region39: #{discriminator_forward.5} parent=35 // pred_region
              // Predicated region
              $region52: #{discriminator_forward.5} parent=39 // pred_check
                _
              $region53: #{discriminator_forward.5} parent=39 // pred_check_branch
                %1251 = sbr.rel (0) target = $region55
              $region54: #{discriminator_forward.5} parent=39 // pred_region
                loop: start=0, step=1, limit=1
                $region56: #{discriminator_forward.5} parent=54 // loop_pre_header
                  _
                $region57: #{discriminator_forward.5} parent=54 // loop_header
                  %s1253 = sphi 0, %s1257
                  %p1254 = scmp.ge.s32.totalorder %s1253, 1
                  %s1258 = sphi %s1161, %s1161
                  %s1259 = sphi %s1169, %s1169
                $region58: #{discriminator_forward.5} parent=54 // loop_header_branch
                  %1256 = sbr.rel (%p1254) target = $region62
                $region59: #{discriminator_forward.5} parent=54 // loop_body
                  _
                $region60: #{discriminator_forward.5} parent=54 // loop_footer
                  %s1257 = sadd.s32 1, %s1253
                $region61: #{discriminator_forward.5} parent=54 // loop_footer_branch
                  %1252 = sbr.rel target = $region57
                $region62: #{discriminator_forward.5} parent=54 // loop_exit
                  _
                %s1261 = ssub.s32 16, 1
                loop: start=0, step=1, limit=1
                $region63: #{discriminator_forward.5} parent=54 // loop_pre_header
                  _
                $region64: #{discriminator_forward.5} parent=54 // loop_header
                  %s1263 = sphi 0, %s1267
                  %p1264 = scmp.ge.s32.totalorder %s1263, 1
                  %s1268 = sphi %s1161, %s1161
                  %s1269 = sphi %s1169, %s1169
                $region65: #{discriminator_forward.5} parent=54 // loop_header_branch
                  %1266 = sbr.rel (%p1264) target = $region69
                $region66: #{discriminator_forward.5} parent=54 // loop_body
                  %v1270 = vld [vmem:[%s1268] sm:%s1261]
                  %1271 = vst [vmem:[%s1269] sm:%s1261] %v1270
                  %v1272 = vld [vmem:[%s1268 + $0x4] sm:%s1261]
                  %1273 = vst [vmem:[%s1269 + $0x4] sm:%s1261] %v1272
                  %v1274 = vld [vmem:[%s1268 + $0x8] sm:%s1261]
                  %1275 = vst [vmem:[%s1269 + $0x8] sm:%s1261] %v1274
                  %v1276 = vld [vmem:[%s1268 + $0xc] sm:%s1261]
                  %1277 = vst [vmem:[%s1269 + $0xc] sm:%s1261] %v1276
                  %v1278 = vld [vmem:[%s1268 + $0x10] sm:%s1261]
                  %1279 = vst [vmem:[%s1269 + $0x10] sm:%s1261] %v1278
                  %v1280 = vld [vmem:[%s1268 + $0x14] sm:%s1261]
                  %1281 = vst [vmem:[%s1269 + $0x14] sm:%s1261] %v1280
                  %v1282 = vld [vmem:[%s1268 + $0x18] sm:%s1261]
                  %1283 = vst [vmem:[%s1269 + $0x18] sm:%s1261] %v1282
                  %v1284 = vld [vmem:[%s1268 + $0x1c] sm:%s1261]
                  %1285 = vst [vmem:[%s1269 + $0x1c] sm:%s1261] %v1284
                  %v1286 = vld [vmem:[%s1268 + $0x20] sm:%s1261]
                  %1287 = vst [vmem:[%s1269 + $0x20] sm:%s1261] %v1286
                  %v1288 = vld [vmem:[%s1268 + $0x24] sm:%s1261]
                  %1289 = vst [vmem:[%s1269 + $0x24] sm:%s1261] %v1288
                  %v1290 = vld [vmem:[%s1268 + $0x28] sm:%s1261]
                  %1291 = vst [vmem:[%s1269 + $0x28] sm:%s1261] %v1290
                  %v1292 = vld [vmem:[%s1268 + $0x2c] sm:%s1261]
                  %1293 = vst [vmem:[%s1269 + $0x2c] sm:%s1261] %v1292
                  %v1294 = vld [vmem:[%s1268 + $0x30] sm:%s1261]
                  %1295 = vst [vmem:[%s1269 + $0x30] sm:%s1261] %v1294
                  %v1296 = vld [vmem:[%s1268 + $0x34] sm:%s1261]
                  %1297 = vst [vmem:[%s1269 + $0x34] sm:%s1261] %v1296
                  %v1298 = vld [vmem:[%s1268 + $0x38] sm:%s1261]
                  %1299 = vst [vmem:[%s1269 + $0x38] sm:%s1261] %v1298
                  %v1300 = vld [vmem:[%s1268 + $0x3c] sm:%s1261]
                  %1301 = vst [vmem:[%s1269 + $0x3c] sm:%s1261] %v1300
                  %v1302 = vld [vmem:[%s1268 + $0x40] sm:%s1261]
                  %1303 = vst [vmem:[%s1269 + $0x100] sm:%s1261] %v1302
                  %v1304 = vld [vmem:[%s1268 + $0x44] sm:%s1261]
                  %1305 = vst [vmem:[%s1269 + $0x104] sm:%s1261] %v1304
                  %v1306 = vld [vmem:[%s1268 + $0x48] sm:%s1261]
                  %1307 = vst [vmem:[%s1269 + $0x108] sm:%s1261] %v1306
                  %v1308 = vld [vmem:[%s1268 + $0x4c] sm:%s1261]
                  %1309 = vst [vmem:[%s1269 + $0x10c] sm:%s1261] %v1308
                  %v1310 = vld [vmem:[%s1268 + $0x50] sm:%s1261]
                  %1311 = vst [vmem:[%s1269 + $0x110] sm:%s1261] %v1310
                  %v1312 = vld [vmem:[%s1268 + $0x54] sm:%s1261]
                  %1313 = vst [vmem:[%s1269 + $0x114] sm:%s1261] %v1312
                  %v1314 = vld [vmem:[%s1268 + $0x58] sm:%s1261]
                  %1315 = vst [vmem:[%s1269 + $0x118] sm:%s1261] %v1314
                  %v1316 = vld [vmem:[%s1268 + $0x5c] sm:%s1261]
                  %1317 = vst [vmem:[%s1269 + $0x11c] sm:%s1261] %v1316
                  %v1318 = vld [vmem:[%s1268 + $0x60] sm:%s1261]
                  %1319 = vst [vmem:[%s1269 + $0x120] sm:%s1261] %v1318
                  %v1320 = vld [vmem:[%s1268 + $0x64] sm:%s1261]
                  %1321 = vst [vmem:[%s1269 + $0x124] sm:%s1261] %v1320
                  %v1322 = vld [vmem:[%s1268 + $0x68] sm:%s1261]
                  %1323 = vst [vmem:[%s1269 + $0x128] sm:%s1261] %v1322
                  %v1324 = vld [vmem:[%s1268 + $0x6c] sm:%s1261]
                  %1325 = vst [vmem:[%s1269 + $0x12c] sm:%s1261] %v1324
                  %v1326 = vld [vmem:[%s1268 + $0x70] sm:%s1261]
                  %1327 = vst [vmem:[%s1269 + $0x130] sm:%s1261] %v1326
                  %v1328 = vld [vmem:[%s1268 + $0x74] sm:%s1261]
                  %1329 = vst [vmem:[%s1269 + $0x134] sm:%s1261] %v1328
                  %v1330 = vld [vmem:[%s1268 + $0x78] sm:%s1261]
                  %1331 = vst [vmem:[%s1269 + $0x138] sm:%s1261] %v1330
                  %v1332 = vld [vmem:[%s1268 + $0x7c] sm:%s1261]
                  %1333 = vst [vmem:[%s1269 + $0x13c] sm:%s1261] %v1332
                $region67: #{discriminator_forward.5} parent=54 // loop_footer
                  %s1267 = sadd.s32 1, %s1263
                $region68: #{discriminator_forward.5} parent=54 // loop_footer_branch
                  %1262 = sbr.rel target = $region64
                $region69: #{discriminator_forward.5} parent=54 // loop_exit
                  _
              $region55: #{discriminator_forward.5} parent=39 // pred_fallthru
                _
            $region40: #{discriminator_forward.5} parent=35 // pred_fallthru
              _
            // Predicated region
            $region41: #{discriminator_forward.5} parent=35 // pred_check
              _
            $region42: #{discriminator_forward.5} parent=35 // pred_check_branch
              %1175 = sbr.rel (0) target = $region44
            $region43: #{discriminator_forward.5} parent=35 // pred_region
              %s1177 = ssub.s32 16, 1
              loop: start=0, step=1, limit=1
              $region45: #{discriminator_forward.5} parent=43 // loop_pre_header
                _
              $region46: #{discriminator_forward.5} parent=43 // loop_header
                %s1179 = sphi 0, %s1183
                %p1180 = scmp.ge.s32.totalorder %s1179, 1
                %s1184 = sphi %s1161, %s1161
                %s1185 = sphi %s1169, %s1169
              $region47: #{discriminator_forward.5} parent=43 // loop_header_branch
                %1182 = sbr.rel (%p1180) target = $region51
              $region48: #{discriminator_forward.5} parent=43 // loop_body
                %v1186 = vld [vmem:[%s1184] sm:%s1177]
                %1187 = vst [vmem:[%s1185] sm:%s1177] %v1186
                %v1188 = vld [vmem:[%s1184 + $0x4] sm:%s1177]
                %1189 = vst [vmem:[%s1185 + $0x4] sm:%s1177] %v1188
                %v1190 = vld [vmem:[%s1184 + $0x8] sm:%s1177]
                %1191 = vst [vmem:[%s1185 + $0x8] sm:%s1177] %v1190
                %v1192 = vld [vmem:[%s1184 + $0xc] sm:%s1177]
                %1193 = vst [vmem:[%s1185 + $0xc] sm:%s1177] %v1192
                %v1194 = vld [vmem:[%s1184 + $0x10] sm:%s1177]
                %1195 = vst [vmem:[%s1185 + $0x10] sm:%s1177] %v1194
                %v1196 = vld [vmem:[%s1184 + $0x14] sm:%s1177]
                %1197 = vst [vmem:[%s1185 + $0x14] sm:%s1177] %v1196
                %v1198 = vld [vmem:[%s1184 + $0x18] sm:%s1177]
                %1199 = vst [vmem:[%s1185 + $0x18] sm:%s1177] %v1198
                %v1200 = vld [vmem:[%s1184 + $0x1c] sm:%s1177]
                %1201 = vst [vmem:[%s1185 + $0x1c] sm:%s1177] %v1200
                %v1202 = vld [vmem:[%s1184 + $0x20] sm:%s1177]
                %1203 = vst [vmem:[%s1185 + $0x20] sm:%s1177] %v1202
                %v1204 = vld [vmem:[%s1184 + $0x24] sm:%s1177]
                %1205 = vst [vmem:[%s1185 + $0x24] sm:%s1177] %v1204
                %v1206 = vld [vmem:[%s1184 + $0x28] sm:%s1177]
                %1207 = vst [vmem:[%s1185 + $0x28] sm:%s1177] %v1206
                %v1208 = vld [vmem:[%s1184 + $0x2c] sm:%s1177]
                %1209 = vst [vmem:[%s1185 + $0x2c] sm:%s1177] %v1208
                %v1210 = vld [vmem:[%s1184 + $0x30] sm:%s1177]
                %1211 = vst [vmem:[%s1185 + $0x30] sm:%s1177] %v1210
                %v1212 = vld [vmem:[%s1184 + $0x34] sm:%s1177]
                %1213 = vst [vmem:[%s1185 + $0x34] sm:%s1177] %v1212
                %v1214 = vld [vmem:[%s1184 + $0x38] sm:%s1177]
                %1215 = vst [vmem:[%s1185 + $0x38] sm:%s1177] %v1214
                %v1216 = vld [vmem:[%s1184 + $0x3c] sm:%s1177]
                %1217 = vst [vmem:[%s1185 + $0x3c] sm:%s1177] %v1216
                %v1218 = vld [vmem:[%s1184 + $0x40] sm:%s1177]
                %1219 = vst [vmem:[%s1185 + $0x100] sm:%s1177] %v1218
                %v1220 = vld [vmem:[%s1184 + $0x44] sm:%s1177]
                %1221 = vst [vmem:[%s1185 + $0x104] sm:%s1177] %v1220
                %v1222 = vld [vmem:[%s1184 + $0x48] sm:%s1177]
                %1223 = vst [vmem:[%s1185 + $0x108] sm:%s1177] %v1222
                %v1224 = vld [vmem:[%s1184 + $0x4c] sm:%s1177]
                %1225 = vst [vmem:[%s1185 + $0x10c] sm:%s1177] %v1224
                %v1226 = vld [vmem:[%s1184 + $0x50] sm:%s1177]
                %1227 = vst [vmem:[%s1185 + $0x110] sm:%s1177] %v1226
                %v1228 = vld [vmem:[%s1184 + $0x54] sm:%s1177]
                %1229 = vst [vmem:[%s1185 + $0x114] sm:%s1177] %v1228
                %v1230 = vld [vmem:[%s1184 + $0x58] sm:%s1177]
                %1231 = vst [vmem:[%s1185 + $0x118] sm:%s1177] %v1230
                %v1232 = vld [vmem:[%s1184 + $0x5c] sm:%s1177]
                %1233 = vst [vmem:[%s1185 + $0x11c] sm:%s1177] %v1232
                %v1234 = vld [vmem:[%s1184 + $0x60] sm:%s1177]
                %1235 = vst [vmem:[%s1185 + $0x120] sm:%s1177] %v1234
                %v1236 = vld [vmem:[%s1184 + $0x64] sm:%s1177]
                %1237 = vst [vmem:[%s1185 + $0x124] sm:%s1177] %v1236
                %v1238 = vld [vmem:[%s1184 + $0x68] sm:%s1177]
                %1239 = vst [vmem:[%s1185 + $0x128] sm:%s1177] %v1238
                %v1240 = vld [vmem:[%s1184 + $0x6c] sm:%s1177]
                %1241 = vst [vmem:[%s1185 + $0x12c] sm:%s1177] %v1240
                %v1242 = vld [vmem:[%s1184 + $0x70] sm:%s1177]
                %1243 = vst [vmem:[%s1185 + $0x130] sm:%s1177] %v1242
                %v1244 = vld [vmem:[%s1184 + $0x74] sm:%s1177]
                %1245 = vst [vmem:[%s1185 + $0x134] sm:%s1177] %v1244
                %v1246 = vld [vmem:[%s1184 + $0x78] sm:%s1177]
                %1247 = vst [vmem:[%s1185 + $0x138] sm:%s1177] %v1246
                %v1248 = vld [vmem:[%s1184 + $0x7c] sm:%s1177]
                %1249 = vst [vmem:[%s1185 + $0x13c] sm:%s1177] %v1248
              $region49: #{discriminator_forward.5} parent=43 // loop_footer
                %s1183 = sadd.s32 1, %s1179
              $region50: #{discriminator_forward.5} parent=43 // loop_footer_branch
                %1178 = sbr.rel target = $region46
              $region51: #{discriminator_forward.5} parent=43 // loop_exit
                _
            $region44: #{discriminator_forward.5} parent=35 // pred_fallthru
              _
          $region36: #{discriminator_forward.5} parent=31 // pred_fallthru
            _
          %1334 = vnop
        $region32: #{discriminator_forward.5} parent=23 // pred_fallthru
          _
      $region24: #{discriminator_forward.5} parent=5 // pred_fallthru
        _
      %p1335 = scmp.le.s32.totalorder 2, %s10
      // Predicated region
      $region70: #{discriminator_forward.5} parent=5 // pred_check
        %p1336 = pneg %p1335
      $region71: #{discriminator_forward.5} parent=5 // pred_check_branch
        %1338 = sbr.rel (%p1336) target = $region73
      $region72: #{discriminator_forward.5} parent=5 // pred_region
        %s1339 = ssub.s32 %s10, 2
        // Predicated region
        $region74: #{discriminator_forward.5} parent=72 // pred_check
          %p1340 = pneg %p81
        $region75: #{discriminator_forward.5} parent=72 // pred_check_branch
          %1342 = sbr.rel (%p1340) target = $region77
        $region76: #{discriminator_forward.5} parent=72 // pred_region
          %s1343 = sand.u32 %s66, 1
          %s1344 = sand.u32 %s66, 1
          %s1345 = smul.addr %s1344, 128
          %s1346 = scalar_lea.vmem [#allocation4], %s1345
        $region77: #{discriminator_forward.5} parent=72 // pred_fallthru
          _
      $region73: #{discriminator_forward.5} parent=5 // pred_fallthru
        _
    $region6: #{discriminator_forward.5} parent=1 // loop_footer
      %s14 = sadd.s32 1, %s10
    $region7: #{discriminator_forward.5} parent=1 // loop_footer_branch
      %9 = sbr.rel target = $region3
    $region8: #{discriminator_forward.5} parent=1 // loop_exit
      _
    %1347 = vsyncpa [#allocation3], 1
    %s1348 = scalar_lea.sflag [#allocation3], 1
    %1349 = vsyncpa %s1348, 1

// kernel: discriminator_forward.6
$region0: #{discriminator_forward.6}
  #allocation0 [shape = 'u32[]', space=smem, size = 0x4, offset = 0x4, fixed_abs, tag = 'smem constant byte address 0x4 - core index']
  #allocation1 [shape = 'u32[144,128]{1,0:T(1,128)}', space=vmem, size = 0x12000, scoped, tag = 'internal scratch']
  %s0 = inlined_call_operand.vmem [shape: bf16[8,64], index: 0, kind: input, shape index: {}]
  %s1 = inlined_call_operand.vmem [shape: bf16[64,8192], index: 1, kind: input, shape index: {}]
  %s2 = inlined_call_operand.vmem [shape: bf16[8,8192], index: 2, kind: output, shape index: {}]
  %s3 = sld [smem:[#allocation0]]
  $region64: #{discriminator_forward.6} parent=0
    _
  %s5 = ssub.s32 1, %s3
  %s6 = scalar_select 0, %s5, %s3
  $region1: #{discriminator_forward.6} parent=0
    #allocation2 [shape = 'u8[524288]{0}', space=vmem, size = 0x80000, scoped, tag = 'input window, operand 1']
    loop: start=0, step=1, limit=6
    $region2: #{discriminator_forward.6} parent=1 // loop_pre_header
      _
    $region3: #{discriminator_forward.6} parent=1 // loop_header
      %s8 = sphi 0, %s12
      %p9 = scmp.ge.s32.totalorder %s8, 6
      %s15 = sphi 0, %s27
      %s16 = sphi 0, %s23
      %s17 = sphi 0, %s15
      %s18 = sphi 0, %s16
      %s19 = sphi 0, %s17
      %s20 = sphi 0, %s18
      %s30 = sphi 0, %s32
      %s33 = sphi 0, %s30
      %s34 = sphi 0, %s33
      %s50 = sphi 0, %s34
      %s56 = sphi 0, %s58
      %s59 = sphi 0, %s56
      %s60 = sphi 0, %s59
      %s76 = sphi 0, %s60
      %s84 = sphi 0, %s86
      %s87 = sphi 0, %s84
      %s88 = sphi 0, %s87
      %s104 = sphi 0, %s88
    $region4: #{discriminator_forward.6} parent=1 // loop_header_branch
      %11 = sbr.rel (%p9) target = $region8
    $region5: #{discriminator_forward.6} parent=1 // loop_body
      %s13 = ssub.s32 %s8, 1
      %s14 = ssub.s32 %s8, 2
      %s21 = sadd.s32 1, %s16
      %p22 = scmp.ge.s32.totalorder %s21, 4
      %s23 = scalar_select %p22, 0, %s21
      %s24 = sadd.s32 1, %s15
      %s25 = scalar_select %p22, %s24, %s15
      %p26 = scmp.ge.s32.totalorder %s25, 1
      %s27 = scalar_select %p26, 0, %s25
      %s28 = ssub.s32 %s15, %s27
      %p29 = scmp.eq.s32.totalorder %s28, 0
      %s31 = sadd.s32 %s30, 1
      %s32 = scalar_select %p29, %s30, %s31
      %p35 = pneg %p29
      %p36 = scmp.eq.s32.totalorder %s8, 3
      %p37 = por %p35, %p36
      %p38 = scmp.ne.s32.totalorder %s30, %s33
      %p39 = scmp.eq.s32.totalorder %s8, 0
      %p40 = por %p38, %p39
      %p41 = scmp.ne.s32.totalorder %s30, %s33
      %p42 = scmp.eq.s32.totalorder %s13, 3
      %p43 = por %p41, %p42
      %p44 = scmp.ne.s32.totalorder %s33, %s34
      %p45 = scmp.eq.s32.totalorder %s13, 0
      %p46 = por %p44, %p45
      %p47 = scmp.ne.s32.totalorder %s33, %s34
      %p48 = scmp.eq.s32.totalorder %s14, 3
      %p49 = por %p47, %p48
      %p51 = scmp.ne.s32.totalorder %s34, %s50
      %p52 = scmp.eq.s32.totalorder %s14, 0
      %p53 = por %p51, %p52
      %s54 = ssub.s32 %s16, %s23
      %p55 = scmp.eq.s32.totalorder %s54, 0
      %s57 = sadd.s32 %s56, 1
      %s58 = scalar_select %p55, %s56, %s57
      %p61 = pneg %p55
      %p62 = scmp.eq.s32.totalorder %s8, 3
      %p63 = por %p61, %p62
      %p64 = scmp.ne.s32.totalorder %s56, %s59
      %p65 = scmp.eq.s32.totalorder %s8, 0
      %p66 = por %p64, %p65
      %p67 = scmp.ne.s32.totalorder %s56, %s59
      %p68 = scmp.eq.s32.totalorder %s13, 3
      %p69 = por %p67, %p68
      %p70 = scmp.ne.s32.totalorder %s59, %s60
      %p71 = scmp.eq.s32.totalorder %s13, 0
      %p72 = por %p70, %p71
      %p73 = scmp.ne.s32.totalorder %s59, %s60
      %p74 = scmp.eq.s32.totalorder %s14, 3
      %p75 = por %p73, %p74
      %p77 = scmp.ne.s32.totalorder %s60, %s76
      %p78 = scmp.eq.s32.totalorder %s14, 0
      %p79 = por %p77, %p78
      %s80 = ssub.s32 %s15, %s27
      %s81 = ssub.s32 %s16, %s23
      %s82 = sor.u32 %s80, %s81
      %p83 = scmp.eq.s32.totalorder %s82, 0
      %s85 = sadd.s32 %s84, 1
      %s86 = scalar_select %p83, %s84, %s85
      %p89 = pneg %p83
      %p90 = scmp.eq.s32.totalorder %s8, 3
      %p91 = por %p89, %p90
      %p92 = scmp.ne.s32.totalorder %s84, %s87
      %p93 = scmp.eq.s32.totalorder %s8, 0
      %p94 = por %p92, %p93
      %p95 = scmp.ne.s32.totalorder %s84, %s87
      %p96 = scmp.eq.s32.totalorder %s13, 3
      %p97 = por %p95, %p96
      %p98 = scmp.ne.s32.totalorder %s87, %s88
      %p99 = scmp.eq.s32.totalorder %s13, 0
      %p100 = por %p98, %p99
      %p101 = scmp.ne.s32.totalorder %s87, %s88
      %p102 = scmp.eq.s32.totalorder %s14, 3
      %p103 = por %p101, %p102
      %p105 = scmp.ne.s32.totalorder %s88, %s104
      %p106 = scmp.eq.s32.totalorder %s14, 0
      %p107 = por %p105, %p106
      %p108 = scmp.le.s32.totalorder 1, %s8
      %p109 = scmp.lt.s32.totalorder %s8, 5
      %p110 = pnand %p108, %p109
      %p111 = pneg %p110
      // Predicated region
      $region9: #{discriminator_forward.6} parent=5 // pred_check
        _
      $region10: #{discriminator_forward.6} parent=5 // pred_check_branch
        %113 = sbr.rel (%p110) target = $region12
      $region11: #{discriminator_forward.6} parent=5 // pred_region
        %s114 = ssub.s32 %s8, 1
        // Predicated region
        $region13: #{discriminator_forward.6} parent=11 // pred_check
          %p115 = pneg %p46
        $region14: #{discriminator_forward.6} parent=11 // pred_check_branch
          %117 = sbr.rel (%p115) target = $region16
        $region15: #{discriminator_forward.6} parent=11 // pred_region
          %p118 = scmp.lt.s32.totalorder %s17, 0
          %s119 = scalar_select %p118, %s17, 0
          %s120 = smul.addr %s119, 4
          %s121 = scalar_lea.vmem %s0, %s120
        $region16: #{discriminator_forward.6} parent=11 // pred_fallthru
          _
      $region12: #{discriminator_forward.6} parent=5 // pred_fallthru
        _
      %p122 = scmp.lt.s32.totalorder %s8, 4
      // Predicated region
      $region17: #{discriminator_forward.6} parent=5 // pred_check
        %p123 = pneg %p122
      $region18: #{discriminator_forward.6} parent=5 // pred_check_branch
        %125 = sbr.rel (%p123) target = $region20
      $region19: #{discriminator_forward.6} parent=5 // pred_region
        // Predicated region
        $region21: #{discriminator_forward.6} parent=19 // pred_check
          %p126 = pneg %p66
        $region22: #{discriminator_forward.6} parent=19 // pred_check_branch
          %128 = sbr.rel (%p126) target = $region24
        $region23: #{discriminator_forward.6} parent=19 // pred_region
          %s129 = sand.u32 %s56, 1
          %s130 = sand.u32 %s56, 1
          %s131 = smul.addr %s130, 512
          %s132 = scalar_lea.vmem [#allocation2], %s131
          %s133 = smul.u32 16, %s16
          %s134 = smul.addr %s133, 4
          %s135 = scalar_lea.vmem %s1, %s134
          // Predicated region
          $region25: #{discriminator_forward.6} parent=23 // pred_check
            _
          $region26: #{discriminator_forward.6} parent=23 // pred_check_branch
            %137 = sbr.rel (0) target = $region28
          $region27: #{discriminator_forward.6} parent=23 // pred_region
            // Predicated region
            $region29: #{discriminator_forward.6} parent=27 // pred_check
              _
            $region30: #{discriminator_forward.6} parent=27 // pred_check_branch
              %139 = sbr.rel (0) target = $region32
            $region31: #{discriminator_forward.6} parent=27 // pred_region
              loop: start=0, step=1, limit=1
              $region33: #{discriminator_forward.6} parent=31 // loop_pre_header
                _
              $region34: #{discriminator_forward.6} parent=31 // loop_header
                %s141 = sphi 0, %s145
                %p142 = scmp.ge.s32.totalorder %s141, 1
                %s146 = sphi %s135, %s135
                %s147 = sphi %s132, %s132
              $region35: #{discriminator_forward.6} parent=31 // loop_header_branch
                %144 = sbr.rel (%p142) target = $region39
              $region36: #{discriminator_forward.6} parent=31 // loop_body
                %v148 = vld [vmem:[%s146] sm:$0xff]
                %149 = vst [vmem:[%s147] sm:$0xff] %v148
                %v150 = vld [vmem:[%s146 + $0x8] sm:$0xff]
                %151 = vst [vmem:[%s147 + $0x8] sm:$0xff] %v150
                %v152 = vld [vmem:[%s146 + $0x10] sm:$0xff]
                %153 = vst [vmem:[%s147 + $0x10] sm:$0xff] %v152
                %v154 = vld [vmem:[%s146 + $0x18] sm:$0xff]
                %155 = vst [vmem:[%s147 + $0x18] sm:$0xff] %v154
                %v156 = vld [vmem:[%s146 + $0x20] sm:$0xff]
                %157 = vst [vmem:[%s147 + $0x20] sm:$0xff] %v156
                %v158 = vld [vmem:[%s146 + $0x28] sm:$0xff]
                %159 = vst [vmem:[%s147 + $0x28] sm:$0xff] %v158
                %v160 = vld [vmem:[%s146 + $0x30] sm:$0xff]
                %161 = vst [vmem:[%s147 + $0x30] sm:$0xff] %v160
                %v162 = vld [vmem:[%s146 + $0x38] sm:$0xff]
                %163 = vst [vmem:[%s147 + $0x38] sm:$0xff] %v162
                %v164 = vld [vmem:[%s146 + $0x100] sm:$0xff]
                %165 = vst [vmem:[%s147 + $0x40] sm:$0xff] %v164
                %v166 = vld [vmem:[%s146 + $0x108] sm:$0xff]
                %167 = vst [vmem:[%s147 + $0x48] sm:$0xff] %v166
                %v168 = vld [vmem:[%s146 + $0x110] sm:$0xff]
                %169 = vst [vmem:[%s147 + $0x50] sm:$0xff] %v168
                %v170 = vld [vmem:[%s146 + $0x118] sm:$0xff]
                %171 = vst [vmem:[%s147 + $0x58] sm:$0xff] %v170
                %v172 = vld [vmem:[%s146 + $0x120] sm:$0xff]
                %173 = vst [vmem:[%s147 + $0x60] sm:$0xff] %v172
                %v174 = vld [vmem:[%s146 + $0x128] sm:$0xff]
                %175 = vst [vmem:[%s147 + $0x68] sm:$0xff] %v174
                %v176 = vld [vmem:[%s146 + $0x130] sm:$0xff]
                %177 = vst [vmem:[%s147 + $0x70] sm:$0xff] %v176
                %v178 = vld [vmem:[%s146 + $0x138] sm:$0xff]
                %179 = vst [vmem:[%s147 + $0x78] sm:$0xff] %v178
                %v180 = vld [vmem:[%s146 + $0x200] sm:$0xff]
                %181 = vst [vmem:[%s147 + $0x80] sm:$0xff] %v180
                %v182 = vld [vmem:[%s146 + $0x208] sm:$0xff]
                %183 = vst [vmem:[%s147 + $0x88] sm:$0xff] %v182
                %v184 = vld [vmem:[%s146 + $0x210] sm:$0xff]
                %185 = vst [vmem:[%s147 + $0x90] sm:$0xff] %v184
                %v186 = vld [vmem:[%s146 + $0x218] sm:$0xff]
                %187 = vst [vmem:[%s147 + $0x98] sm:$0xff] %v186
                %v188 = vld [vmem:[%s146 + $0x220] sm:$0xff]
                %189 = vst [vmem:[%s147 + $0xa0] sm:$0xff] %v188
                %v190 = vld [vmem:[%s146 + $0x228] sm:$0xff]
                %191 = vst [vmem:[%s147 + $0xa8] sm:$0xff] %v190
                %v192 = vld [vmem:[%s146 + $0x230] sm:$0xff]
                %193 = vst [vmem:[%s147 + $0xb0] sm:$0xff] %v192
                %v194 = vld [vmem:[%s146 + $0x238] sm:$0xff]
                %195 = vst [vmem:[%s147 + $0xb8] sm:$0xff] %v194
                %v196 = vld [vmem:[%s146 + $0x300] sm:$0xff]
                %197 = vst [vmem:[%s147 + $0xc0] sm:$0xff] %v196
                %v198 = vld [vmem:[%s146 + $0x308] sm:$0xff]
                %199 = vst [vmem:[%s147 + $0xc8] sm:$0xff] %v198
                %v200 = vld [vmem:[%s146 + $0x310] sm:$0xff]
                %201 = vst [vmem:[%s147 + $0xd0] sm:$0xff] %v200
                %v202 = vld [vmem:[%s146 + $0x318] sm:$0xff]
                %203 = vst [vmem:[%s147 + $0xd8] sm:$0xff] %v202
                %v204 = vld [vmem:[%s146 + $0x320] sm:$0xff]
                %205 = vst [vmem:[%s147 + $0xe0] sm:$0xff] %v204
                %v206 = vld [vmem:[%s146 + $0x328] sm:$0xff]
                %207 = vst [vmem:[%s147 + $0xe8] sm:$0xff] %v206
                %v208 = vld [vmem:[%s146 + $0x330] sm:$0xff]
                %209 = vst [vmem:[%s147 + $0xf0] sm:$0xff] %v208
                %v210 = vld [vmem:[%s146 + $0x338] sm:$0xff]
                %211 = vst [vmem:[%s147 + $0xf8] sm:$0xff] %v210
                %v212 = vld [vmem:[%s146 + $0x400] sm:$0xff]
                %213 = vst [vmem:[%s147 + $0x100] sm:$0xff] %v212
                %v214 = vld [vmem:[%s146 + $0x408] sm:$0xff]
                %215 = vst [vmem:[%s147 + $0x108] sm:$0xff] %v214
                %v216 = vld [vmem:[%s146 + $0x410] sm:$0xff]
                %217 = vst [vmem:[%s147 + $0x110] sm:$0xff] %v216
                %v218 = vld [vmem:[%s146 + $0x418] sm:$0xff]
                %219 = vst [vmem:[%s147 + $0x118] sm:$0xff] %v218
                %v220 = vld [vmem:[%s146 + $0x420] sm:$0xff]
                %221 = vst [vmem:[%s147 + $0x120] sm:$0xff] %v220
                %v222 = vld [vmem:[%s146 + $0x428] sm:$0xff]
                %223 = vst [vmem:[%s147 + $0x128] sm:$0xff] %v222
                %v224 = vld [vmem:[%s146 + $0x430] sm:$0xff]
                %225 = vst [vmem:[%s147 + $0x130] sm:$0xff] %v224
                %v226 = vld [vmem:[%s146 + $0x438] sm:$0xff]
                %227 = vst [vmem:[%s147 + $0x138] sm:$0xff] %v226
                %v228 = vld [vmem:[%s146 + $0x500] sm:$0xff]
                %229 = vst [vmem:[%s147 + $0x140] sm:$0xff] %v228
                %v230 = vld [vmem:[%s146 + $0x508] sm:$0xff]
                %231 = vst [vmem:[%s147 + $0x148] sm:$0xff] %v230
                %v232 = vld [vmem:[%s146 + $0x510] sm:$0xff]
                %233 = vst [vmem:[%s147 + $0x150] sm:$0xff] %v232
                %v234 = vld [vmem:[%s146 + $0x518] sm:$0xff]
                %235 = vst [vmem:[%s147 + $0x158] sm:$0xff] %v234
                %v236 = vld [vmem:[%s146 + $0x520] sm:$0xff]
                %237 = vst [vmem:[%s147 + $0x160] sm:$0xff] %v236
                %v238 = vld [vmem:[%s146 + $0x528] sm:$0xff]
                %239 = vst [vmem:[%s147 + $0x168] sm:$0xff] %v238
                %v240 = vld [vmem:[%s146 + $0x530] sm:$0xff]
                %241 = vst [vmem:[%s147 + $0x170] sm:$0xff] %v240
                %v242 = vld [vmem:[%s146 + $0x538] sm:$0xff]
                %243 = vst [vmem:[%s147 + $0x178] sm:$0xff] %v242
                %v244 = vld [vmem:[%s146 + $0x600] sm:$0xff]
                %245 = vst [vmem:[%s147 + $0x180] sm:$0xff] %v244
                %v246 = vld [vmem:[%s146 + $0x608] sm:$0xff]
                %247 = vst [vmem:[%s147 + $0x188] sm:$0xff] %v246
                %v248 = vld [vmem:[%s146 + $0x610] sm:$0xff]
                %249 = vst [vmem:[%s147 + $0x190] sm:$0xff] %v248
                %v250 = vld [vmem:[%s146 + $0x618] sm:$0xff]
                %251 = vst [vmem:[%s147 + $0x198] sm:$0xff] %v250
                %v252 = vld [vmem:[%s146 + $0x620] sm:$0xff]
                %253 = vst [vmem:[%s147 + $0x1a0] sm:$0xff] %v252
                %v254 = vld [vmem:[%s146 + $0x628] sm:$0xff]
                %255 = vst [vmem:[%s147 + $0x1a8] sm:$0xff] %v254
                %v256 = vld [vmem:[%s146 + $0x630] sm:$0xff]
                %257 = vst [vmem:[%s147 + $0x1b0] sm:$0xff] %v256
                %v258 = vld [vmem:[%s146 + $0x638] sm:$0xff]
                %259 = vst [vmem:[%s147 + $0x1b8] sm:$0xff] %v258
                %v260 = vld [vmem:[%s146 + $0x700] sm:$0xff]
                %261 = vst [vmem:[%s147 + $0x1c0] sm:$0xff] %v260
                %v262 = vld [vmem:[%s146 + $0x708] sm:$0xff]
                %263 = vst [vmem:[%s147 + $0x1c8] sm:$0xff] %v262
                %v264 = vld [vmem:[%s146 + $0x710] sm:$0xff]
                %265 = vst [vmem:[%s147 + $0x1d0] sm:$0xff] %v264
                %v266 = vld [vmem:[%s146 + $0x718] sm:$0xff]
                %267 = vst [vmem:[%s147 + $0x1d8] sm:$0xff] %v266
                %v268 = vld [vmem:[%s146 + $0x720] sm:$0xff]
                %269 = vst [vmem:[%s147 + $0x1e0] sm:$0xff] %v268
                %v270 = vld [vmem:[%s146 + $0x728] sm:$0xff]
                %271 = vst [vmem:[%s147 + $0x1e8] sm:$0xff] %v270
                %v272 = vld [vmem:[%s146 + $0x730] sm:$0xff]
                %273 = vst [vmem:[%s147 + $0x1f0] sm:$0xff] %v272
                %v274 = vld [vmem:[%s146 + $0x738] sm:$0xff]
                %275 = vst [vmem:[%s147 + $0x1f8] sm:$0xff] %v274
              $region37: #{discriminator_forward.6} parent=31 // loop_footer
                %s145 = sadd.s32 1, %s141
              $region38: #{discriminator_forward.6} parent=31 // loop_footer_branch
                %140 = sbr.rel target = $region34
              $region39: #{discriminator_forward.6} parent=31 // loop_exit
                _
            $region32: #{discriminator_forward.6} parent=27 // pred_fallthru
              _
            // Predicated region
            $region40: #{discriminator_forward.6} parent=27 // pred_check
              _
            $region41: #{discriminator_forward.6} parent=27 // pred_check_branch
              %277 = sbr.rel target = $region43
            $region42: #{discriminator_forward.6} parent=27 // pred_region
              _
            $region43: #{discriminator_forward.6} parent=27 // pred_fallthru
              _
          $region28: #{discriminator_forward.6} parent=23 // pred_fallthru
            _
          %278 = vnop
        $region24: #{discriminator_forward.6} parent=19 // pred_fallthru
          _
      $region20: #{discriminator_forward.6} parent=5 // pred_fallthru
        _
      %p279 = scmp.le.s32.totalorder 1, %s8
      %p280 = scmp.lt.s32.totalorder %s8, 5
      %p281 = pnand %p279, %p280
      %p282 = pneg %p281
      // Predicated region
      $region44: #{discriminator_forward.6} parent=5 // pred_check
        _
      $region45: #{discriminator_forward.6} parent=5 // pred_check_branch
        %284 = sbr.rel (%p281) target = $region47
      $region46: #{discriminator_forward.6} parent=5 // pred_region
        %s285 = ssub.s32 %s8, 1
        %s286 = sand.u32 %s59, 1
        %s287 = sand.u32 %s59, 1
        %s288 = smul.addr %s287, 512
        %s289 = scalar_lea.vmem [#allocation2], %s288
        // Predicated region
        $region48: #{discriminator_forward.6} parent=46 // pred_check
          %p290 = pneg %p72
        $region49: #{discriminator_forward.6} parent=46 // pred_check_branch
          %292 = sbr.rel (%p290) target = $region51
        $region50: #{discriminator_forward.6} parent=46 // pred_region
          _
        $region51: #{discriminator_forward.6} parent=46 // pred_fallthru
          _
        %p293 = scmp.lt.s32.totalorder %s17, 0
        %s294 = scalar_select %p293, %s17, 0
        %s295 = smul.addr %s294, 4
        %s296 = scalar_lea.vmem %s0, %s295
        %p297 = pneg %p46
        %p298 = pneg %p43
        %s299 = sand.u32 %s59, 1
        %s300 = sand.u32 %s59, 1
        %s301 = smul.addr %s300, 512
        %s302 = scalar_lea.vmem [#allocation2], %s301
        %p303 = pneg %p72
        %p304 = pneg %p69
        %p305 = pneg %p100
        %p306 = pneg %p97
        %s307 = smul.u32 16, %s18
        %p308 = scmp.lt.s32.totalorder %s17, 0
        %s309 = scalar_select %p308, %s17, 0
        %p310 = scmp.lt.s32.totalorder %s307, 63
        %s311 = scalar_select %p310, %s307, 63
        %s312 = smul.addr %s309, 64
        %s313 = sadd.s32 %s311, %s312
        %s314 = smul.addr %s313, 4
        %s315 = scalar_lea.vmem %s2, %s314
        %p316 = scmp.lt.s32.totalorder %s17, 0
        %s317 = scalar_select %p316, %s17, 0
        %s318 = smul.addr %s317, 4
        %s319 = scalar_lea.vmem %s0, %s318
        %s320 = smul.u32 16, %s18
        %s321 = smul.u32 16, %s18
        %p322 = scmp.lt.s32.totalorder %s17, 0
        %s323 = scalar_select %p322, %s17, 0
        %p324 = scmp.lt.s32.totalorder %s321, 63
        %s325 = scalar_select %p324, %s321, 63
        %s326 = smul.addr %s323, 64
        %s327 = sadd.s32 %s325, %s326
        %s328 = smul.addr %s327, 4
        %s329 = scalar_lea.vmem %s2, %s328
        %s330 = smul.u32 16, %s18
        %v332 = vld [vmem:[%s319] sm:$0xf]
        %v333 = vld [vmem:[%s289] sm:$0xff]
        %v334 = vld [vmem:[%s289 + $0x8] sm:$0xff]
        %v335 = vld [vmem:[%s289 + $0x10] sm:$0xff]
        %v336 = vld [vmem:[%s289 + $0x18] sm:$0xff]
        %v337 = vld [vmem:[%s289 + $0x20] sm:$0xff]
        %v338 = vld [vmem:[%s289 + $0x28] sm:$0xff]
        %v339 = vld [vmem:[%s289 + $0x30] sm:$0xff]
        %v340 = vld [vmem:[%s289 + $0x38] sm:$0xff]
        %v341 = vld [vmem:[%s289 + $0x40] sm:$0xff]
        %v342 = vld [vmem:[%s289 + $0x48] sm:$0xff]
        %v343 = vld [vmem:[%s289 + $0x50] sm:$0xff]
        %v344 = vld [vmem:[%s289 + $0x58] sm:$0xff]
        %v345 = vld [vmem:[%s289 + $0x60] sm:$0xff]
        %v346 = vld [vmem:[%s289 + $0x68] sm:$0xff]
        %v347 = vld [vmem:[%s289 + $0x70] sm:$0xff]
        %v348 = vld [vmem:[%s289 + $0x78] sm:$0xff]
        %v349 = vld [vmem:[%s289 + $0x80] sm:$0xff]
        %v350 = vld [vmem:[%s289 + $0x88] sm:$0xff]
        %v351 = vld [vmem:[%s289 + $0x90] sm:$0xff]
        %v352 = vld [vmem:[%s289 + $0x98] sm:$0xff]
        %v353 = vld [vmem:[%s289 + $0xa0] sm:$0xff]
        %v354 = vld [vmem:[%s289 + $0xa8] sm:$0xff]
        %v355 = vld [vmem:[%s289 + $0xb0] sm:$0xff]
        %v356 = vld [vmem:[%s289 + $0xb8] sm:$0xff]
        %v357 = vld [vmem:[%s289 + $0xc0] sm:$0xff]
        %v358 = vld [vmem:[%s289 + $0xc8] sm:$0xff]
        %v359 = vld [vmem:[%s289 + $0xd0] sm:$0xff]
        %v360 = vld [vmem:[%s289 + $0xd8] sm:$0xff]
        %v361 = vld [vmem:[%s289 + $0xe0] sm:$0xff]
        %v362 = vld [vmem:[%s289 + $0xe8] sm:$0xff]
        %v363 = vld [vmem:[%s289 + $0xf0] sm:$0xff]
        %v364 = vld [vmem:[%s289 + $0xf8] sm:$0xff]
        %v365 = vld [vmem:[%s289 + $0x100] sm:$0xff]
        %v366 = vld [vmem:[%s289 + $0x108] sm:$0xff]
        %v367 = vld [vmem:[%s289 + $0x110] sm:$0xff]
        %v368 = vld [vmem:[%s289 + $0x118] sm:$0xff]
        %v369 = vld [vmem:[%s289 + $0x120] sm:$0xff]
        %v370 = vld [vmem:[%s289 + $0x128] sm:$0xff]
        %v371 = vld [vmem:[%s289 + $0x130] sm:$0xff]
        %v372 = vld [vmem:[%s289 + $0x138] sm:$0xff]
        %v373 = vld [vmem:[%s289 + $0x140] sm:$0xff]
        %v374 = vld [vmem:[%s289 + $0x148] sm:$0xff]
        %v375 = vld [vmem:[%s289 + $0x150] sm:$0xff]
        %v376 = vld [vmem:[%s289 + $0x158] sm:$0xff]
        %v377 = vld [vmem:[%s289 + $0x160] sm:$0xff]
        %v378 = vld [vmem:[%s289 + $0x168] sm:$0xff]
        %v379 = vld [vmem:[%s289 + $0x170] sm:$0xff]
        %v380 = vld [vmem:[%s289 + $0x178] sm:$0xff]
        %v381 = vld [vmem:[%s289 + $0x180] sm:$0xff]
        %v382 = vld [vmem:[%s289 + $0x188] sm:$0xff]
        %v383 = vld [vmem:[%s289 + $0x190] sm:$0xff]
        %v384 = vld [vmem:[%s289 + $0x198] sm:$0xff]
        %v385 = vld [vmem:[%s289 + $0x1a0] sm:$0xff]
        %v386 = vld [vmem:[%s289 + $0x1a8] sm:$0xff]
        %v387 = vld [vmem:[%s289 + $0x1b0] sm:$0xff]
        %v388 = vld [vmem:[%s289 + $0x1b8] sm:$0xff]
        %v389 = vld [vmem:[%s289 + $0x1c0] sm:$0xff]
        %v390 = vld [vmem:[%s289 + $0x1c8] sm:$0xff]
        %v391 = vld [vmem:[%s289 + $0x1d0] sm:$0xff]
        %v392 = vld [vmem:[%s289 + $0x1d8] sm:$0xff]
        %v393 = vld [vmem:[%s289 + $0x1e0] sm:$0xff]
        %v394 = vld [vmem:[%s289 + $0x1e8] sm:$0xff]
        %v395 = vld [vmem:[%s289 + $0x1f0] sm:$0xff]
        %v396 = vld [vmem:[%s289 + $0x1f8] sm:$0xff]
        %v461 = vunpack.c.l.b16 %v333
        %v462 = vunpack.c.h.b16 %v333
        %v463 = vunpack.c.l.b16 %v334
        %v464 = vunpack.c.h.b16 %v334
        %v465 = vunpack.c.l.b16 %v335
        %v466 = vunpack.c.h.b16 %v335
        %v467 = vunpack.c.l.b16 %v336
        %v468 = vunpack.c.h.b16 %v336
        %v469 = vunpack.c.l.b16 %v337
        %v470 = vunpack.c.h.b16 %v337
        %v471 = vunpack.c.l.b16 %v338
        %v472 = vunpack.c.h.b16 %v338
        %v473 = vunpack.c.l.b16 %v339
        %v474 = vunpack.c.h.b16 %v339
        %v475 = vunpack.c.l.b16 %v340
        %v476 = vunpack.c.h.b16 %v340
        %v477 = vunpack.c.l.b16 %v341
        %v478 = vunpack.c.h.b16 %v341
        %v479 = vunpack.c.l.b16 %v342
        %v480 = vunpack.c.h.b16 %v342
        %v481 = vunpack.c.l.b16 %v343
        %v482 = vunpack.c.h.b16 %v343
        %v483 = vunpack.c.l.b16 %v344
        %v484 = vunpack.c.h.b16 %v344
        %v485 = vunpack.c.l.b16 %v345
        %v486 = vunpack.c.h.b16 %v345
        %v487 = vunpack.c.l.b16 %v346
        %v488 = vunpack.c.h.b16 %v346
        %v489 = vunpack.c.l.b16 %v347
        %v490 = vunpack.c.h.b16 %v347
        %v491 = vunpack.c.l.b16 %v348
        %v492 = vunpack.c.h.b16 %v348
        %v493 = vunpack.c.l.b16 %v349
        %v494 = vunpack.c.h.b16 %v349
        %v495 = vunpack.c.l.b16 %v350
        %v496 = vunpack.c.h.b16 %v350
        %v497 = vunpack.c.l.b16 %v351
        %v498 = vunpack.c.h.b16 %v351
        %v499 = vunpack.c.l.b16 %v352
        %v500 = vunpack.c.h.b16 %v352
        %v501 = vunpack.c.l.b16 %v353
        %v502 = vunpack.c.h.b16 %v353
        %v503 = vunpack.c.l.b16 %v354
        %v504 = vunpack.c.h.b16 %v354
        %v505 = vunpack.c.l.b16 %v355
        %v506 = vunpack.c.h.b16 %v355
        %v507 = vunpack.c.l.b16 %v356
        %v508 = vunpack.c.h.b16 %v356
        %v509 = vunpack.c.l.b16 %v357
        %v510 = vunpack.c.h.b16 %v357
        %v511 = vunpack.c.l.b16 %v358
        %v512 = vunpack.c.h.b16 %v358
        %v513 = vunpack.c.l.b16 %v359
        %v514 = vunpack.c.h.b16 %v359
        %v515 = vunpack.c.l.b16 %v360
        %v516 = vunpack.c.h.b16 %v360
        %v517 = vunpack.c.l.b16 %v361
        %v518 = vunpack.c.h.b16 %v361
        %v519 = vunpack.c.l.b16 %v362
        %v520 = vunpack.c.h.b16 %v362
        %v521 = vunpack.c.l.b16 %v363
        %v522 = vunpack.c.h.b16 %v363
        %v523 = vunpack.c.l.b16 %v364
        %v524 = vunpack.c.h.b16 %v364
        %v525 = vunpack.c.l.b16 %v365
        %v526 = vunpack.c.h.b16 %v365
        %v527 = vunpack.c.l.b16 %v366
        %v528 = vunpack.c.h.b16 %v366
        %v529 = vunpack.c.l.b16 %v367
        %v530 = vunpack.c.h.b16 %v367
        %v531 = vunpack.c.l.b16 %v368
        %v532 = vunpack.c.h.b16 %v368
        %v533 = vunpack.c.l.b16 %v369
        %v534 = vunpack.c.h.b16 %v369
        %v535 = vunpack.c.l.b16 %v370
        %v536 = vunpack.c.h.b16 %v370
        %v537 = vunpack.c.l.b16 %v371
        %v538 = vunpack.c.h.b16 %v371
        %v539 = vunpack.c.l.b16 %v372
        %v540 = vunpack.c.h.b16 %v372
        %v541 = vunpack.c.l.b16 %v373
        %v542 = vunpack.c.h.b16 %v373
        %v543 = vunpack.c.l.b16 %v374
        %v544 = vunpack.c.h.b16 %v374
        %v545 = vunpack.c.l.b16 %v375
        %v546 = vunpack.c.h.b16 %v375
        %v547 = vunpack.c.l.b16 %v376
        %v548 = vunpack.c.h.b16 %v376
        %v549 = vunpack.c.l.b16 %v377
        %v550 = vunpack.c.h.b16 %v377
        %v551 = vunpack.c.l.b16 %v378
        %v552 = vunpack.c.h.b16 %v378
        %v553 = vunpack.c.l.b16 %v379
        %v554 = vunpack.c.h.b16 %v379
        %v555 = vunpack.c.l.b16 %v380
        %v556 = vunpack.c.h.b16 %v380
        %v557 = vunpack.c.l.b16 %v381
        %v558 = vunpack.c.h.b16 %v381
        %v559 = vunpack.c.l.b16 %v382
        %v560 = vunpack.c.h.b16 %v382
        %v561 = vunpack.c.l.b16 %v383
        %v562 = vunpack.c.h.b16 %v383
        %v563 = vunpack.c.l.b16 %v384
        %v564 = vunpack.c.h.b16 %v384
        %v565 = vunpack.c.l.b16 %v385
        %v566 = vunpack.c.h.b16 %v385
        %v567 = vunpack.c.l.b16 %v386
        %v568 = vunpack.c.h.b16 %v386
        %v569 = vunpack.c.l.b16 %v387
        %v570 = vunpack.c.h.b16 %v387
        %v571 = vunpack.c.l.b16 %v388
        %v572 = vunpack.c.h.b16 %v388
        %v573 = vunpack.c.l.b16 %v389
        %v574 = vunpack.c.h.b16 %v389
        %v575 = vunpack.c.l.b16 %v390
        %v576 = vunpack.c.h.b16 %v390
        %v577 = vunpack.c.l.b16 %v391
        %v578 = vunpack.c.h.b16 %v391
        %v579 = vunpack.c.l.b16 %v392
        %v580 = vunpack.c.h.b16 %v392
        %v581 = vunpack.c.l.b16 %v393
        %v582 = vunpack.c.h.b16 %v393
        %v583 = vunpack.c.l.b16 %v394
        %v584 = vunpack.c.h.b16 %v394
        %v585 = vunpack.c.l.b16 %v395
        %v586 = vunpack.c.h.b16 %v395
        %v587 = vunpack.c.l.b16 %v396
        %v588 = vunpack.c.h.b16 %v396
        %v589 = vpack.c.b16 %v477, %v461
        %v590 = vpack.c.b16 %v478, %v462
        %v591 = vpack.c.b16 %v479, %v463
        %v592 = vpack.c.b16 %v480, %v464
        %v593 = vpack.c.b16 %v481, %v465
        %v594 = vpack.c.b16 %v482, %v466
        %v595 = vpack.c.b16 %v483, %v467
        %v596 = vpack.c.b16 %v484, %v468
        %v597 = vpack.c.b16 %v485, %v469
        %v598 = vpack.c.b16 %v486, %v470
        %v599 = vpack.c.b16 %v487, %v471
        %v600 = vpack.c.b16 %v488, %v472
        %v601 = vpack.c.b16 %v489, %v473
        %v602 = vpack.c.b16 %v490, %v474
        %v603 = vpack.c.b16 %v491, %v475
        %v604 = vpack.c.b16 %v492, %v476
        %v605 = vpack.c.b16 %v509, %v493
        %v606 = vpack.c.b16 %v510, %v494
        %v607 = vpack.c.b16 %v511, %v495
        %v608 = vpack.c.b16 %v512, %v496
        %v609 = vpack.c.b16 %v513, %v497
        %v610 = vpack.c.b16 %v514, %v498
        %v611 = vpack.c.b16 %v515, %v499
        %v612 = vpack.c.b16 %v516, %v500
        %v613 = vpack.c.b16 %v517, %v501
        %v614 = vpack.c.b16 %v518, %v502
        %v615 = vpack.c.b16 %v519, %v503
        %v616 = vpack.c.b16 %v520, %v504
        %v617 = vpack.c.b16 %v521, %v505
        %v618 = vpack.c.b16 %v522, %v506
        %v619 = vpack.c.b16 %v523, %v507
        %v620 = vpack.c.b16 %v524, %v508
        %v621 = vpack.c.b16 %v541, %v525
        %v622 = vpack.c.b16 %v542, %v526
        %v623 = vpack.c.b16 %v543, %v527
        %v624 = vpack.c.b16 %v544, %v528
        %v625 = vpack.c.b16 %v545, %v529
        %v626 = vpack.c.b16 %v546, %v530
        %v627 = vpack.c.b16 %v547, %v531
        %v628 = vpack.c.b16 %v548, %v532
        %v629 = vpack.c.b16 %v549, %v533
        %v630 = vpack.c.b16 %v550, %v534
        %v631 = vpack.c.b16 %v551, %v535
        %v632 = vpack.c.b16 %v552, %v536
        %v633 = vpack.c.b16 %v553, %v537
        %v634 = vpack.c.b16 %v554, %v538
        %v635 = vpack.c.b16 %v555, %v539
        %v636 = vpack.c.b16 %v556, %v540
        %v637 = vpack.c.b16 %v573, %v557
        %v638 = vpack.c.b16 %v574, %v558
        %v639 = vpack.c.b16 %v575, %v559
        %v640 = vpack.c.b16 %v576, %v560
        %v641 = vpack.c.b16 %v577, %v561
        %v642 = vpack.c.b16 %v578, %v562
        %v643 = vpack.c.b16 %v579, %v563
        %v644 = vpack.c.b16 %v580, %v564
        %v645 = vpack.c.b16 %v581, %v565
        %v646 = vpack.c.b16 %v582, %v566
        %v647 = vpack.c.b16 %v583, %v567
        %v648 = vpack.c.b16 %v584, %v568
        %v649 = vpack.c.b16 %v585, %v569
        %v650 = vpack.c.b16 %v586, %v570
        %v651 = vpack.c.b16 %v587, %v571
        %v652 = vpack.c.b16 %v588, %v572
        %vm717 = vcmask 523264
        %v719 = vsel %vm717, %v332, 0
        %721 = vmatprep.subr.bf16.mxu0 0
        %722 = vmatpush1.bf16.msra.mxu0 0
        %723 = vmatprep.subr.bf16.mxu0 0
        %724 = vmatpush1.bf16.msra.mxu0 0
        %725 = vmatprep.subr.bf16.mxu0 0
        %726 = vmatpush1.bf16.msra.mxu0 0
        %727 = vmatprep.subr.bf16.mxu0 0
        %728 = vmatpush1.bf16.msra.mxu0 0
        %729 = vmatprep.subr.bf16.mxu0 %v638
        %730 = vmatpush1.bf16.msra.mxu0 %v637
        %731 = vmatprep.subr.bf16.mxu0 %v622
        %732 = vmatpush1.bf16.msra.mxu0 %v621
        %733 = vmatprep.subr.bf16.mxu0 %v606
        %734 = vmatpush1.bf16.msra.mxu0 %v605
        %735 = vmatprep.subr.bf16.mxu0 %v590
        %736 = vmatpush1.bf16.msra.mxu0 %v589
        %737 = vmatprep.subr.bf16.mxu0 0
        %738 = vmatpush2.bf16.msra.mxu0 0
        %739 = vmatprep.subr.bf16.mxu0 0
        %740 = vmatpush2.bf16.msra.mxu0 0
        %741 = vmatprep.subr.bf16.mxu0 0
        %742 = vmatpush2.bf16.msra.mxu0 0
        %743 = vmatprep.subr.bf16.mxu0 0
        %744 = vmatpush2.bf16.msra.mxu0 0
        %745 = vmatprep.subr.bf16.mxu0 0
        %746 = vmatpush2.bf16.msra.mxu0 0
        %747 = vmatprep.subr.bf16.mxu0 0
        %748 = vmatpush2.bf16.msra.mxu0 0
        %749 = vmatprep.subr.bf16.mxu0 0
        %750 = vmatpush2.bf16.msra.mxu0 0
        %751 = vmatprep.subr.bf16.mxu0 0
        %752 = vmatpush2.bf16.msra.mxu0 0
        %753 = vmatprep.mubr.bf16.mxu0 0
        %754 = vmatmul.mubr.bf16.gmra.mxu0 %v719
        %v755 = vpop.f32.mrf.mxu0
        %v756 = vadd.f32 0.0, %v755
        %v757 = vpop.f32.mrf.mxu0
        %v758 = vadd.f32 0.0, %v757
        %v759 = vpop.f32.mrf.mxu0
        %v760 = vpop.f32.mrf.mxu0
        %761 = vdwg.mxu0
        %762 = vmatprep.subr.bf16.mxu0 0
        %763 = vmatpush1.bf16.msra.mxu0 0
        %764 = vmatprep.subr.bf16.mxu0 0
        %765 = vmatpush1.bf16.msra.mxu0 0
        %766 = vmatprep.subr.bf16.mxu0 0
        %767 = vmatpush1.bf16.msra.mxu0 0
        %768 = vmatprep.subr.bf16.mxu0 0
        %769 = vmatpush1.bf16.msra.mxu0 0
        %770 = vmatprep.subr.bf16.mxu0 %v640
        %771 = vmatpush1.bf16.msra.mxu0 %v639
        %772 = vmatprep.subr.bf16.mxu0 %v624
        %773 = vmatpush1.bf16.msra.mxu0 %v623
        %774 = vmatprep.subr.bf16.mxu0 %v608
        %775 = vmatpush1.bf16.msra.mxu0 %v607
        %776 = vmatprep.subr.bf16.mxu0 %v592
        %777 = vmatpush1.bf16.msra.mxu0 %v591
        %778 = vmatprep.subr.bf16.mxu0 0
        %779 = vmatpush2.bf16.msra.mxu0 0
        %780 = vmatprep.subr.bf16.mxu0 0
        %781 = vmatpush2.bf16.msra.mxu0 0
        %782 = vmatprep.subr.bf16.mxu0 0
        %783 = vmatpush2.bf16.msra.mxu0 0
        %784 = vmatprep.subr.bf16.mxu0 0
        %785 = vmatpush2.bf16.msra.mxu0 0
        %786 = vmatprep.subr.bf16.mxu0 0
        %787 = vmatpush2.bf16.msra.mxu0 0
        %788 = vmatprep.subr.bf16.mxu0 0
        %789 = vmatpush2.bf16.msra.mxu0 0
        %790 = vmatprep.subr.bf16.mxu0 0
        %791 = vmatpush2.bf16.msra.mxu0 0
        %792 = vmatprep.subr.bf16.mxu0 0
        %793 = vmatpush2.bf16.msra.mxu0 0
        %794 = vmatprep.mubr.bf16.mxu0 0
        %795 = vmatmul.mubr.bf16.gmra.mxu0 %v719
        %v796 = vpop.f32.mrf.mxu0
        %v797 = vadd.f32 0.0, %v796
        %v798 = vpop.f32.mrf.mxu0
        %v799 = vadd.f32 0.0, %v798
        %v800 = vpop.f32.mrf.mxu0
        %v801 = vpop.f32.mrf.mxu0
        %802 = vdwg.mxu0
        %803 = vmatprep.subr.bf16.mxu0 0
        %804 = vmatpush1.bf16.msra.mxu0 0
        %805 = vmatprep.subr.bf16.mxu0 0
        %806 = vmatpush1.bf16.msra.mxu0 0
        %807 = vmatprep.subr.bf16.mxu0 0
        %808 = vmatpush1.bf16.msra.mxu0 0
        %809 = vmatprep.subr.bf16.mxu0 0
        %810 = vmatpush1.bf16.msra.mxu0 0
        %811 = vmatprep.subr.bf16.mxu0 %v642
        %812 = vmatpush1.bf16.msra.mxu0 %v641
        %813 = vmatprep.subr.bf16.mxu0 %v626
        %814 = vmatpush1.bf16.msra.mxu0 %v625
        %815 = vmatprep.subr.bf16.mxu0 %v610
        %816 = vmatpush1.bf16.msra.mxu0 %v609
        %817 = vmatprep.subr.bf16.mxu0 %v594
        %818 = vmatpush1.bf16.msra.mxu0 %v593
        %819 = vmatprep.subr.bf16.mxu0 0
        %820 = vmatpush2.bf16.msra.mxu0 0
        %821 = vmatprep.subr.bf16.mxu0 0
        %822 = vmatpush2.bf16.msra.mxu0 0
        %823 = vmatprep.subr.bf16.mxu0 0
        %824 = vmatpush2.bf16.msra.mxu0 0
        %825 = vmatprep.subr.bf16.mxu0 0
        %826 = vmatpush2.bf16.msra.mxu0 0
        %827 = vmatprep.subr.bf16.mxu0 0
        %828 = vmatpush2.bf16.msra.mxu0 0
        %829 = vmatprep.subr.bf16.mxu0 0
        %830 = vmatpush2.bf16.msra.mxu0 0
        %831 = vmatprep.subr.bf16.mxu0 0
        %832 = vmatpush2.bf16.msra.mxu0 0
        %833 = vmatprep.subr.bf16.mxu0 0
        %834 = vmatpush2.bf16.msra.mxu0 0
        %835 = vmatprep.mubr.bf16.mxu0 0
        %836 = vmatmul.mubr.bf16.gmra.mxu0 %v719
        %v837 = vpop.f32.mrf.mxu0
        %v838 = vadd.f32 0.0, %v837
        %v839 = vpop.f32.mrf.mxu0
        %v840 = vadd.f32 0.0, %v839
        %v841 = vpop.f32.mrf.mxu0
        %v842 = vpop.f32.mrf.mxu0
        %843 = vdwg.mxu0
        %844 = vmatprep.subr.bf16.mxu0 0
        %845 = vmatpush1.bf16.msra.mxu0 0
        %846 = vmatprep.subr.bf16.mxu0 0
        %847 = vmatpush1.bf16.msra.mxu0 0
        %848 = vmatprep.subr.bf16.mxu0 0
        %849 = vmatpush1.bf16.msra.mxu0 0
        %850 = vmatprep.subr.bf16.mxu0 0
        %851 = vmatpush1.bf16.msra.mxu0 0
        %852 = vmatprep.subr.bf16.mxu0 %v644
        %853 = vmatpush1.bf16.msra.mxu0 %v643
        %854 = vmatprep.subr.bf16.mxu0 %v628
        %855 = vmatpush1.bf16.msra.mxu0 %v627
        %856 = vmatprep.subr.bf16.mxu0 %v612
        %857 = vmatpush1.bf16.msra.mxu0 %v611
        %858 = vmatprep.subr.bf16.mxu0 %v596
        %859 = vmatpush1.bf16.msra.mxu0 %v595
        %860 = vmatprep.subr.bf16.mxu0 0
        %861 = vmatpush2.bf16.msra.mxu0 0
        %862 = vmatprep.subr.bf16.mxu0 0
        %863 = vmatpush2.bf16.msra.mxu0 0
        %864 = vmatprep.subr.bf16.mxu0 0
        %865 = vmatpush2.bf16.msra.mxu0 0
        %866 = vmatprep.subr.bf16.mxu0 0
        %867 = vmatpush2.bf16.msra.mxu0 0
        %868 = vmatprep.subr.bf16.mxu0 0
        %869 = vmatpush2.bf16.msra.mxu0 0
        %870 = vmatprep.subr.bf16.mxu0 0
        %871 = vmatpush2.bf16.msra.mxu0 0
        %872 = vmatprep.subr.bf16.mxu0 0
        %873 = vmatpush2.bf16.msra.mxu0 0
        %874 = vmatprep.subr.bf16.mxu0 0
        %875 = vmatpush2.bf16.msra.mxu0 0
        %876 = vmatprep.mubr.bf16.mxu0 0
        %877 = vmatmul.mubr.bf16.gmra.mxu0 %v719
        %v878 = vpop.f32.mrf.mxu0
        %v879 = vadd.f32 0.0, %v878
        %v880 = vpop.f32.mrf.mxu0
        %v881 = vadd.f32 0.0, %v880
        %v882 = vpop.f32.mrf.mxu0
        %v883 = vpop.f32.mrf.mxu0
        %884 = vdwg.mxu0
        %885 = vmatprep.subr.bf16.mxu0 0
        %886 = vmatpush1.bf16.msra.mxu0 0
        %887 = vmatprep.subr.bf16.mxu0 0
        %888 = vmatpush1.bf16.msra.mxu0 0
        %889 = vmatprep.subr.bf16.mxu0 0
        %890 = vmatpush1.bf16.msra.mxu0 0
        %891 = vmatprep.subr.bf16.mxu0 0
        %892 = vmatpush1.bf16.msra.mxu0 0
        %893 = vmatprep.subr.bf16.mxu0 %v646
        %894 = vmatpush1.bf16.msra.mxu0 %v645
        %895 = vmatprep.subr.bf16.mxu0 %v630
        %896 = vmatpush1.bf16.msra.mxu0 %v629
        %897 = vmatprep.subr.bf16.mxu0 %v614
        %898 = vmatpush1.bf16.msra.mxu0 %v613
        %899 = vmatprep.subr.bf16.mxu0 %v598
        %900 = vmatpush1.bf16.msra.mxu0 %v597
        %901 = vmatprep.subr.bf16.mxu0 0
        %902 = vmatpush2.bf16.msra.mxu0 0
        %903 = vmatprep.subr.bf16.mxu0 0
        %904 = vmatpush2.bf16.msra.mxu0 0
        %905 = vmatprep.subr.bf16.mxu0 0
        %906 = vmatpush2.bf16.msra.mxu0 0
        %907 = vmatprep.subr.bf16.mxu0 0
        %908 = vmatpush2.bf16.msra.mxu0 0
        %909 = vmatprep.subr.bf16.mxu0 0
        %910 = vmatpush2.bf16.msra.mxu0 0
        %911 = vmatprep.subr.bf16.mxu0 0
        %912 = vmatpush2.bf16.msra.mxu0 0
        %913 = vmatprep.subr.bf16.mxu0 0
        %914 = vmatpush2.bf16.msra.mxu0 0
        %915 = vmatprep.subr.bf16.mxu0 0
        %916 = vmatpush2.bf16.msra.mxu0 0
        %917 = vmatprep.mubr.bf16.mxu0 0
        %918 = vmatmul.mubr.bf16.gmra.mxu0 %v719
        %v919 = vpop.f32.mrf.mxu0
        %v920 = vadd.f32 0.0, %v919
        %v921 = vpop.f32.mrf.mxu0
        %v922 = vadd.f32 0.0, %v921
        %v923 = vpop.f32.mrf.mxu0
        %v924 = vpop.f32.mrf.mxu0
        %925 = vdwg.mxu0
        %926 = vmatprep.subr.bf16.mxu0 0
        %927 = vmatpush1.bf16.msra.mxu0 0
        %928 = vmatprep.subr.bf16.mxu0 0
        %929 = vmatpush1.bf16.msra.mxu0 0
        %930 = vmatprep.subr.bf16.mxu0 0
        %931 = vmatpush1.bf16.msra.mxu0 0
        %932 = vmatprep.subr.bf16.mxu0 0
        %933 = vmatpush1.bf16.msra.mxu0 0
        %934 = vmatprep.subr.bf16.mxu0 %v648
        %935 = vmatpush1.bf16.msra.mxu0 %v647
        %936 = vmatprep.subr.bf16.mxu0 %v632
        %937 = vmatpush1.bf16.msra.mxu0 %v631
        %938 = vmatprep.subr.bf16.mxu0 %v616
        %939 = vmatpush1.bf16.msra.mxu0 %v615
        %940 = vmatprep.subr.bf16.mxu0 %v600
        %941 = vmatpush1.bf16.msra.mxu0 %v599
        %942 = vmatprep.subr.bf16.mxu0 0
        %943 = vmatpush2.bf16.msra.mxu0 0
        %944 = vmatprep.subr.bf16.mxu0 0
        %945 = vmatpush2.bf16.msra.mxu0 0
        %946 = vmatprep.subr.bf16.mxu0 0
        %947 = vmatpush2.bf16.msra.mxu0 0
        %948 = vmatprep.subr.bf16.mxu0 0
        %949 = vmatpush2.bf16.msra.mxu0 0
        %950 = vmatprep.subr.bf16.mxu0 0
        %951 = vmatpush2.bf16.msra.mxu0 0
        %952 = vmatprep.subr.bf16.mxu0 0
        %953 = vmatpush2.bf16.msra.mxu0 0
        %954 = vmatprep.subr.bf16.mxu0 0
        %955 = vmatpush2.bf16.msra.mxu0 0
        %956 = vmatprep.subr.bf16.mxu0 0
        %957 = vmatpush2.bf16.msra.mxu0 0
        %958 = vmatprep.mubr.bf16.mxu0 0
        %959 = vmatmul.mubr.bf16.gmra.mxu0 %v719
        %v960 = vpop.f32.mrf.mxu0
        %v961 = vadd.f32 0.0, %v960
        %v962 = vpop.f32.mrf.mxu0
        %v963 = vadd.f32 0.0, %v962
        %v964 = vpop.f32.mrf.mxu0
        %v965 = vpop.f32.mrf.mxu0
        %966 = vdwg.mxu0
        %967 = vmatprep.subr.bf16.mxu0 0
        %968 = vmatpush1.bf16.msra.mxu0 0
        %969 = vmatprep.subr.bf16.mxu0 0
        %970 = vmatpush1.bf16.msra.mxu0 0
        %971 = vmatprep.subr.bf16.mxu0 0
        %972 = vmatpush1.bf16.msra.mxu0 0
        %973 = vmatprep.subr.bf16.mxu0 0
        %974 = vmatpush1.bf16.msra.mxu0 0
        %975 = vmatprep.subr.bf16.mxu0 %v650
        %976 = vmatpush1.bf16.msra.mxu0 %v649
        %977 = vmatprep.subr.bf16.mxu0 %v634
        %978 = vmatpush1.bf16.msra.mxu0 %v633
        %979 = vmatprep.subr.bf16.mxu0 %v618
        %980 = vmatpush1.bf16.msra.mxu0 %v617
        %981 = vmatprep.subr.bf16.mxu0 %v602
        %982 = vmatpush1.bf16.msra.mxu0 %v601
        %983 = vmatprep.subr.bf16.mxu0 0
        %984 = vmatpush2.bf16.msra.mxu0 0
        %985 = vmatprep.subr.bf16.mxu0 0
        %986 = vmatpush2.bf16.msra.mxu0 0
        %987 = vmatprep.subr.bf16.mxu0 0
        %988 = vmatpush2.bf16.msra.mxu0 0
        %989 = vmatprep.subr.bf16.mxu0 0
        %990 = vmatpush2.bf16.msra.mxu0 0
        %991 = vmatprep.subr.bf16.mxu0 0
        %992 = vmatpush2.bf16.msra.mxu0 0
        %993 = vmatprep.subr.bf16.mxu0 0
        %994 = vmatpush2.bf16.msra.mxu0 0
        %995 = vmatprep.subr.bf16.mxu0 0
        %996 = vmatpush2.bf16.msra.mxu0 0
        %997 = vmatprep.subr.bf16.mxu0 0
        %998 = vmatpush2.bf16.msra.mxu0 0
        %999 = vmatprep.mubr.bf16.mxu0 0
        %1000 = vmatmul.mubr.bf16.gmra.mxu0 %v719
        %v1001 = vpop.f32.mrf.mxu0
        %v1002 = vadd.f32 0.0, %v1001
        %v1003 = vpop.f32.mrf.mxu0
        %v1004 = vadd.f32 0.0, %v1003
        %v1005 = vpop.f32.mrf.mxu0
        %v1006 = vpop.f32.mrf.mxu0
        %1007 = vdwg.mxu0
        %1008 = vmatprep.subr.bf16.mxu0 0
        %1009 = vmatpush1.bf16.msra.mxu0 0
        %1010 = vmatprep.subr.bf16.mxu0 0
        %1011 = vmatpush1.bf16.msra.mxu0 0
        %1012 = vmatprep.subr.bf16.mxu0 0
        %1013 = vmatpush1.bf16.msra.mxu0 0
        %1014 = vmatprep.subr.bf16.mxu0 0
        %1015 = vmatpush1.bf16.msra.mxu0 0
        %1016 = vmatprep.subr.bf16.mxu0 %v652
        %1017 = vmatpush1.bf16.msra.mxu0 %v651
        %1018 = vmatprep.subr.bf16.mxu0 %v636
        %1019 = vmatpush1.bf16.msra.mxu0 %v635
        %1020 = vmatprep.subr.bf16.mxu0 %v620
        %1021 = vmatpush1.bf16.msra.mxu0 %v619
        %1022 = vmatprep.subr.bf16.mxu0 %v604
        %1023 = vmatpush1.bf16.msra.mxu0 %v603
        %1024 = vmatprep.subr.bf16.mxu0 0
        %1025 = vmatpush2.bf16.msra.mxu0 0
        %1026 = vmatprep.subr.bf16.mxu0 0
        %1027 = vmatpush2.bf16.msra.mxu0 0
        %1028 = vmatprep.subr.bf16.mxu0 0
        %1029 = vmatpush2.bf16.msra.mxu0 0
        %1030 = vmatprep.subr.bf16.mxu0 0
        %1031 = vmatpush2.bf16.msra.mxu0 0
        %1032 = vmatprep.subr.bf16.mxu0 0
        %1033 = vmatpush2.bf16.msra.mxu0 0
        %1034 = vmatprep.subr.bf16.mxu0 0
        %1035 = vmatpush2.bf16.msra.mxu0 0
        %1036 = vmatprep.subr.bf16.mxu0 0
        %1037 = vmatpush2.bf16.msra.mxu0 0
        %1038 = vmatprep.subr.bf16.mxu0 0
        %1039 = vmatpush2.bf16.msra.mxu0 0
        %1040 = vmatprep.mubr.bf16.mxu0 0
        %1041 = vmatmul.mubr.bf16.gmra.mxu0 %v719
        %v1042 = vpop.f32.mrf.mxu0
        %v1043 = vadd.f32 0.0, %v1042
        %v1044 = vpop.f32.mrf.mxu0
        %v1045 = vadd.f32 0.0, %v1044
        %v1046 = vpop.f32.mrf.mxu0
        %v1047 = vpop.f32.mrf.mxu0
        %1048 = vdwg.mxu0
        %vm1049 = vcmp.ge.f32.partialorder %v756, 0.0
        %vm1050 = vcmp.ge.f32.partialorder %v758, 0.0
        %vm1051 = vcmp.ge.f32.partialorder %v797, 0.0
        %vm1052 = vcmp.ge.f32.partialorder %v799, 0.0
        %vm1053 = vcmp.ge.f32.partialorder %v838, 0.0
        %vm1054 = vcmp.ge.f32.partialorder %v840, 0.0
        %vm1055 = vcmp.ge.f32.partialorder %v879, 0.0
        %vm1056 = vcmp.ge.f32.partialorder %v881, 0.0
        %vm1057 = vcmp.ge.f32.partialorder %v920, 0.0
        %vm1058 = vcmp.ge.f32.partialorder %v922, 0.0
        %vm1059 = vcmp.ge.f32.partialorder %v961, 0.0
        %vm1060 = vcmp.ge.f32.partialorder %v963, 0.0
        %vm1061 = vcmp.ge.f32.partialorder %v1002, 0.0
        %vm1062 = vcmp.ge.f32.partialorder %v1004, 0.0
        %vm1063 = vcmp.ge.f32.partialorder %v1043, 0.0
        %vm1064 = vcmp.ge.f32.partialorder %v1045, 0.0
        %v1065 = vmul.f32 %v756, 0.2
        %v1066 = vmul.f32 %v758, 0.2
        %v1067 = vmul.f32 %v797, 0.2
        %v1068 = vmul.f32 %v799, 0.2
        %v1069 = vmul.f32 %v838, 0.2
        %v1070 = vmul.f32 %v840, 0.2
        %v1071 = vmul.f32 %v879, 0.2
        %v1072 = vmul.f32 %v881, 0.2
        %v1073 = vmul.f32 %v920, 0.2
        %v1074 = vmul.f32 %v922, 0.2
        %v1075 = vmul.f32 %v961, 0.2
        %v1076 = vmul.f32 %v963, 0.2
        %v1077 = vmul.f32 %v1002, 0.2
        %v1078 = vmul.f32 %v1004, 0.2
        %v1079 = vmul.f32 %v1043, 0.2
        %v1080 = vmul.f32 %v1045, 0.2
        %v1081 = vsel %vm1049, %v756, %v1065
        %v1082 = vsel %vm1050, %v758, %v1066
        %v1083 = vsel %vm1051, %v797, %v1067
        %v1084 = vsel %vm1052, %v799, %v1068
        %v1085 = vsel %vm1053, %v838, %v1069
        %v1086 = vsel %vm1054, %v840, %v1070
        %v1087 = vsel %vm1055, %v879, %v1071
        %v1088 = vsel %vm1056, %v881, %v1072
        %v1089 = vsel %vm1057, %v920, %v1073
        %v1090 = vsel %vm1058, %v922, %v1074
        %v1091 = vsel %vm1059, %v961, %v1075
        %v1092 = vsel %vm1060, %v963, %v1076
        %v1093 = vsel %vm1061, %v1002, %v1077
        %v1094 = vsel %vm1062, %v1004, %v1078
        %v1095 = vsel %vm1063, %v1043, %v1079
        %v1096 = vsel %vm1064, %v1045, %v1080
        %v1097 = vpack.c.bf16 %v1081, %v1081
        %v1098 = vpack.c.bf16 %v1082, %v1082
        %v1099 = vpack.c.bf16 %v1083, %v1083
        %v1100 = vpack.c.bf16 %v1084, %v1084
        %v1101 = vpack.c.bf16 %v1085, %v1085
        %v1102 = vpack.c.bf16 %v1086, %v1086
        %v1103 = vpack.c.bf16 %v1087, %v1087
        %v1104 = vpack.c.bf16 %v1088, %v1088
        %v1105 = vpack.c.bf16 %v1089, %v1089
        %v1106 = vpack.c.bf16 %v1090, %v1090
        %v1107 = vpack.c.bf16 %v1091, %v1091
        %v1108 = vpack.c.bf16 %v1092, %v1092
        %v1109 = vpack.c.bf16 %v1093, %v1093
        %v1110 = vpack.c.bf16 %v1094, %v1094
        %v1111 = vpack.c.bf16 %v1095, %v1095
        %v1112 = vpack.c.bf16 %v1096, %v1096
        %v1129 = vunpack.c.l.b16 %v1097
        %v1130 = vunpack.c.l.b16 %v1098
        %v1131 = vunpack.c.l.b16 %v1099
        %v1132 = vunpack.c.l.b16 %v1100
        %v1133 = vunpack.c.l.b16 %v1101
        %v1134 = vunpack.c.l.b16 %v1102
        %v1135 = vunpack.c.l.b16 %v1103
        %v1136 = vunpack.c.l.b16 %v1104
        %v1137 = vunpack.c.l.b16 %v1105
        %v1138 = vunpack.c.l.b16 %v1106
        %v1139 = vunpack.c.l.b16 %v1107
        %v1140 = vunpack.c.l.b16 %v1108
        %v1141 = vunpack.c.l.b16 %v1109
        %v1142 = vunpack.c.l.b16 %v1110
        %v1143 = vunpack.c.l.b16 %v1111
        %v1144 = vunpack.c.l.b16 %v1112
        %v1145 = vpack.c.b16 %v1130, %v1129
        %v1146 = vpack.c.b16 %v1132, %v1131
        %v1147 = vpack.c.b16 %v1134, %v1133
        %v1148 = vpack.c.b16 %v1136, %v1135
        %v1149 = vpack.c.b16 %v1138, %v1137
        %v1150 = vpack.c.b16 %v1140, %v1139
        %v1151 = vpack.c.b16 %v1142, %v1141
        %v1152 = vpack.c.b16 %v1144, %v1143
        %1161 = vst [vmem:[%s329] sm:$0xff] %v1145
        %1162 = vst [vmem:[%s329 + $0x8] sm:$0xff] %v1146
        %1163 = vst [vmem:[%s329 + $0x10] sm:$0xff] %v1147
        %1164 = vst [vmem:[%s329 + $0x18] sm:$0xff] %v1148
        %1165 = vst [vmem:[%s329 + $0x20] sm:$0xff] %v1149
        %1166 = vst [vmem:[%s329 + $0x28] sm:$0xff] %v1150
        %1167 = vst [vmem:[%s329 + $0x30] sm:$0xff] %v1151
        %1168 = vst [vmem:[%s329 + $0x38] sm:$0xff] %v1152
        %s1169 = smul.u32 16, %s18
        %p1170 = scmp.lt.s32.totalorder %s17, 0
        %s1171 = scalar_select %p1170, %s17, 0
        %p1172 = scmp.lt.s32.totalorder %s1169, 63
        %s1173 = scalar_select %p1172, %s1169, 63
        %s1174 = smul.addr %s1171, 64
        %s1175 = sadd.s32 %s1173, %s1174
        %s1176 = smul.addr %s1175, 4
        %s1177 = scalar_lea.vmem %s2, %s1176
        // Predicated region
        $region52: #{discriminator_forward.6} parent=46 // pred_check
          %p1178 = pneg %p97
        $region53: #{discriminator_forward.6} parent=46 // pred_check_branch
          %1180 = sbr.rel (%p1178) target = $region55
        $region54: #{discriminator_forward.6} parent=46 // pred_region
          %s1181 = smul.u32 16, %s18
        $region55: #{discriminator_forward.6} parent=46 // pred_fallthru
          _
      $region47: #{discriminator_forward.6} parent=5 // pred_fallthru
        _
      %p1182 = scmp.le.s32.totalorder 2, %s8
      // Predicated region
      $region56: #{discriminator_forward.6} parent=5 // pred_check
        %p1183 = pneg %p1182
      $region57: #{discriminator_forward.6} parent=5 // pred_check_branch
        %1185 = sbr.rel (%p1183) target = $region59
      $region58: #{discriminator_forward.6} parent=5 // pred_region
        %s1186 = ssub.s32 %s8, 2
        // Predicated region
        $region60: #{discriminator_forward.6} parent=58 // pred_check
          %p1187 = pneg %p103
        $region61: #{discriminator_forward.6} parent=58 // pred_check_branch
          %1189 = sbr.rel (%p1187) target = $region63
        $region62: #{discriminator_forward.6} parent=58 // pred_region
          %s1190 = smul.u32 16, %s20
          %p1191 = scmp.lt.s32.totalorder %s19, 0
          %s1192 = scalar_select %p1191, %s19, 0
          %p1193 = scmp.lt.s32.totalorder %s1190, 63
          %s1194 = scalar_select %p1193, %s1190, 63
          %s1195 = smul.addr %s1192, 64
          %s1196 = sadd.s32 %s1194, %s1195
          %s1197 = smul.addr %s1196, 4
          %s1198 = scalar_lea.vmem %s2, %s1197
        $region63: #{discriminator_forward.6} parent=58 // pred_fallthru
          _
      $region59: #{discriminator_forward.6} parent=5 // pred_fallthru
        _
    $region6: #{discriminator_forward.6} parent=1 // loop_footer
      %s12 = sadd.s32 1, %s8
    $region7: #{discriminator_forward.6} parent=1 // loop_footer_branch
      %7 = sbr.rel target = $region3
    $region8: #{discriminator_forward.6} parent=1 // loop_exit
      _

// kernel: discriminator_forward.7
$region0: #{discriminator_forward.7}
  #allocation0 [shape = 'u32[]', space=smem, size = 0x4, offset = 0x4, fixed_abs, tag = 'smem constant byte address 0x4 - core index']
  #allocation1 [shape = 'u32[144,128]{1,0:T(1,128)}', space=vmem, size = 0x12000, scoped, tag = 'internal scratch']
  %s0 = inlined_call_operand.vmem [shape: bf16[16,128], index: 0, kind: input, shape index: {}]
  %s1 = inlined_call_operand.vmem [shape: bf16[128,2048], index: 1, kind: input, shape index: {}]
  %s2 = inlined_call_operand.vmem [shape: bf16[16,2048], index: 2, kind: output, shape index: {}]
  %s3 = sld [smem:[#allocation0]]
  $region83: #{discriminator_forward.7} parent=0
    _
  %s5 = ssub.s32 1, %s3
  %s6 = scalar_select 0, %s5, %s3
  $region1: #{discriminator_forward.7} parent=0
    #allocation2 [shape = 'u8[524288]{0}', space=vmem, size = 0x80000, scoped, tag = 'input window, operand 1']
    #allocation3 [shape = 'u8[65536]{0}', space=vmem, size = 0x10000, scoped, tag = 'output window, operand 0']
    loop: start=0, step=1, limit=4
    $region2: #{discriminator_forward.7} parent=1 // loop_pre_header
      _
    $region3: #{discriminator_forward.7} parent=1 // loop_header
      %s8 = sphi 0, %s12
      %p9 = scmp.ge.s32.totalorder %s8, 4
      %s15 = sphi 0, %s27
      %s16 = sphi 0, %s23
      %s17 = sphi 0, %s15
      %s18 = sphi 0, %s16
      %s19 = sphi 0, %s17
      %s20 = sphi 0, %s18
      %s30 = sphi 0, %s32
      %s33 = sphi 0, %s30
      %s34 = sphi 0, %s33
      %s50 = sphi 0, %s34
      %s56 = sphi 0, %s58
      %s59 = sphi 0, %s56
      %s60 = sphi 0, %s59
      %s76 = sphi 0, %s60
      %s84 = sphi 0, %s86
      %s87 = sphi 0, %s84
      %s88 = sphi 0, %s87
      %s104 = sphi 0, %s88
    $region4: #{discriminator_forward.7} parent=1 // loop_header_branch
      %11 = sbr.rel (%p9) target = $region8
    $region5: #{discriminator_forward.7} parent=1 // loop_body
      %s13 = ssub.s32 %s8, 1
      %s14 = ssub.s32 %s8, 2
      %s21 = sadd.s32 1, %s16
      %p22 = scmp.ge.s32.totalorder %s21, 2
      %s23 = scalar_select %p22, 0, %s21
      %s24 = sadd.s32 1, %s15
      %s25 = scalar_select %p22, %s24, %s15
      %p26 = scmp.ge.s32.totalorder %s25, 1
      %s27 = scalar_select %p26, 0, %s25
      %s28 = ssub.s32 %s15, %s27
      %p29 = scmp.eq.s32.totalorder %s28, 0
      %s31 = sadd.s32 %s30, 1
      %s32 = scalar_select %p29, %s30, %s31
      %p35 = pneg %p29
      %p36 = scmp.eq.s32.totalorder %s8, 1
      %p37 = por %p35, %p36
      %p38 = scmp.ne.s32.totalorder %s30, %s33
      %p39 = scmp.eq.s32.totalorder %s8, 0
      %p40 = por %p38, %p39
      %p41 = scmp.ne.s32.totalorder %s30, %s33
      %p42 = scmp.eq.s32.totalorder %s13, 1
      %p43 = por %p41, %p42
      %p44 = scmp.ne.s32.totalorder %s33, %s34
      %p45 = scmp.eq.s32.totalorder %s13, 0
      %p46 = por %p44, %p45
      %p47 = scmp.ne.s32.totalorder %s33, %s34
      %p48 = scmp.eq.s32.totalorder %s14, 1
      %p49 = por %p47, %p48
      %p51 = scmp.ne.s32.totalorder %s34, %s50
      %p52 = scmp.eq.s32.totalorder %s14, 0
      %p53 = por %p51, %p52
      %s54 = ssub.s32 %s16, %s23
      %p55 = scmp.eq.s32.totalorder %s54, 0
      %s57 = sadd.s32 %s56, 1
      %s58 = scalar_select %p55, %s56, %s57
      %p61 = pneg %p55
      %p62 = scmp.eq.s32.totalorder %s8, 1
      %p63 = por %p61, %p62
      %p64 = scmp.ne.s32.totalorder %s56, %s59
      %p65 = scmp.eq.s32.totalorder %s8, 0
      %p66 = por %p64, %p65
      %p67 = scmp.ne.s32.totalorder %s56, %s59
      %p68 = scmp.eq.s32.totalorder %s13, 1
      %p69 = por %p67, %p68
      %p70 = scmp.ne.s32.totalorder %s59, %s60
      %p71 = scmp.eq.s32.totalorder %s13, 0
      %p72 = por %p70, %p71
      %p73 = scmp.ne.s32.totalorder %s59, %s60
      %p74 = scmp.eq.s32.totalorder %s14, 1
      %p75 = por %p73, %p74
      %p77 = scmp.ne.s32.totalorder %s60, %s76
      %p78 = scmp.eq.s32.totalorder %s14, 0
      %p79 = por %p77, %p78
      %s80 = ssub.s32 %s15, %s27
      %s81 = ssub.s32 %s16, %s23
      %s82 = sor.u32 %s80, %s81
      %p83 = scmp.eq.s32.totalorder %s82, 0
      %s85 = sadd.s32 %s84, 1
      %s86 = scalar_select %p83, %s84, %s85
      %p89 = pneg %p83
      %p90 = scmp.eq.s32.totalorder %s8, 1
      %p91 = por %p89, %p90
      %p92 = scmp.ne.s32.totalorder %s84, %s87
      %p93 = scmp.eq.s32.totalorder %s8, 0
      %p94 = por %p92, %p93
      %p95 = scmp.ne.s32.totalorder %s84, %s87
      %p96 = scmp.eq.s32.totalorder %s13, 1
      %p97 = por %p95, %p96
      %p98 = scmp.ne.s32.totalorder %s87, %s88
      %p99 = scmp.eq.s32.totalorder %s13, 0
      %p100 = por %p98, %p99
      %p101 = scmp.ne.s32.totalorder %s87, %s88
      %p102 = scmp.eq.s32.totalorder %s14, 1
      %p103 = por %p101, %p102
      %p105 = scmp.ne.s32.totalorder %s88, %s104
      %p106 = scmp.eq.s32.totalorder %s14, 0
      %p107 = por %p105, %p106
      %p108 = scmp.le.s32.totalorder 1, %s8
      %p109 = scmp.lt.s32.totalorder %s8, 3
      %p110 = pnand %p108, %p109
      %p111 = pneg %p110
      // Predicated region
      $region9: #{discriminator_forward.7} parent=5 // pred_check
        _
      $region10: #{discriminator_forward.7} parent=5 // pred_check_branch
        %113 = sbr.rel (%p110) target = $region12
      $region11: #{discriminator_forward.7} parent=5 // pred_region
        %s114 = ssub.s32 %s8, 1
        // Predicated region
        $region13: #{discriminator_forward.7} parent=11 // pred_check
          %p115 = pneg %p46
        $region14: #{discriminator_forward.7} parent=11 // pred_check_branch
          %117 = sbr.rel (%p115) target = $region16
        $region15: #{discriminator_forward.7} parent=11 // pred_region
          %s118 = smul.u32 2, %s17
          %p119 = scmp.lt.s32.totalorder %s118, 1
          %s120 = scalar_select %p119, %s118, 1
          %s121 = smul.addr %s120, 4
          %s122 = scalar_lea.vmem %s0, %s121
          %s123 = smul.u32 2, %s17
        $region16: #{discriminator_forward.7} parent=11 // pred_fallthru
          _
      $region12: #{discriminator_forward.7} parent=5 // pred_fallthru
        _
      %p124 = scmp.lt.s32.totalorder %s8, 2
      // Predicated region
      $region17: #{discriminator_forward.7} parent=5 // pred_check
        %p125 = pneg %p124
      $region18: #{discriminator_forward.7} parent=5 // pred_check_branch
        %127 = sbr.rel (%p125) target = $region20
      $region19: #{discriminator_forward.7} parent=5 // pred_region
        // Predicated region
        $region21: #{discriminator_forward.7} parent=19 // pred_check
          %p128 = pneg %p66
        $region22: #{discriminator_forward.7} parent=19 // pred_check_branch
          %130 = sbr.rel (%p128) target = $region24
        $region23: #{discriminator_forward.7} parent=19 // pred_region
          %s131 = sand.u32 %s56, 1
          %s132 = sand.u32 %s56, 1
          %s133 = smul.addr %s132, 512
          %s134 = scalar_lea.vmem [#allocation2], %s133
          %s135 = smul.u32 8, %s16
          %s136 = smul.addr %s135, 4
          %s137 = scalar_lea.vmem %s1, %s136
          // Predicated region
          $region25: #{discriminator_forward.7} parent=23 // pred_check
            _
          $region26: #{discriminator_forward.7} parent=23 // pred_check_branch
            %139 = sbr.rel (0) target = $region28
          $region27: #{discriminator_forward.7} parent=23 // pred_region
            // Predicated region
            $region29: #{discriminator_forward.7} parent=27 // pred_check
              _
            $region30: #{discriminator_forward.7} parent=27 // pred_check_branch
              %141 = sbr.rel (0) target = $region32
            $region31: #{discriminator_forward.7} parent=27 // pred_region
              loop: start=0, step=1, limit=1
              $region33: #{discriminator_forward.7} parent=31 // loop_pre_header
                _
              $region34: #{discriminator_forward.7} parent=31 // loop_header
                %s143 = sphi 0, %s147
                %p144 = scmp.ge.s32.totalorder %s143, 1
                %s148 = sphi %s137, %s137
                %s149 = sphi %s134, %s134
              $region35: #{discriminator_forward.7} parent=31 // loop_header_branch
                %146 = sbr.rel (%p144) target = $region39
              $region36: #{discriminator_forward.7} parent=31 // loop_body
                %v150 = vld [vmem:[%s148] sm:$0xff]
                %151 = vst [vmem:[%s149] sm:$0xff] %v150
                %v152 = vld [vmem:[%s148 + $0x8] sm:$0xff]
                %153 = vst [vmem:[%s149 + $0x8] sm:$0xff] %v152
                %v154 = vld [vmem:[%s148 + $0x10] sm:$0xff]
                %155 = vst [vmem:[%s149 + $0x10] sm:$0xff] %v154
                %v156 = vld [vmem:[%s148 + $0x18] sm:$0xff]
                %157 = vst [vmem:[%s149 + $0x18] sm:$0xff] %v156
                %v158 = vld [vmem:[%s148 + $0x40] sm:$0xff]
                %159 = vst [vmem:[%s149 + $0x20] sm:$0xff] %v158
                %v160 = vld [vmem:[%s148 + $0x48] sm:$0xff]
                %161 = vst [vmem:[%s149 + $0x28] sm:$0xff] %v160
                %v162 = vld [vmem:[%s148 + $0x50] sm:$0xff]
                %163 = vst [vmem:[%s149 + $0x30] sm:$0xff] %v162
                %v164 = vld [vmem:[%s148 + $0x58] sm:$0xff]
                %165 = vst [vmem:[%s149 + $0x38] sm:$0xff] %v164
                %v166 = vld [vmem:[%s148 + $0x80] sm:$0xff]
                %167 = vst [vmem:[%s149 + $0x40] sm:$0xff] %v166
                %v168 = vld [vmem:[%s148 + $0x88] sm:$0xff]
                %169 = vst [vmem:[%s149 + $0x48] sm:$0xff] %v168
                %v170 = vld [vmem:[%s148 + $0x90] sm:$0xff]
                %171 = vst [vmem:[%s149 + $0x50] sm:$0xff] %v170
                %v172 = vld [vmem:[%s148 + $0x98] sm:$0xff]
                %173 = vst [vmem:[%s149 + $0x58] sm:$0xff] %v172
                %v174 = vld [vmem:[%s148 + $0xc0] sm:$0xff]
                %175 = vst [vmem:[%s149 + $0x60] sm:$0xff] %v174
                %v176 = vld [vmem:[%s148 + $0xc8] sm:$0xff]
                %177 = vst [vmem:[%s149 + $0x68] sm:$0xff] %v176
                %v178 = vld [vmem:[%s148 + $0xd0] sm:$0xff]
                %179 = vst [vmem:[%s149 + $0x70] sm:$0xff] %v178
                %v180 = vld [vmem:[%s148 + $0xd8] sm:$0xff]
                %181 = vst [vmem:[%s149 + $0x78] sm:$0xff] %v180
                %v182 = vld [vmem:[%s148 + $0x100] sm:$0xff]
                %183 = vst [vmem:[%s149 + $0x80] sm:$0xff] %v182
                %v184 = vld [vmem:[%s148 + $0x108] sm:$0xff]
                %185 = vst [vmem:[%s149 + $0x88] sm:$0xff] %v184
                %v186 = vld [vmem:[%s148 + $0x110] sm:$0xff]
                %187 = vst [vmem:[%s149 + $0x90] sm:$0xff] %v186
                %v188 = vld [vmem:[%s148 + $0x118] sm:$0xff]
                %189 = vst [vmem:[%s149 + $0x98] sm:$0xff] %v188
                %v190 = vld [vmem:[%s148 + $0x140] sm:$0xff]
                %191 = vst [vmem:[%s149 + $0xa0] sm:$0xff] %v190
                %v192 = vld [vmem:[%s148 + $0x148] sm:$0xff]
                %193 = vst [vmem:[%s149 + $0xa8] sm:$0xff] %v192
                %v194 = vld [vmem:[%s148 + $0x150] sm:$0xff]
                %195 = vst [vmem:[%s149 + $0xb0] sm:$0xff] %v194
                %v196 = vld [vmem:[%s148 + $0x158] sm:$0xff]
                %197 = vst [vmem:[%s149 + $0xb8] sm:$0xff] %v196
                %v198 = vld [vmem:[%s148 + $0x180] sm:$0xff]
                %199 = vst [vmem:[%s149 + $0xc0] sm:$0xff] %v198
                %v200 = vld [vmem:[%s148 + $0x188] sm:$0xff]
                %201 = vst [vmem:[%s149 + $0xc8] sm:$0xff] %v200
                %v202 = vld [vmem:[%s148 + $0x190] sm:$0xff]
                %203 = vst [vmem:[%s149 + $0xd0] sm:$0xff] %v202
                %v204 = vld [vmem:[%s148 + $0x198] sm:$0xff]
                %205 = vst [vmem:[%s149 + $0xd8] sm:$0xff] %v204
                %v206 = vld [vmem:[%s148 + $0x1c0] sm:$0xff]
                %207 = vst [vmem:[%s149 + $0xe0] sm:$0xff] %v206
                %v208 = vld [vmem:[%s148 + $0x1c8] sm:$0xff]
                %209 = vst [vmem:[%s149 + $0xe8] sm:$0xff] %v208
                %v210 = vld [vmem:[%s148 + $0x1d0] sm:$0xff]
                %211 = vst [vmem:[%s149 + $0xf0] sm:$0xff] %v210
                %v212 = vld [vmem:[%s148 + $0x1d8] sm:$0xff]
                %213 = vst [vmem:[%s149 + $0xf8] sm:$0xff] %v212
                %v214 = vld [vmem:[%s148 + $0x200] sm:$0xff]
                %215 = vst [vmem:[%s149 + $0x100] sm:$0xff] %v214
                %v216 = vld [vmem:[%s148 + $0x208] sm:$0xff]
                %217 = vst [vmem:[%s149 + $0x108] sm:$0xff] %v216
                %v218 = vld [vmem:[%s148 + $0x210] sm:$0xff]
                %219 = vst [vmem:[%s149 + $0x110] sm:$0xff] %v218
                %v220 = vld [vmem:[%s148 + $0x218] sm:$0xff]
                %221 = vst [vmem:[%s149 + $0x118] sm:$0xff] %v220
                %v222 = vld [vmem:[%s148 + $0x240] sm:$0xff]
                %223 = vst [vmem:[%s149 + $0x120] sm:$0xff] %v222
                %v224 = vld [vmem:[%s148 + $0x248] sm:$0xff]
                %225 = vst [vmem:[%s149 + $0x128] sm:$0xff] %v224
                %v226 = vld [vmem:[%s148 + $0x250] sm:$0xff]
                %227 = vst [vmem:[%s149 + $0x130] sm:$0xff] %v226
                %v228 = vld [vmem:[%s148 + $0x258] sm:$0xff]
                %229 = vst [vmem:[%s149 + $0x138] sm:$0xff] %v228
                %v230 = vld [vmem:[%s148 + $0x280] sm:$0xff]
                %231 = vst [vmem:[%s149 + $0x140] sm:$0xff] %v230
                %v232 = vld [vmem:[%s148 + $0x288] sm:$0xff]
                %233 = vst [vmem:[%s149 + $0x148] sm:$0xff] %v232
                %v234 = vld [vmem:[%s148 + $0x290] sm:$0xff]
                %235 = vst [vmem:[%s149 + $0x150] sm:$0xff] %v234
                %v236 = vld [vmem:[%s148 + $0x298] sm:$0xff]
                %237 = vst [vmem:[%s149 + $0x158] sm:$0xff] %v236
                %v238 = vld [vmem:[%s148 + $0x2c0] sm:$0xff]
                %239 = vst [vmem:[%s149 + $0x160] sm:$0xff] %v238
                %v240 = vld [vmem:[%s148 + $0x2c8] sm:$0xff]
                %241 = vst [vmem:[%s149 + $0x168] sm:$0xff] %v240
                %v242 = vld [vmem:[%s148 + $0x2d0] sm:$0xff]
                %243 = vst [vmem:[%s149 + $0x170] sm:$0xff] %v242
                %v244 = vld [vmem:[%s148 + $0x2d8] sm:$0xff]
                %245 = vst [vmem:[%s149 + $0x178] sm:$0xff] %v244
                %v246 = vld [vmem:[%s148 + $0x300] sm:$0xff]
                %247 = vst [vmem:[%s149 + $0x180] sm:$0xff] %v246
                %v248 = vld [vmem:[%s148 + $0x308] sm:$0xff]
                %249 = vst [vmem:[%s149 + $0x188] sm:$0xff] %v248
                %v250 = vld [vmem:[%s148 + $0x310] sm:$0xff]
                %251 = vst [vmem:[%s149 + $0x190] sm:$0xff] %v250
                %v252 = vld [vmem:[%s148 + $0x318] sm:$0xff]
                %253 = vst [vmem:[%s149 + $0x198] sm:$0xff] %v252
                %v254 = vld [vmem:[%s148 + $0x340] sm:$0xff]
                %255 = vst [vmem:[%s149 + $0x1a0] sm:$0xff] %v254
                %v256 = vld [vmem:[%s148 + $0x348] sm:$0xff]
                %257 = vst [vmem:[%s149 + $0x1a8] sm:$0xff] %v256
                %v258 = vld [vmem:[%s148 + $0x350] sm:$0xff]
                %259 = vst [vmem:[%s149 + $0x1b0] sm:$0xff] %v258
                %v260 = vld [vmem:[%s148 + $0x358] sm:$0xff]
                %261 = vst [vmem:[%s149 + $0x1b8] sm:$0xff] %v260
                %v262 = vld [vmem:[%s148 + $0x380] sm:$0xff]
                %263 = vst [vmem:[%s149 + $0x1c0] sm:$0xff] %v262
                %v264 = vld [vmem:[%s148 + $0x388] sm:$0xff]
                %265 = vst [vmem:[%s149 + $0x1c8] sm:$0xff] %v264
                %v266 = vld [vmem:[%s148 + $0x390] sm:$0xff]
                %267 = vst [vmem:[%s149 + $0x1d0] sm:$0xff] %v266
                %v268 = vld [vmem:[%s148 + $0x398] sm:$0xff]
                %269 = vst [vmem:[%s149 + $0x1d8] sm:$0xff] %v268
                %v270 = vld [vmem:[%s148 + $0x3c0] sm:$0xff]
                %271 = vst [vmem:[%s149 + $0x1e0] sm:$0xff] %v270
                %v272 = vld [vmem:[%s148 + $0x3c8] sm:$0xff]
                %273 = vst [vmem:[%s149 + $0x1e8] sm:$0xff] %v272
                %v274 = vld [vmem:[%s148 + $0x3d0] sm:$0xff]
                %275 = vst [vmem:[%s149 + $0x1f0] sm:$0xff] %v274
                %v276 = vld [vmem:[%s148 + $0x3d8] sm:$0xff]
                %277 = vst [vmem:[%s149 + $0x1f8] sm:$0xff] %v276
              $region37: #{discriminator_forward.7} parent=31 // loop_footer
                %s147 = sadd.s32 1, %s143
              $region38: #{discriminator_forward.7} parent=31 // loop_footer_branch
                %142 = sbr.rel target = $region34
              $region39: #{discriminator_forward.7} parent=31 // loop_exit
                _
            $region32: #{discriminator_forward.7} parent=27 // pred_fallthru
              _
            // Predicated region
            $region40: #{discriminator_forward.7} parent=27 // pred_check
              _
            $region41: #{discriminator_forward.7} parent=27 // pred_check_branch
              %279 = sbr.rel target = $region43
            $region42: #{discriminator_forward.7} parent=27 // pred_region
              _
            $region43: #{discriminator_forward.7} parent=27 // pred_fallthru
              _
          $region28: #{discriminator_forward.7} parent=23 // pred_fallthru
            _
          %280 = vnop
        $region24: #{discriminator_forward.7} parent=19 // pred_fallthru
          _
      $region20: #{discriminator_forward.7} parent=5 // pred_fallthru
        _
      %p281 = scmp.le.s32.totalorder 1, %s8
      %p282 = scmp.lt.s32.totalorder %s8, 3
      %p283 = pnand %p281, %p282
      %p284 = pneg %p283
      // Predicated region
      $region44: #{discriminator_forward.7} parent=5 // pred_check
        _
      $region45: #{discriminator_forward.7} parent=5 // pred_check_branch
        %286 = sbr.rel (%p283) target = $region47
      $region46: #{discriminator_forward.7} parent=5 // pred_region
        %s287 = ssub.s32 %s8, 1
        %s288 = sand.u32 %s59, 1
        %s289 = sand.u32 %s59, 1
        %s290 = smul.addr %s289, 512
        %s291 = scalar_lea.vmem [#allocation2], %s290
        // Predicated region
        $region48: #{discriminator_forward.7} parent=46 // pred_check
          %p292 = pneg %p72
        $region49: #{discriminator_forward.7} parent=46 // pred_check_branch
          %294 = sbr.rel (%p292) target = $region51
        $region50: #{discriminator_forward.7} parent=46 // pred_region
          _
        $region51: #{discriminator_forward.7} parent=46 // pred_fallthru
          _
        %s295 = smul.u32 2, %s17
        %p296 = scmp.lt.s32.totalorder %s295, 1
        %s297 = scalar_select %p296, %s295, 1
        %s298 = smul.addr %s297, 4
        %s299 = scalar_lea.vmem %s0, %s298
        %p300 = pneg %p46
        %p301 = pneg %p43
        %s302 = sand.u32 %s59, 1
        %s303 = sand.u32 %s59, 1
        %s304 = smul.addr %s303, 512
        %s305 = scalar_lea.vmem [#allocation2], %s304
        %p306 = pneg %p72
        %p307 = pneg %p69
        %p308 = pneg %p100
        %p309 = pneg %p97
        %s310 = sand.u32 %s87, 1
        %s311 = sand.u32 %s87, 1
        %s312 = smul.addr %s311, 64
        %s313 = scalar_lea.vmem [#allocation3], %s312
        %s314 = smul.u32 2, %s17
        %p315 = scmp.lt.s32.totalorder %s314, 1
        %s316 = scalar_select %p315, %s314, 1
        %s317 = smul.addr %s316, 4
        %s318 = scalar_lea.vmem %s0, %s317
        %s319 = smul.u32 2, %s17
        %s320 = smul.u32 8, %s18
        %s321 = smul.u32 2, %s17
        %s322 = smul.u32 8, %s18
        %v324 = vld [vmem:[%s318] sm:$0xf]
        %v325 = vld [vmem:[%s318 + $0x4] sm:$0xf]
        %v326 = vld [vmem:[%s291] sm:$0xff]
        %v327 = vld [vmem:[%s291 + $0x8] sm:$0xff]
        %v328 = vld [vmem:[%s291 + $0x10] sm:$0xff]
        %v329 = vld [vmem:[%s291 + $0x18] sm:$0xff]
        %v330 = vld [vmem:[%s291 + $0x20] sm:$0xff]
        %v331 = vld [vmem:[%s291 + $0x28] sm:$0xff]
        %v332 = vld [vmem:[%s291 + $0x30] sm:$0xff]
        %v333 = vld [vmem:[%s291 + $0x38] sm:$0xff]
        %v334 = vld [vmem:[%s291 + $0x40] sm:$0xff]
        %v335 = vld [vmem:[%s291 + $0x48] sm:$0xff]
        %v336 = vld [vmem:[%s291 + $0x50] sm:$0xff]
        %v337 = vld [vmem:[%s291 + $0x58] sm:$0xff]
        %v338 = vld [vmem:[%s291 + $0x60] sm:$0xff]
        %v339 = vld [vmem:[%s291 + $0x68] sm:$0xff]
        %v340 = vld [vmem:[%s291 + $0x70] sm:$0xff]
        %v341 = vld [vmem:[%s291 + $0x78] sm:$0xff]
        %v342 = vld [vmem:[%s291 + $0x80] sm:$0xff]
        %v343 = vld [vmem:[%s291 + $0x88] sm:$0xff]
        %v344 = vld [vmem:[%s291 + $0x90] sm:$0xff]
        %v345 = vld [vmem:[%s291 + $0x98] sm:$0xff]
        %v346 = vld [vmem:[%s291 + $0xa0] sm:$0xff]
        %v347 = vld [vmem:[%s291 + $0xa8] sm:$0xff]
        %v348 = vld [vmem:[%s291 + $0xb0] sm:$0xff]
        %v349 = vld [vmem:[%s291 + $0xb8] sm:$0xff]
        %v350 = vld [vmem:[%s291 + $0xc0] sm:$0xff]
        %v351 = vld [vmem:[%s291 + $0xc8] sm:$0xff]
        %v352 = vld [vmem:[%s291 + $0xd0] sm:$0xff]
        %v353 = vld [vmem:[%s291 + $0xd8] sm:$0xff]
        %v354 = vld [vmem:[%s291 + $0xe0] sm:$0xff]
        %v355 = vld [vmem:[%s291 + $0xe8] sm:$0xff]
        %v356 = vld [vmem:[%s291 + $0xf0] sm:$0xff]
        %v357 = vld [vmem:[%s291 + $0xf8] sm:$0xff]
        %v358 = vld [vmem:[%s291 + $0x100] sm:$0xff]
        %v359 = vld [vmem:[%s291 + $0x108] sm:$0xff]
        %v360 = vld [vmem:[%s291 + $0x110] sm:$0xff]
        %v361 = vld [vmem:[%s291 + $0x118] sm:$0xff]
        %v362 = vld [vmem:[%s291 + $0x120] sm:$0xff]
        %v363 = vld [vmem:[%s291 + $0x128] sm:$0xff]
        %v364 = vld [vmem:[%s291 + $0x130] sm:$0xff]
        %v365 = vld [vmem:[%s291 + $0x138] sm:$0xff]
        %v366 = vld [vmem:[%s291 + $0x140] sm:$0xff]
        %v367 = vld [vmem:[%s291 + $0x148] sm:$0xff]
        %v368 = vld [vmem:[%s291 + $0x150] sm:$0xff]
        %v369 = vld [vmem:[%s291 + $0x158] sm:$0xff]
        %v370 = vld [vmem:[%s291 + $0x160] sm:$0xff]
        %v371 = vld [vmem:[%s291 + $0x168] sm:$0xff]
        %v372 = vld [vmem:[%s291 + $0x170] sm:$0xff]
        %v373 = vld [vmem:[%s291 + $0x178] sm:$0xff]
        %v374 = vld [vmem:[%s291 + $0x180] sm:$0xff]
        %v375 = vld [vmem:[%s291 + $0x188] sm:$0xff]
        %v376 = vld [vmem:[%s291 + $0x190] sm:$0xff]
        %v377 = vld [vmem:[%s291 + $0x198] sm:$0xff]
        %v378 = vld [vmem:[%s291 + $0x1a0] sm:$0xff]
        %v379 = vld [vmem:[%s291 + $0x1a8] sm:$0xff]
        %v380 = vld [vmem:[%s291 + $0x1b0] sm:$0xff]
        %v381 = vld [vmem:[%s291 + $0x1b8] sm:$0xff]
        %v382 = vld [vmem:[%s291 + $0x1c0] sm:$0xff]
        %v383 = vld [vmem:[%s291 + $0x1c8] sm:$0xff]
        %v384 = vld [vmem:[%s291 + $0x1d0] sm:$0xff]
        %v385 = vld [vmem:[%s291 + $0x1d8] sm:$0xff]
        %v386 = vld [vmem:[%s291 + $0x1e0] sm:$0xff]
        %v387 = vld [vmem:[%s291 + $0x1e8] sm:$0xff]
        %v388 = vld [vmem:[%s291 + $0x1f0] sm:$0xff]
        %v389 = vld [vmem:[%s291 + $0x1f8] sm:$0xff]
        %v392 = vunpack.c.l.b16 %v324
        %v393 = vunpack.c.l.b16 %v325
        %v394 = vpack.c.b16 %v393, %v392
        %v460 = vunpack.c.l.b16 %v326
        %v461 = vunpack.c.h.b16 %v326
        %v462 = vunpack.c.l.b16 %v327
        %v463 = vunpack.c.h.b16 %v327
        %v464 = vunpack.c.l.b16 %v328
        %v465 = vunpack.c.h.b16 %v328
        %v466 = vunpack.c.l.b16 %v329
        %v467 = vunpack.c.h.b16 %v329
        %v468 = vunpack.c.l.b16 %v330
        %v469 = vunpack.c.h.b16 %v330
        %v470 = vunpack.c.l.b16 %v331
        %v471 = vunpack.c.h.b16 %v331
        %v472 = vunpack.c.l.b16 %v332
        %v473 = vunpack.c.h.b16 %v332
        %v474 = vunpack.c.l.b16 %v333
        %v475 = vunpack.c.h.b16 %v333
        %v476 = vunpack.c.l.b16 %v334
        %v477 = vunpack.c.h.b16 %v334
        %v478 = vunpack.c.l.b16 %v335
        %v479 = vunpack.c.h.b16 %v335
        %v480 = vunpack.c.l.b16 %v336
        %v481 = vunpack.c.h.b16 %v336
        %v482 = vunpack.c.l.b16 %v337
        %v483 = vunpack.c.h.b16 %v337
        %v484 = vunpack.c.l.b16 %v338
        %v485 = vunpack.c.h.b16 %v338
        %v486 = vunpack.c.l.b16 %v339
        %v487 = vunpack.c.h.b16 %v339
        %v488 = vunpack.c.l.b16 %v340
        %v489 = vunpack.c.h.b16 %v340
        %v490 = vunpack.c.l.b16 %v341
        %v491 = vunpack.c.h.b16 %v341
        %v492 = vunpack.c.l.b16 %v342
        %v493 = vunpack.c.h.b16 %v342
        %v494 = vunpack.c.l.b16 %v343
        %v495 = vunpack.c.h.b16 %v343
        %v496 = vunpack.c.l.b16 %v344
        %v497 = vunpack.c.h.b16 %v344
        %v498 = vunpack.c.l.b16 %v345
        %v499 = vunpack.c.h.b16 %v345
        %v500 = vunpack.c.l.b16 %v346
        %v501 = vunpack.c.h.b16 %v346
        %v502 = vunpack.c.l.b16 %v347
        %v503 = vunpack.c.h.b16 %v347
        %v504 = vunpack.c.l.b16 %v348
        %v505 = vunpack.c.h.b16 %v348
        %v506 = vunpack.c.l.b16 %v349
        %v507 = vunpack.c.h.b16 %v349
        %v508 = vunpack.c.l.b16 %v350
        %v509 = vunpack.c.h.b16 %v350
        %v510 = vunpack.c.l.b16 %v351
        %v511 = vunpack.c.h.b16 %v351
        %v512 = vunpack.c.l.b16 %v352
        %v513 = vunpack.c.h.b16 %v352
        %v514 = vunpack.c.l.b16 %v353
        %v515 = vunpack.c.h.b16 %v353
        %v516 = vunpack.c.l.b16 %v354
        %v517 = vunpack.c.h.b16 %v354
        %v518 = vunpack.c.l.b16 %v355
        %v519 = vunpack.c.h.b16 %v355
        %v520 = vunpack.c.l.b16 %v356
        %v521 = vunpack.c.h.b16 %v356
        %v522 = vunpack.c.l.b16 %v357
        %v523 = vunpack.c.h.b16 %v357
        %v524 = vunpack.c.l.b16 %v358
        %v525 = vunpack.c.h.b16 %v358
        %v526 = vunpack.c.l.b16 %v359
        %v527 = vunpack.c.h.b16 %v359
        %v528 = vunpack.c.l.b16 %v360
        %v529 = vunpack.c.h.b16 %v360
        %v530 = vunpack.c.l.b16 %v361
        %v531 = vunpack.c.h.b16 %v361
        %v532 = vunpack.c.l.b16 %v362
        %v533 = vunpack.c.h.b16 %v362
        %v534 = vunpack.c.l.b16 %v363
        %v535 = vunpack.c.h.b16 %v363
        %v536 = vunpack.c.l.b16 %v364
        %v537 = vunpack.c.h.b16 %v364
        %v538 = vunpack.c.l.b16 %v365
        %v539 = vunpack.c.h.b16 %v365
        %v540 = vunpack.c.l.b16 %v366
        %v541 = vunpack.c.h.b16 %v366
        %v542 = vunpack.c.l.b16 %v367
        %v543 = vunpack.c.h.b16 %v367
        %v544 = vunpack.c.l.b16 %v368
        %v545 = vunpack.c.h.b16 %v368
        %v546 = vunpack.c.l.b16 %v369
        %v547 = vunpack.c.h.b16 %v369
        %v548 = vunpack.c.l.b16 %v370
        %v549 = vunpack.c.h.b16 %v370
        %v550 = vunpack.c.l.b16 %v371
        %v551 = vunpack.c.h.b16 %v371
        %v552 = vunpack.c.l.b16 %v372
        %v553 = vunpack.c.h.b16 %v372
        %v554 = vunpack.c.l.b16 %v373
        %v555 = vunpack.c.h.b16 %v373
        %v556 = vunpack.c.l.b16 %v374
        %v557 = vunpack.c.h.b16 %v374
        %v558 = vunpack.c.l.b16 %v375
        %v559 = vunpack.c.h.b16 %v375
        %v560 = vunpack.c.l.b16 %v376
        %v561 = vunpack.c.h.b16 %v376
        %v562 = vunpack.c.l.b16 %v377
        %v563 = vunpack.c.h.b16 %v377
        %v564 = vunpack.c.l.b16 %v378
        %v565 = vunpack.c.h.b16 %v378
        %v566 = vunpack.c.l.b16 %v379
        %v567 = vunpack.c.h.b16 %v379
        %v568 = vunpack.c.l.b16 %v380
        %v569 = vunpack.c.h.b16 %v380
        %v570 = vunpack.c.l.b16 %v381
        %v571 = vunpack.c.h.b16 %v381
        %v572 = vunpack.c.l.b16 %v382
        %v573 = vunpack.c.h.b16 %v382
        %v574 = vunpack.c.l.b16 %v383
        %v575 = vunpack.c.h.b16 %v383
        %v576 = vunpack.c.l.b16 %v384
        %v577 = vunpack.c.h.b16 %v384
        %v578 = vunpack.c.l.b16 %v385
        %v579 = vunpack.c.h.b16 %v385
        %v580 = vunpack.c.l.b16 %v386
        %v581 = vunpack.c.h.b16 %v386
        %v582 = vunpack.c.l.b16 %v387
        %v583 = vunpack.c.h.b16 %v387
        %v584 = vunpack.c.l.b16 %v388
        %v585 = vunpack.c.h.b16 %v388
        %v586 = vunpack.c.l.b16 %v389
        %v587 = vunpack.c.h.b16 %v389
        %v588 = vpack.c.b16 %v468, %v460
        %v589 = vpack.c.b16 %v469, %v461
        %v590 = vpack.c.b16 %v470, %v462
        %v591 = vpack.c.b16 %v471, %v463
        %v592 = vpack.c.b16 %v472, %v464
        %v593 = vpack.c.b16 %v473, %v465
        %v594 = vpack.c.b16 %v474, %v466
        %v595 = vpack.c.b16 %v475, %v467
        %v596 = vpack.c.b16 %v484, %v476
        %v597 = vpack.c.b16 %v485, %v477
        %v598 = vpack.c.b16 %v486, %v478
        %v599 = vpack.c.b16 %v487, %v479
        %v600 = vpack.c.b16 %v488, %v480
        %v601 = vpack.c.b16 %v489, %v481
        %v602 = vpack.c.b16 %v490, %v482
        %v603 = vpack.c.b16 %v491, %v483
        %v604 = vpack.c.b16 %v500, %v492
        %v605 = vpack.c.b16 %v501, %v493
        %v606 = vpack.c.b16 %v502, %v494
        %v607 = vpack.c.b16 %v503, %v495
        %v608 = vpack.c.b16 %v504, %v496
        %v609 = vpack.c.b16 %v505, %v497
        %v610 = vpack.c.b16 %v506, %v498
        %v611 = vpack.c.b16 %v507, %v499
        %v612 = vpack.c.b16 %v516, %v508
        %v613 = vpack.c.b16 %v517, %v509
        %v614 = vpack.c.b16 %v518, %v510
        %v615 = vpack.c.b16 %v519, %v511
        %v616 = vpack.c.b16 %v520, %v512
        %v617 = vpack.c.b16 %v521, %v513
        %v618 = vpack.c.b16 %v522, %v514
        %v619 = vpack.c.b16 %v523, %v515
        %v620 = vpack.c.b16 %v532, %v524
        %v621 = vpack.c.b16 %v533, %v525
        %v622 = vpack.c.b16 %v534, %v526
        %v623 = vpack.c.b16 %v535, %v527
        %v624 = vpack.c.b16 %v536, %v528
        %v625 = vpack.c.b16 %v537, %v529
        %v626 = vpack.c.b16 %v538, %v530
        %v627 = vpack.c.b16 %v539, %v531
        %v628 = vpack.c.b16 %v548, %v540
        %v629 = vpack.c.b16 %v549, %v541
        %v630 = vpack.c.b16 %v550, %v542
        %v631 = vpack.c.b16 %v551, %v543
        %v632 = vpack.c.b16 %v552, %v544
        %v633 = vpack.c.b16 %v553, %v545
        %v634 = vpack.c.b16 %v554, %v546
        %v635 = vpack.c.b16 %v555, %v547
        %v636 = vpack.c.b16 %v564, %v556
        %v637 = vpack.c.b16 %v565, %v557
        %v638 = vpack.c.b16 %v566, %v558
        %v639 = vpack.c.b16 %v567, %v559
        %v640 = vpack.c.b16 %v568, %v560
        %v641 = vpack.c.b16 %v569, %v561
        %v642 = vpack.c.b16 %v570, %v562
        %v643 = vpack.c.b16 %v571, %v563
        %v644 = vpack.c.b16 %v580, %v572
        %v645 = vpack.c.b16 %v581, %v573
        %v646 = vpack.c.b16 %v582, %v574
        %v647 = vpack.c.b16 %v583, %v575
        %v648 = vpack.c.b16 %v584, %v576
        %v649 = vpack.c.b16 %v585, %v577
        %v650 = vpack.c.b16 %v586, %v578
        %v651 = vpack.c.b16 %v587, %v579
        %716 = vmatprep.subr.bf16.mxu0 %v645
        %717 = vmatpush1.bf16.msra.mxu0 %v644
        %718 = vmatprep.subr.bf16.mxu0 %v637
        %719 = vmatpush1.bf16.msra.mxu0 %v636
        %720 = vmatprep.subr.bf16.mxu0 %v629
        %721 = vmatpush1.bf16.msra.mxu0 %v628
        %722 = vmatprep.subr.bf16.mxu0 %v621
        %723 = vmatpush1.bf16.msra.mxu0 %v620
        %724 = vmatprep.subr.bf16.mxu0 %v613
        %725 = vmatpush1.bf16.msra.mxu0 %v612
        %726 = vmatprep.subr.bf16.mxu0 %v605
        %727 = vmatpush1.bf16.msra.mxu0 %v604
        %728 = vmatprep.subr.bf16.mxu0 %v597
        %729 = vmatpush1.bf16.msra.mxu0 %v596
        %730 = vmatprep.subr.bf16.mxu0 %v589
        %731 = vmatpush1.bf16.msra.mxu0 %v588
        %732 = vmatprep.subr.bf16.mxu0 0
        %733 = vmatpush2.bf16.msra.mxu0 0
        %734 = vmatprep.subr.bf16.mxu0 0
        %735 = vmatpush2.bf16.msra.mxu0 0
        %736 = vmatprep.subr.bf16.mxu0 0
        %737 = vmatpush2.bf16.msra.mxu0 0
        %738 = vmatprep.subr.bf16.mxu0 0
        %739 = vmatpush2.bf16.msra.mxu0 0
        %740 = vmatprep.subr.bf16.mxu0 0
        %741 = vmatpush2.bf16.msra.mxu0 0
        %742 = vmatprep.subr.bf16.mxu0 0
        %743 = vmatpush2.bf16.msra.mxu0 0
        %744 = vmatprep.subr.bf16.mxu0 0
        %745 = vmatpush2.bf16.msra.mxu0 0
        %746 = vmatprep.subr.bf16.mxu0 0
        %747 = vmatpush2.bf16.msra.mxu0 0
        %748 = vmatprep.mubr.bf16.mxu0 0
        %749 = vmatmul.mubr.bf16.gmra.mxu0 %v394
        %v750 = vpop.f32.mrf.mxu0
        %v751 = vadd.f32 0.0, %v750
        %v752 = vpop.f32.mrf.mxu0
        %v753 = vadd.f32 0.0, %v752
        %v754 = vpop.f32.mrf.mxu0
        %v755 = vadd.f32 0.0, %v754
        %v756 = vpop.f32.mrf.mxu0
        %v757 = vadd.f32 0.0, %v756
        %758 = vdwg.mxu0
        %759 = vmatprep.subr.bf16.mxu0 %v647
        %760 = vmatpush1.bf16.msra.mxu0 %v646
        %761 = vmatprep.subr.bf16.mxu0 %v639
        %762 = vmatpush1.bf16.msra.mxu0 %v638
        %763 = vmatprep.subr.bf16.mxu0 %v631
        %764 = vmatpush1.bf16.msra.mxu0 %v630
        %765 = vmatprep.subr.bf16.mxu0 %v623
        %766 = vmatpush1.bf16.msra.mxu0 %v622
        %767 = vmatprep.subr.bf16.mxu0 %v615
        %768 = vmatpush1.bf16.msra.mxu0 %v614
        %769 = vmatprep.subr.bf16.mxu0 %v607
        %770 = vmatpush1.bf16.msra.mxu0 %v606
        %771 = vmatprep.subr.bf16.mxu0 %v599
        %772 = vmatpush1.bf16.msra.mxu0 %v598
        %773 = vmatprep.subr.bf16.mxu0 %v591
        %774 = vmatpush1.bf16.msra.mxu0 %v590
        %775 = vmatprep.subr.bf16.mxu0 0
        %776 = vmatpush2.bf16.msra.mxu0 0
        %777 = vmatprep.subr.bf16.mxu0 0
        %778 = vmatpush2.bf16.msra.mxu0 0
        %779 = vmatprep.subr.bf16.mxu0 0
        %780 = vmatpush2.bf16.msra.mxu0 0
        %781 = vmatprep.subr.bf16.mxu0 0
        %782 = vmatpush2.bf16.msra.mxu0 0
        %783 = vmatprep.subr.bf16.mxu0 0
        %784 = vmatpush2.bf16.msra.mxu0 0
        %785 = vmatprep.subr.bf16.mxu0 0
        %786 = vmatpush2.bf16.msra.mxu0 0
        %787 = vmatprep.subr.bf16.mxu0 0
        %788 = vmatpush2.bf16.msra.mxu0 0
        %789 = vmatprep.subr.bf16.mxu0 0
        %790 = vmatpush2.bf16.msra.mxu0 0
        %791 = vmatprep.mubr.bf16.mxu0 0
        %792 = vmatmul.mubr.bf16.gmra.mxu0 %v394
        %v793 = vpop.f32.mrf.mxu0
        %v794 = vadd.f32 0.0, %v793
        %v795 = vpop.f32.mrf.mxu0
        %v796 = vadd.f32 0.0, %v795
        %v797 = vpop.f32.mrf.mxu0
        %v798 = vadd.f32 0.0, %v797
        %v799 = vpop.f32.mrf.mxu0
        %v800 = vadd.f32 0.0, %v799
        %801 = vdwg.mxu0
        %802 = vmatprep.subr.bf16.mxu0 %v649
        %803 = vmatpush1.bf16.msra.mxu0 %v648
        %804 = vmatprep.subr.bf16.mxu0 %v641
        %805 = vmatpush1.bf16.msra.mxu0 %v640
        %806 = vmatprep.subr.bf16.mxu0 %v633
        %807 = vmatpush1.bf16.msra.mxu0 %v632
        %808 = vmatprep.subr.bf16.mxu0 %v625
        %809 = vmatpush1.bf16.msra.mxu0 %v624
        %810 = vmatprep.subr.bf16.mxu0 %v617
        %811 = vmatpush1.bf16.msra.mxu0 %v616
        %812 = vmatprep.subr.bf16.mxu0 %v609
        %813 = vmatpush1.bf16.msra.mxu0 %v608
        %814 = vmatprep.subr.bf16.mxu0 %v601
        %815 = vmatpush1.bf16.msra.mxu0 %v600
        %816 = vmatprep.subr.bf16.mxu0 %v593
        %817 = vmatpush1.bf16.msra.mxu0 %v592
        %818 = vmatprep.subr.bf16.mxu0 0
        %819 = vmatpush2.bf16.msra.mxu0 0
        %820 = vmatprep.subr.bf16.mxu0 0
        %821 = vmatpush2.bf16.msra.mxu0 0
        %822 = vmatprep.subr.bf16.mxu0 0
        %823 = vmatpush2.bf16.msra.mxu0 0
        %824 = vmatprep.subr.bf16.mxu0 0
        %825 = vmatpush2.bf16.msra.mxu0 0
        %826 = vmatprep.subr.bf16.mxu0 0
        %827 = vmatpush2.bf16.msra.mxu0 0
        %828 = vmatprep.subr.bf16.mxu0 0
        %829 = vmatpush2.bf16.msra.mxu0 0
        %830 = vmatprep.subr.bf16.mxu0 0
        %831 = vmatpush2.bf16.msra.mxu0 0
        %832 = vmatprep.subr.bf16.mxu0 0
        %833 = vmatpush2.bf16.msra.mxu0 0
        %834 = vmatprep.mubr.bf16.mxu0 0
        %835 = vmatmul.mubr.bf16.gmra.mxu0 %v394
        %v836 = vpop.f32.mrf.mxu0
        %v837 = vadd.f32 0.0, %v836
        %v838 = vpop.f32.mrf.mxu0
        %v839 = vadd.f32 0.0, %v838
        %v840 = vpop.f32.mrf.mxu0
        %v841 = vadd.f32 0.0, %v840
        %v842 = vpop.f32.mrf.mxu0
        %v843 = vadd.f32 0.0, %v842
        %844 = vdwg.mxu0
        %845 = vmatprep.subr.bf16.mxu0 %v651
        %846 = vmatpush1.bf16.msra.mxu0 %v650
        %847 = vmatprep.subr.bf16.mxu0 %v643
        %848 = vmatpush1.bf16.msra.mxu0 %v642
        %849 = vmatprep.subr.bf16.mxu0 %v635
        %850 = vmatpush1.bf16.msra.mxu0 %v634
        %851 = vmatprep.subr.bf16.mxu0 %v627
        %852 = vmatpush1.bf16.msra.mxu0 %v626
        %853 = vmatprep.subr.bf16.mxu0 %v619
        %854 = vmatpush1.bf16.msra.mxu0 %v618
        %855 = vmatprep.subr.bf16.mxu0 %v611
        %856 = vmatpush1.bf16.msra.mxu0 %v610
        %857 = vmatprep.subr.bf16.mxu0 %v603
        %858 = vmatpush1.bf16.msra.mxu0 %v602
        %859 = vmatprep.subr.bf16.mxu0 %v595
        %860 = vmatpush1.bf16.msra.mxu0 %v594
        %861 = vmatprep.subr.bf16.mxu0 0
        %862 = vmatpush2.bf16.msra.mxu0 0
        %863 = vmatprep.subr.bf16.mxu0 0
        %864 = vmatpush2.bf16.msra.mxu0 0
        %865 = vmatprep.subr.bf16.mxu0 0
        %866 = vmatpush2.bf16.msra.mxu0 0
        %867 = vmatprep.subr.bf16.mxu0 0
        %868 = vmatpush2.bf16.msra.mxu0 0
        %869 = vmatprep.subr.bf16.mxu0 0
        %870 = vmatpush2.bf16.msra.mxu0 0
        %871 = vmatprep.subr.bf16.mxu0 0
        %872 = vmatpush2.bf16.msra.mxu0 0
        %873 = vmatprep.subr.bf16.mxu0 0
        %874 = vmatpush2.bf16.msra.mxu0 0
        %875 = vmatprep.subr.bf16.mxu0 0
        %876 = vmatpush2.bf16.msra.mxu0 0
        %877 = vmatprep.mubr.bf16.mxu0 0
        %878 = vmatmul.mubr.bf16.gmra.mxu0 %v394
        %v879 = vpop.f32.mrf.mxu0
        %v880 = vadd.f32 0.0, %v879
        %v881 = vpop.f32.mrf.mxu0
        %v882 = vadd.f32 0.0, %v881
        %v883 = vpop.f32.mrf.mxu0
        %v884 = vadd.f32 0.0, %v883
        %v885 = vpop.f32.mrf.mxu0
        %v886 = vadd.f32 0.0, %v885
        %887 = vdwg.mxu0
        %vm888 = vcmp.ge.f32.partialorder %v751, 0.0
        %vm889 = vcmp.ge.f32.partialorder %v753, 0.0
        %vm890 = vcmp.ge.f32.partialorder %v794, 0.0
        %vm891 = vcmp.ge.f32.partialorder %v796, 0.0
        %vm892 = vcmp.ge.f32.partialorder %v837, 0.0
        %vm893 = vcmp.ge.f32.partialorder %v839, 0.0
        %vm894 = vcmp.ge.f32.partialorder %v880, 0.0
        %vm895 = vcmp.ge.f32.partialorder %v882, 0.0
        %vm896 = vcmp.ge.f32.partialorder %v755, 0.0
        %vm897 = vcmp.ge.f32.partialorder %v757, 0.0
        %vm898 = vcmp.ge.f32.partialorder %v798, 0.0
        %vm899 = vcmp.ge.f32.partialorder %v800, 0.0
        %vm900 = vcmp.ge.f32.partialorder %v841, 0.0
        %vm901 = vcmp.ge.f32.partialorder %v843, 0.0
        %vm902 = vcmp.ge.f32.partialorder %v884, 0.0
        %vm903 = vcmp.ge.f32.partialorder %v886, 0.0
        %v904 = vmul.f32 %v751, 0.2
        %v905 = vmul.f32 %v753, 0.2
        %v906 = vmul.f32 %v794, 0.2
        %v907 = vmul.f32 %v796, 0.2
        %v908 = vmul.f32 %v837, 0.2
        %v909 = vmul.f32 %v839, 0.2
        %v910 = vmul.f32 %v880, 0.2
        %v911 = vmul.f32 %v882, 0.2
        %v912 = vmul.f32 %v755, 0.2
        %v913 = vmul.f32 %v757, 0.2
        %v914 = vmul.f32 %v798, 0.2
        %v915 = vmul.f32 %v800, 0.2
        %v916 = vmul.f32 %v841, 0.2
        %v917 = vmul.f32 %v843, 0.2
        %v918 = vmul.f32 %v884, 0.2
        %v919 = vmul.f32 %v886, 0.2
        %v920 = vsel %vm888, %v751, %v904
        %v921 = vsel %vm889, %v753, %v905
        %v922 = vsel %vm890, %v794, %v906
        %v923 = vsel %vm891, %v796, %v907
        %v924 = vsel %vm892, %v837, %v908
        %v925 = vsel %vm893, %v839, %v909
        %v926 = vsel %vm894, %v880, %v910
        %v927 = vsel %vm895, %v882, %v911
        %v928 = vsel %vm896, %v755, %v912
        %v929 = vsel %vm897, %v757, %v913
        %v930 = vsel %vm898, %v798, %v914
        %v931 = vsel %vm899, %v800, %v915
        %v932 = vsel %vm900, %v841, %v916
        %v933 = vsel %vm901, %v843, %v917
        %v934 = vsel %vm902, %v884, %v918
        %v935 = vsel %vm903, %v886, %v919
        %v936 = vpack.c.bf16 %v928, %v920
        %v937 = vpack.c.bf16 %v929, %v921
        %v938 = vpack.c.bf16 %v930, %v922
        %v939 = vpack.c.bf16 %v931, %v923
        %v940 = vpack.c.bf16 %v932, %v924
        %v941 = vpack.c.bf16 %v933, %v925
        %v942 = vpack.c.bf16 %v934, %v926
        %v943 = vpack.c.bf16 %v935, %v927
        %v952 = vunpack.c.l.b16 %v936
        %v953 = vunpack.c.l.b16 %v937
        %v954 = vunpack.c.l.b16 %v938
        %v955 = vunpack.c.l.b16 %v939
        %v956 = vunpack.c.l.b16 %v940
        %v957 = vunpack.c.l.b16 %v941
        %v958 = vunpack.c.l.b16 %v942
        %v959 = vunpack.c.l.b16 %v943
        %v960 = vunpack.c.h.b16 %v936
        %v961 = vunpack.c.h.b16 %v937
        %v962 = vunpack.c.h.b16 %v938
        %v963 = vunpack.c.h.b16 %v939
        %v964 = vunpack.c.h.b16 %v940
        %v965 = vunpack.c.h.b16 %v941
        %v966 = vunpack.c.h.b16 %v942
        %v967 = vunpack.c.h.b16 %v943
        %v968 = vpack.c.b16 %v953, %v952
        %v969 = vpack.c.b16 %v955, %v954
        %v970 = vpack.c.b16 %v957, %v956
        %v971 = vpack.c.b16 %v959, %v958
        %v972 = vpack.c.b16 %v961, %v960
        %v973 = vpack.c.b16 %v963, %v962
        %v974 = vpack.c.b16 %v965, %v964
        %v975 = vpack.c.b16 %v967, %v966
        %984 = vst [vmem:[%s313] sm:$0xff] %v968
        %985 = vst [vmem:[%s313 + $0x8] sm:$0xff] %v969
        %986 = vst [vmem:[%s313 + $0x10] sm:$0xff] %v970
        %987 = vst [vmem:[%s313 + $0x18] sm:$0xff] %v971
        %988 = vst [vmem:[%s313 + $0x20] sm:$0xff] %v972
        %989 = vst [vmem:[%s313 + $0x28] sm:$0xff] %v973
        %990 = vst [vmem:[%s313 + $0x30] sm:$0xff] %v974
        %991 = vst [vmem:[%s313 + $0x38] sm:$0xff] %v975
        %s992 = sand.u32 %s87, 1
        %s993 = sand.u32 %s87, 1
        %s994 = smul.addr %s993, 64
        %s995 = scalar_lea.vmem [#allocation3], %s994
        // Predicated region
        $region52: #{discriminator_forward.7} parent=46 // pred_check
          %p996 = pneg %p97
        $region53: #{discriminator_forward.7} parent=46 // pred_check_branch
          %998 = sbr.rel (%p996) target = $region55
        $region54: #{discriminator_forward.7} parent=46 // pred_region
          %s999 = smul.u32 2, %s17
          %s1000 = smul.u32 8, %s18
          %s1001 = smul.addr %s999, 16
          %s1002 = sadd.s32 %s1000, %s1001
          %s1003 = smul.addr %s1002, 4
          %s1004 = scalar_lea.vmem %s2, %s1003
          // Predicated region
          $region56: #{discriminator_forward.7} parent=54 // pred_check
            _
          $region57: #{discriminator_forward.7} parent=54 // pred_check_branch
            %1006 = sbr.rel (0) target = $region59
          $region58: #{discriminator_forward.7} parent=54 // pred_region
            // Predicated region
            $region60: #{discriminator_forward.7} parent=58 // pred_check
              _
            $region61: #{discriminator_forward.7} parent=58 // pred_check_branch
              %1008 = sbr.rel (0) target = $region63
            $region62: #{discriminator_forward.7} parent=58 // pred_region
              loop: start=0, step=1, limit=1
              $region64: #{discriminator_forward.7} parent=62 // loop_pre_header
                _
              $region65: #{discriminator_forward.7} parent=62 // loop_header
                %s1010 = sphi 0, %s1014
                %p1011 = scmp.ge.s32.totalorder %s1010, 1
                %s1015 = sphi %s995, %s995
                %s1016 = sphi %s1004, %s1004
              $region66: #{discriminator_forward.7} parent=62 // loop_header_branch
                %1013 = sbr.rel (%p1011) target = $region70
              $region67: #{discriminator_forward.7} parent=62 // loop_body
                %v1017 = vld [vmem:[%s1015] sm:$0xff]
                %1018 = vst [vmem:[%s1016] sm:$0xff] %v1017
                %v1019 = vld [vmem:[%s1015 + $0x8] sm:$0xff]
                %1020 = vst [vmem:[%s1016 + $0x8] sm:$0xff] %v1019
                %v1021 = vld [vmem:[%s1015 + $0x10] sm:$0xff]
                %1022 = vst [vmem:[%s1016 + $0x10] sm:$0xff] %v1021
                %v1023 = vld [vmem:[%s1015 + $0x18] sm:$0xff]
                %1024 = vst [vmem:[%s1016 + $0x18] sm:$0xff] %v1023
                %v1025 = vld [vmem:[%s1015 + $0x20] sm:$0xff]
                %1026 = vst [vmem:[%s1016 + $0x40] sm:$0xff] %v1025
                %v1027 = vld [vmem:[%s1015 + $0x28] sm:$0xff]
                %1028 = vst [vmem:[%s1016 + $0x48] sm:$0xff] %v1027
                %v1029 = vld [vmem:[%s1015 + $0x30] sm:$0xff]
                %1030 = vst [vmem:[%s1016 + $0x50] sm:$0xff] %v1029
                %v1031 = vld [vmem:[%s1015 + $0x38] sm:$0xff]
                %1032 = vst [vmem:[%s1016 + $0x58] sm:$0xff] %v1031
              $region68: #{discriminator_forward.7} parent=62 // loop_footer
                %s1014 = sadd.s32 1, %s1010
              $region69: #{discriminator_forward.7} parent=62 // loop_footer_branch
                %1009 = sbr.rel target = $region65
              $region70: #{discriminator_forward.7} parent=62 // loop_exit
                _
            $region63: #{discriminator_forward.7} parent=58 // pred_fallthru
              _
            // Predicated region
            $region71: #{discriminator_forward.7} parent=58 // pred_check
              _
            $region72: #{discriminator_forward.7} parent=58 // pred_check_branch
              %1034 = sbr.rel target = $region74
            $region73: #{discriminator_forward.7} parent=58 // pred_region
              _
            $region74: #{discriminator_forward.7} parent=58 // pred_fallthru
              _
          $region59: #{discriminator_forward.7} parent=54 // pred_fallthru
            _
          %1035 = vnop
        $region55: #{discriminator_forward.7} parent=46 // pred_fallthru
          _
      $region47: #{discriminator_forward.7} parent=5 // pred_fallthru
        _
      %p1036 = scmp.le.s32.totalorder 2, %s8
      // Predicated region
      $region75: #{discriminator_forward.7} parent=5 // pred_check
        %p1037 = pneg %p1036
      $region76: #{discriminator_forward.7} parent=5 // pred_check_branch
        %1039 = sbr.rel (%p1037) target = $region78
      $region77: #{discriminator_forward.7} parent=5 // pred_region
        %s1040 = ssub.s32 %s8, 2
        // Predicated region
        $region79: #{discriminator_forward.7} parent=77 // pred_check
          %p1041 = pneg %p103
        $region80: #{discriminator_forward.7} parent=77 // pred_check_branch
          %1043 = sbr.rel (%p1041) target = $region82
        $region81: #{discriminator_forward.7} parent=77 // pred_region
          %s1044 = sand.u32 %s88, 1
          %s1045 = sand.u32 %s88, 1
          %s1046 = smul.addr %s1045, 64
          %s1047 = scalar_lea.vmem [#allocation3], %s1046
        $region82: #{discriminator_forward.7} parent=77 // pred_fallthru
          _
      $region78: #{discriminator_forward.7} parent=5 // pred_fallthru
        _
    $region6: #{discriminator_forward.7} parent=1 // loop_footer
      %s12 = sadd.s32 1, %s8
    $region7: #{discriminator_forward.7} parent=1 // loop_footer_branch
      %7 = sbr.rel target = $region3
    $region8: #{discriminator_forward.7} parent=1 // loop_exit
      _

// kernel: discriminator_forward.8
$region0: #{discriminator_forward.8}
  #allocation0 [shape = 'u32[]', space=smem, size = 0x4, offset = 0x4, fixed_abs, tag = 'smem constant byte address 0x4 - core index']
  #allocation1 [shape = 'u32[144,128]{1,0:T(1,128)}', space=vmem, size = 0x12000, scoped, tag = 'internal scratch']
  %s0 = inlined_call_operand.vmem [shape: bf16[32,256], index: 0, kind: input, shape index: {}]
  %s1 = inlined_call_operand.vmem [shape: bf16[256,512], index: 1, kind: input, shape index: {}]
  %s2 = inlined_call_operand.vmem [shape: bf16[32,512], index: 2, kind: output, shape index: {}]
  %s3 = sld [smem:[#allocation0]]
  $region113: #{discriminator_forward.8} parent=0
    _
  %s5 = ssub.s32 1, %s3
  %s6 = scalar_select 0, %s5, %s3
  $region1: #{discriminator_forward.8} parent=0
    #allocation2 [shape = 'u8[262144]{0}', space=vmem, size = 0x40000, scoped, tag = 'input window, operand 1']
    #allocation3 [shape = 'u8[32768]{0}', space=vmem, size = 0x8000, scoped, tag = 'output window, operand 0']
    loop: start=0, step=1, limit=4
    $region2: #{discriminator_forward.8} parent=1 // loop_pre_header
      _
    $region3: #{discriminator_forward.8} parent=1 // loop_header
      %s8 = sphi 0, %s12
      %p9 = scmp.ge.s32.totalorder %s8, 4
      %s15 = sphi 0, %s27
      %s16 = sphi 0, %s23
      %s17 = sphi 0, %s15
      %s18 = sphi 0, %s16
      %s19 = sphi 0, %s17
      %s20 = sphi 0, %s18
      %s30 = sphi 0, %s32
      %s33 = sphi 0, %s30
      %s34 = sphi 0, %s33
      %s50 = sphi 0, %s34
      %s56 = sphi 0, %s58
      %s59 = sphi 0, %s56
      %s60 = sphi 0, %s59
      %s76 = sphi 0, %s60
      %s84 = sphi 0, %s86
      %s87 = sphi 0, %s84
      %s88 = sphi 0, %s87
      %s104 = sphi 0, %s88
    $region4: #{discriminator_forward.8} parent=1 // loop_header_branch
      %11 = sbr.rel (%p9) target = $region8
    $region5: #{discriminator_forward.8} parent=1 // loop_body
      %s13 = ssub.s32 %s8, 1
      %s14 = ssub.s32 %s8, 2
      %s21 = sadd.s32 1, %s16
      %p22 = scmp.ge.s32.totalorder %s21, 2
      %s23 = scalar_select %p22, 0, %s21
      %s24 = sadd.s32 1, %s15
      %s25 = scalar_select %p22, %s24, %s15
      %p26 = scmp.ge.s32.totalorder %s25, 1
      %s27 = scalar_select %p26, 0, %s25
      %s28 = ssub.s32 %s15, %s27
      %p29 = scmp.eq.s32.totalorder %s28, 0
      %s31 = sadd.s32 %s30, 1
      %s32 = scalar_select %p29, %s30, %s31
      %p35 = pneg %p29
      %p36 = scmp.eq.s32.totalorder %s8, 1
      %p37 = por %p35, %p36
      %p38 = scmp.ne.s32.totalorder %s30, %s33
      %p39 = scmp.eq.s32.totalorder %s8, 0
      %p40 = por %p38, %p39
      %p41 = scmp.ne.s32.totalorder %s30, %s33
      %p42 = scmp.eq.s32.totalorder %s13, 1
      %p43 = por %p41, %p42
      %p44 = scmp.ne.s32.totalorder %s33, %s34
      %p45 = scmp.eq.s32.totalorder %s13, 0
      %p46 = por %p44, %p45
      %p47 = scmp.ne.s32.totalorder %s33, %s34
      %p48 = scmp.eq.s32.totalorder %s14, 1
      %p49 = por %p47, %p48
      %p51 = scmp.ne.s32.totalorder %s34, %s50
      %p52 = scmp.eq.s32.totalorder %s14, 0
      %p53 = por %p51, %p52
      %s54 = ssub.s32 %s16, %s23
      %p55 = scmp.eq.s32.totalorder %s54, 0
      %s57 = sadd.s32 %s56, 1
      %s58 = scalar_select %p55, %s56, %s57
      %p61 = pneg %p55
      %p62 = scmp.eq.s32.totalorder %s8, 1
      %p63 = por %p61, %p62
      %p64 = scmp.ne.s32.totalorder %s56, %s59
      %p65 = scmp.eq.s32.totalorder %s8, 0
      %p66 = por %p64, %p65
      %p67 = scmp.ne.s32.totalorder %s56, %s59
      %p68 = scmp.eq.s32.totalorder %s13, 1
      %p69 = por %p67, %p68
      %p70 = scmp.ne.s32.totalorder %s59, %s60
      %p71 = scmp.eq.s32.totalorder %s13, 0
      %p72 = por %p70, %p71
      %p73 = scmp.ne.s32.totalorder %s59, %s60
      %p74 = scmp.eq.s32.totalorder %s14, 1
      %p75 = por %p73, %p74
      %p77 = scmp.ne.s32.totalorder %s60, %s76
      %p78 = scmp.eq.s32.totalorder %s14, 0
      %p79 = por %p77, %p78
      %s80 = ssub.s32 %s15, %s27
      %s81 = ssub.s32 %s16, %s23
      %s82 = sor.u32 %s80, %s81
      %p83 = scmp.eq.s32.totalorder %s82, 0
      %s85 = sadd.s32 %s84, 1
      %s86 = scalar_select %p83, %s84, %s85
      %p89 = pneg %p83
      %p90 = scmp.eq.s32.totalorder %s8, 1
      %p91 = por %p89, %p90
      %p92 = scmp.ne.s32.totalorder %s84, %s87
      %p93 = scmp.eq.s32.totalorder %s8, 0
      %p94 = por %p92, %p93
      %p95 = scmp.ne.s32.totalorder %s84, %s87
      %p96 = scmp.eq.s32.totalorder %s13, 1
      %p97 = por %p95, %p96
      %p98 = scmp.ne.s32.totalorder %s87, %s88
      %p99 = scmp.eq.s32.totalorder %s13, 0
      %p100 = por %p98, %p99
      %p101 = scmp.ne.s32.totalorder %s87, %s88
      %p102 = scmp.eq.s32.totalorder %s14, 1
      %p103 = por %p101, %p102
      %p105 = scmp.ne.s32.totalorder %s88, %s104
      %p106 = scmp.eq.s32.totalorder %s14, 0
      %p107 = por %p105, %p106
      %p108 = scmp.le.s32.totalorder 1, %s8
      %p109 = scmp.lt.s32.totalorder %s8, 3
      %p110 = pnand %p108, %p109
      %p111 = pneg %p110
      // Predicated region
      $region9: #{discriminator_forward.8} parent=5 // pred_check
        _
      $region10: #{discriminator_forward.8} parent=5 // pred_check_branch
        %113 = sbr.rel (%p110) target = $region12
      $region11: #{discriminator_forward.8} parent=5 // pred_region
        %s114 = ssub.s32 %s8, 1
        // Predicated region
        $region13: #{discriminator_forward.8} parent=11 // pred_check
          %p115 = pneg %p46
        $region14: #{discriminator_forward.8} parent=11 // pred_check_branch
          %117 = sbr.rel (%p115) target = $region16
        $region15: #{discriminator_forward.8} parent=11 // pred_region
          %s118 = smul.u32 4, %s17
          %p119 = scmp.lt.s32.totalorder %s118, 3
          %s120 = scalar_select %p119, %s118, 3
          %s121 = smul.addr %s120, 2
          %s122 = smul.addr %s121, 4
          %s123 = scalar_lea.vmem %s0, %s122
          %s124 = smul.u32 4, %s17
        $region16: #{discriminator_forward.8} parent=11 // pred_fallthru
          _
      $region12: #{discriminator_forward.8} parent=5 // pred_fallthru
        _
      %p125 = scmp.lt.s32.totalorder %s8, 2
      // Predicated region
      $region17: #{discriminator_forward.8} parent=5 // pred_check
        %p126 = pneg %p125
      $region18: #{discriminator_forward.8} parent=5 // pred_check_branch
        %128 = sbr.rel (%p126) target = $region20
      $region19: #{discriminator_forward.8} parent=5 // pred_region
        // Predicated region
        $region21: #{discriminator_forward.8} parent=19 // pred_check
          %p129 = pneg %p66
        $region22: #{discriminator_forward.8} parent=19 // pred_check_branch
          %131 = sbr.rel (%p129) target = $region24
        $region23: #{discriminator_forward.8} parent=19 // pred_region
          %s132 = sand.u32 %s56, 1
          %s133 = sand.u32 %s56, 1
          %s134 = smul.addr %s133, 256
          %s135 = scalar_lea.vmem [#allocation2], %s134
          %s136 = smul.u32 2, %s16
          %s137 = smul.addr %s136, 4
          %s138 = scalar_lea.vmem %s1, %s137
          // Predicated region
          $region25: #{discriminator_forward.8} parent=23 // pred_check
            _
          $region26: #{discriminator_forward.8} parent=23 // pred_check_branch
            %140 = sbr.rel (0) target = $region28
          $region27: #{discriminator_forward.8} parent=23 // pred_region
            // Predicated region
            $region29: #{discriminator_forward.8} parent=27 // pred_check
              _
            $region30: #{discriminator_forward.8} parent=27 // pred_check_branch
              %142 = sbr.rel (0) target = $region32
            $region31: #{discriminator_forward.8} parent=27 // pred_region
              // Predicated region
              $region44: #{discriminator_forward.8} parent=31 // pred_check
                _
              $region45: #{discriminator_forward.8} parent=31 // pred_check_branch
                %220 = sbr.rel (0) target = $region47
              $region46: #{discriminator_forward.8} parent=31 // pred_region
                loop: start=0, step=1, limit=1
                $region48: #{discriminator_forward.8} parent=46 // loop_pre_header
                  _
                $region49: #{discriminator_forward.8} parent=46 // loop_header
                  %s222 = sphi 0, %s226
                  %p223 = scmp.ge.s32.totalorder %s222, 1
                  %s227 = sphi %s138, %s138
                  %s228 = sphi %s135, %s135
                $region50: #{discriminator_forward.8} parent=46 // loop_header_branch
                  %225 = sbr.rel (%p223) target = $region54
                $region51: #{discriminator_forward.8} parent=46 // loop_body
                  %v229 = vld [vmem:[%s227] sm:$0xff]
                  %230 = vst [vmem:[%s228] sm:$0xff] %v229
                  %v231 = vld [vmem:[%s227 + $0x10] sm:$0xff]
                  %232 = vst [vmem:[%s228 + $0x8] sm:$0xff] %v231
                  %v233 = vld [vmem:[%s227 + $0x20] sm:$0xff]
                  %234 = vst [vmem:[%s228 + $0x10] sm:$0xff] %v233
                  %v235 = vld [vmem:[%s227 + $0x30] sm:$0xff]
                  %236 = vst [vmem:[%s228 + $0x18] sm:$0xff] %v235
                  %v237 = vld [vmem:[%s227 + $0x40] sm:$0xff]
                  %238 = vst [vmem:[%s228 + $0x20] sm:$0xff] %v237
                  %v239 = vld [vmem:[%s227 + $0x50] sm:$0xff]
                  %240 = vst [vmem:[%s228 + $0x28] sm:$0xff] %v239
                  %v241 = vld [vmem:[%s227 + $0x60] sm:$0xff]
                  %242 = vst [vmem:[%s228 + $0x30] sm:$0xff] %v241
                  %v243 = vld [vmem:[%s227 + $0x70] sm:$0xff]
                  %244 = vst [vmem:[%s228 + $0x38] sm:$0xff] %v243
                  %v245 = vld [vmem:[%s227 + $0x80] sm:$0xff]
                  %246 = vst [vmem:[%s228 + $0x40] sm:$0xff] %v245
                  %v247 = vld [vmem:[%s227 + $0x90] sm:$0xff]
                  %248 = vst [vmem:[%s228 + $0x48] sm:$0xff] %v247
                  %v249 = vld [vmem:[%s227 + $0xa0] sm:$0xff]
                  %250 = vst [vmem:[%s228 + $0x50] sm:$0xff] %v249
                  %v251 = vld [vmem:[%s227 + $0xb0] sm:$0xff]
                  %252 = vst [vmem:[%s228 + $0x58] sm:$0xff] %v251
                  %v253 = vld [vmem:[%s227 + $0xc0] sm:$0xff]
                  %254 = vst [vmem:[%s228 + $0x60] sm:$0xff] %v253
                  %v255 = vld [vmem:[%s227 + $0xd0] sm:$0xff]
                  %256 = vst [vmem:[%s228 + $0x68] sm:$0xff] %v255
                  %v257 = vld [vmem:[%s227 + $0xe0] sm:$0xff]
                  %258 = vst [vmem:[%s228 + $0x70] sm:$0xff] %v257
                  %v259 = vld [vmem:[%s227 + $0xf0] sm:$0xff]
                  %260 = vst [vmem:[%s228 + $0x78] sm:$0xff] %v259
                  %v261 = vld [vmem:[%s227 + $0x100] sm:$0xff]
                  %262 = vst [vmem:[%s228 + $0x80] sm:$0xff] %v261
                  %v263 = vld [vmem:[%s227 + $0x110] sm:$0xff]
                  %264 = vst [vmem:[%s228 + $0x88] sm:$0xff] %v263
                  %v265 = vld [vmem:[%s227 + $0x120] sm:$0xff]
                  %266 = vst [vmem:[%s228 + $0x90] sm:$0xff] %v265
                  %v267 = vld [vmem:[%s227 + $0x130] sm:$0xff]
                  %268 = vst [vmem:[%s228 + $0x98] sm:$0xff] %v267
                  %v269 = vld [vmem:[%s227 + $0x140] sm:$0xff]
                  %270 = vst [vmem:[%s228 + $0xa0] sm:$0xff] %v269
                  %v271 = vld [vmem:[%s227 + $0x150] sm:$0xff]
                  %272 = vst [vmem:[%s228 + $0xa8] sm:$0xff] %v271
                  %v273 = vld [vmem:[%s227 + $0x160] sm:$0xff]
                  %274 = vst [vmem:[%s228 + $0xb0] sm:$0xff] %v273
                  %v275 = vld [vmem:[%s227 + $0x170] sm:$0xff]
                  %276 = vst [vmem:[%s228 + $0xb8] sm:$0xff] %v275
                  %v277 = vld [vmem:[%s227 + $0x180] sm:$0xff]
                  %278 = vst [vmem:[%s228 + $0xc0] sm:$0xff] %v277
                  %v279 = vld [vmem:[%s227 + $0x190] sm:$0xff]
                  %280 = vst [vmem:[%s228 + $0xc8] sm:$0xff] %v279
                  %v281 = vld [vmem:[%s227 + $0x1a0] sm:$0xff]
                  %282 = vst [vmem:[%s228 + $0xd0] sm:$0xff] %v281
                  %v283 = vld [vmem:[%s227 + $0x1b0] sm:$0xff]
                  %284 = vst [vmem:[%s228 + $0xd8] sm:$0xff] %v283
                  %v285 = vld [vmem:[%s227 + $0x1c0] sm:$0xff]
                  %286 = vst [vmem:[%s228 + $0xe0] sm:$0xff] %v285
                  %v287 = vld [vmem:[%s227 + $0x1d0] sm:$0xff]
                  %288 = vst [vmem:[%s228 + $0xe8] sm:$0xff] %v287
                  %v289 = vld [vmem:[%s227 + $0x1e0] sm:$0xff]
                  %290 = vst [vmem:[%s228 + $0xf0] sm:$0xff] %v289
                  %v291 = vld [vmem:[%s227 + $0x1f0] sm:$0xff]
                  %292 = vst [vmem:[%s228 + $0xf8] sm:$0xff] %v291
                $region52: #{discriminator_forward.8} parent=46 // loop_footer
                  %s226 = sadd.s32 1, %s222
                $region53: #{discriminator_forward.8} parent=46 // loop_footer_branch
                  %221 = sbr.rel target = $region49
                $region54: #{discriminator_forward.8} parent=46 // loop_exit
                  _
              $region47: #{discriminator_forward.8} parent=31 // pred_fallthru
                _
              // Predicated region
              $region55: #{discriminator_forward.8} parent=31 // pred_check
                _
              $region56: #{discriminator_forward.8} parent=31 // pred_check_branch
                %294 = sbr.rel target = $region58
              $region57: #{discriminator_forward.8} parent=31 // pred_region
                _
              $region58: #{discriminator_forward.8} parent=31 // pred_fallthru
                _
            $region32: #{discriminator_forward.8} parent=27 // pred_fallthru
              _
            // Predicated region
            $region33: #{discriminator_forward.8} parent=27 // pred_check
              _
            $region34: #{discriminator_forward.8} parent=27 // pred_check_branch
              %144 = sbr.rel target = $region36
            $region35: #{discriminator_forward.8} parent=27 // pred_region
              %s146 = ssub.s32 256, 1
              loop: start=0, step=1, limit=1
              $region37: #{discriminator_forward.8} parent=35 // loop_pre_header
                _
              $region38: #{discriminator_forward.8} parent=35 // loop_header
                %s148 = sphi 0, %s152
                %p149 = scmp.ge.s32.totalorder %s148, 1
                %s153 = sphi %s138, %s138
                %s154 = sphi %s135, %s135
              $region39: #{discriminator_forward.8} parent=35 // loop_header_branch
                %151 = sbr.rel (%p149) target = $region43
              $region40: #{discriminator_forward.8} parent=35 // loop_body
                %v155 = vld [vmem:[%s153] sm:%s146]
                %156 = vst [vmem:[%s154] sm:%s146] %v155
                %v157 = vld [vmem:[%s153 + $0x10] sm:%s146]
                %158 = vst [vmem:[%s154 + $0x8] sm:%s146] %v157
                %v159 = vld [vmem:[%s153 + $0x20] sm:%s146]
                %160 = vst [vmem:[%s154 + $0x10] sm:%s146] %v159
                %v161 = vld [vmem:[%s153 + $0x30] sm:%s146]
                %162 = vst [vmem:[%s154 + $0x18] sm:%s146] %v161
                %v163 = vld [vmem:[%s153 + $0x40] sm:%s146]
                %164 = vst [vmem:[%s154 + $0x20] sm:%s146] %v163
                %v165 = vld [vmem:[%s153 + $0x50] sm:%s146]
                %166 = vst [vmem:[%s154 + $0x28] sm:%s146] %v165
                %v167 = vld [vmem:[%s153 + $0x60] sm:%s146]
                %168 = vst [vmem:[%s154 + $0x30] sm:%s146] %v167
                %v169 = vld [vmem:[%s153 + $0x70] sm:%s146]
                %170 = vst [vmem:[%s154 + $0x38] sm:%s146] %v169
                %v171 = vld [vmem:[%s153 + $0x80] sm:%s146]
                %172 = vst [vmem:[%s154 + $0x40] sm:%s146] %v171
                %v173 = vld [vmem:[%s153 + $0x90] sm:%s146]
                %174 = vst [vmem:[%s154 + $0x48] sm:%s146] %v173
                %v175 = vld [vmem:[%s153 + $0xa0] sm:%s146]
                %176 = vst [vmem:[%s154 + $0x50] sm:%s146] %v175
                %v177 = vld [vmem:[%s153 + $0xb0] sm:%s146]
                %178 = vst [vmem:[%s154 + $0x58] sm:%s146] %v177
                %v179 = vld [vmem:[%s153 + $0xc0] sm:%s146]
                %180 = vst [vmem:[%s154 + $0x60] sm:%s146] %v179
                %v181 = vld [vmem:[%s153 + $0xd0] sm:%s146]
                %182 = vst [vmem:[%s154 + $0x68] sm:%s146] %v181
                %v183 = vld [vmem:[%s153 + $0xe0] sm:%s146]
                %184 = vst [vmem:[%s154 + $0x70] sm:%s146] %v183
                %v185 = vld [vmem:[%s153 + $0xf0] sm:%s146]
                %186 = vst [vmem:[%s154 + $0x78] sm:%s146] %v185
                %v187 = vld [vmem:[%s153 + $0x100] sm:%s146]
                %188 = vst [vmem:[%s154 + $0x80] sm:%s146] %v187
                %v189 = vld [vmem:[%s153 + $0x110] sm:%s146]
                %190 = vst [vmem:[%s154 + $0x88] sm:%s146] %v189
                %v191 = vld [vmem:[%s153 + $0x120] sm:%s146]
                %192 = vst [vmem:[%s154 + $0x90] sm:%s146] %v191
                %v193 = vld [vmem:[%s153 + $0x130] sm:%s146]
                %194 = vst [vmem:[%s154 + $0x98] sm:%s146] %v193
                %v195 = vld [vmem:[%s153 + $0x140] sm:%s146]
                %196 = vst [vmem:[%s154 + $0xa0] sm:%s146] %v195
                %v197 = vld [vmem:[%s153 + $0x150] sm:%s146]
                %198 = vst [vmem:[%s154 + $0xa8] sm:%s146] %v197
                %v199 = vld [vmem:[%s153 + $0x160] sm:%s146]
                %200 = vst [vmem:[%s154 + $0xb0] sm:%s146] %v199
                %v201 = vld [vmem:[%s153 + $0x170] sm:%s146]
                %202 = vst [vmem:[%s154 + $0xb8] sm:%s146] %v201
                %v203 = vld [vmem:[%s153 + $0x180] sm:%s146]
                %204 = vst [vmem:[%s154 + $0xc0] sm:%s146] %v203
                %v205 = vld [vmem:[%s153 + $0x190] sm:%s146]
                %206 = vst [vmem:[%s154 + $0xc8] sm:%s146] %v205
                %v207 = vld [vmem:[%s153 + $0x1a0] sm:%s146]
                %208 = vst [vmem:[%s154 + $0xd0] sm:%s146] %v207
                %v209 = vld [vmem:[%s153 + $0x1b0] sm:%s146]
                %210 = vst [vmem:[%s154 + $0xd8] sm:%s146] %v209
                %v211 = vld [vmem:[%s153 + $0x1c0] sm:%s146]
                %212 = vst [vmem:[%s154 + $0xe0] sm:%s146] %v211
                %v213 = vld [vmem:[%s153 + $0x1d0] sm:%s146]
                %214 = vst [vmem:[%s154 + $0xe8] sm:%s146] %v213
                %v215 = vld [vmem:[%s153 + $0x1e0] sm:%s146]
                %216 = vst [vmem:[%s154 + $0xf0] sm:%s146] %v215
                %v217 = vld [vmem:[%s153 + $0x1f0] sm:%s146]
                %218 = vst [vmem:[%s154 + $0xf8] sm:%s146] %v217
              $region41: #{discriminator_forward.8} parent=35 // loop_footer
                %s152 = sadd.s32 1, %s148
              $region42: #{discriminator_forward.8} parent=35 // loop_footer_branch
                %147 = sbr.rel target = $region38
              $region43: #{discriminator_forward.8} parent=35 // loop_exit
                _
            $region36: #{discriminator_forward.8} parent=27 // pred_fallthru
              _
          $region28: #{discriminator_forward.8} parent=23 // pred_fallthru
            _
          %295 = vnop
        $region24: #{discriminator_forward.8} parent=19 // pred_fallthru
          _
      $region20: #{discriminator_forward.8} parent=5 // pred_fallthru
        _
      %p296 = scmp.le.s32.totalorder 1, %s8
      %p297 = scmp.lt.s32.totalorder %s8, 3
      %p298 = pnand %p296, %p297
      %p299 = pneg %p298
      // Predicated region
      $region59: #{discriminator_forward.8} parent=5 // pred_check
        _
      $region60: #{discriminator_forward.8} parent=5 // pred_check_branch
        %301 = sbr.rel (%p298) target = $region62
      $region61: #{discriminator_forward.8} parent=5 // pred_region
        %s302 = ssub.s32 %s8, 1
        %s303 = sand.u32 %s59, 1
        %s304 = sand.u32 %s59, 1
        %s305 = smul.addr %s304, 256
        %s306 = scalar_lea.vmem [#allocation2], %s305
        // Predicated region
        $region63: #{discriminator_forward.8} parent=61 // pred_check
          %p307 = pneg %p72
        $region64: #{discriminator_forward.8} parent=61 // pred_check_branch
          %309 = sbr.rel (%p307) target = $region66
        $region65: #{discriminator_forward.8} parent=61 // pred_region
          _
        $region66: #{discriminator_forward.8} parent=61 // pred_fallthru
          _
        %s310 = smul.u32 4, %s17
        %p311 = scmp.lt.s32.totalorder %s310, 3
        %s312 = scalar_select %p311, %s310, 3
        %s313 = smul.addr %s312, 2
        %s314 = smul.addr %s313, 4
        %s315 = scalar_lea.vmem %s0, %s314
        %p316 = pneg %p46
        %p317 = pneg %p43
        %s318 = sand.u32 %s59, 1
        %s319 = sand.u32 %s59, 1
        %s320 = smul.addr %s319, 256
        %s321 = scalar_lea.vmem [#allocation2], %s320
        %p322 = pneg %p72
        %p323 = pneg %p69
        %p324 = pneg %p100
        %p325 = pneg %p97
        %s326 = sand.u32 %s87, 1
        %s327 = sand.u32 %s87, 1
        %s328 = smul.addr %s327, 32
        %s329 = scalar_lea.vmem [#allocation3], %s328
        %s330 = smul.u32 4, %s17
        %p331 = scmp.lt.s32.totalorder %s330, 3
        %s332 = scalar_select %p331, %s330, 3
        %s333 = smul.addr %s332, 2
        %s334 = smul.addr %s333, 4
        %s335 = scalar_lea.vmem %s0, %s334
        %s336 = smul.u32 4, %s17
        %s337 = smul.u32 2, %s18
        %s338 = smul.u32 4, %s17
        %s339 = smul.u32 2, %s18
        %v340 = vld [vmem:[%s335] sm:$0xff]
        %v341 = vld [vmem:[%s335 + $0x8] sm:$0xff]
        %v342 = vld [vmem:[%s335 + $0x10] sm:$0xff]
        %v343 = vld [vmem:[%s335 + $0x18] sm:$0xff]
        %v344 = vld [vmem:[%s306] sm:$0xff]
        %v345 = vld [vmem:[%s306 + $0x8] sm:$0xff]
        %v346 = vld [vmem:[%s306 + $0x10] sm:$0xff]
        %v347 = vld [vmem:[%s306 + $0x18] sm:$0xff]
        %v348 = vld [vmem:[%s306 + $0x20] sm:$0xff]
        %v349 = vld [vmem:[%s306 + $0x28] sm:$0xff]
        %v350 = vld [vmem:[%s306 + $0x30] sm:$0xff]
        %v351 = vld [vmem:[%s306 + $0x38] sm:$0xff]
        %v352 = vld [vmem:[%s306 + $0x40] sm:$0xff]
        %v353 = vld [vmem:[%s306 + $0x48] sm:$0xff]
        %v354 = vld [vmem:[%s306 + $0x50] sm:$0xff]
        %v355 = vld [vmem:[%s306 + $0x58] sm:$0xff]
        %v356 = vld [vmem:[%s306 + $0x60] sm:$0xff]
        %v357 = vld [vmem:[%s306 + $0x68] sm:$0xff]
        %v358 = vld [vmem:[%s306 + $0x70] sm:$0xff]
        %v359 = vld [vmem:[%s306 + $0x78] sm:$0xff]
        %v360 = vld [vmem:[%s306 + $0x80] sm:$0xff]
        %v361 = vld [vmem:[%s306 + $0x88] sm:$0xff]
        %v362 = vld [vmem:[%s306 + $0x90] sm:$0xff]
        %v363 = vld [vmem:[%s306 + $0x98] sm:$0xff]
        %v364 = vld [vmem:[%s306 + $0xa0] sm:$0xff]
        %v365 = vld [vmem:[%s306 + $0xa8] sm:$0xff]
        %v366 = vld [vmem:[%s306 + $0xb0] sm:$0xff]
        %v367 = vld [vmem:[%s306 + $0xb8] sm:$0xff]
        %v368 = vld [vmem:[%s306 + $0xc0] sm:$0xff]
        %v369 = vld [vmem:[%s306 + $0xc8] sm:$0xff]
        %v370 = vld [vmem:[%s306 + $0xd0] sm:$0xff]
        %v371 = vld [vmem:[%s306 + $0xd8] sm:$0xff]
        %v372 = vld [vmem:[%s306 + $0xe0] sm:$0xff]
        %v373 = vld [vmem:[%s306 + $0xe8] sm:$0xff]
        %v374 = vld [vmem:[%s306 + $0xf0] sm:$0xff]
        %v375 = vld [vmem:[%s306 + $0xf8] sm:$0xff]
        %v380 = vunpack.c.l.b16 %v340
        %v381 = vunpack.c.h.b16 %v340
        %v382 = vunpack.c.l.b16 %v341
        %v383 = vunpack.c.h.b16 %v341
        %v384 = vunpack.c.l.b16 %v342
        %v385 = vunpack.c.h.b16 %v342
        %v386 = vunpack.c.l.b16 %v343
        %v387 = vunpack.c.h.b16 %v343
        %v388 = vpack.c.b16 %v382, %v380
        %v389 = vpack.c.b16 %v383, %v381
        %v390 = vpack.c.b16 %v386, %v384
        %v391 = vpack.c.b16 %v387, %v385
        %v428 = vunpack.c.l.b16 %v344
        %v429 = vunpack.c.h.b16 %v344
        %v430 = vunpack.c.l.b16 %v345
        %v431 = vunpack.c.h.b16 %v345
        %v432 = vunpack.c.l.b16 %v346
        %v433 = vunpack.c.h.b16 %v346
        %v434 = vunpack.c.l.b16 %v347
        %v435 = vunpack.c.h.b16 %v347
        %v436 = vunpack.c.l.b16 %v348
        %v437 = vunpack.c.h.b16 %v348
        %v438 = vunpack.c.l.b16 %v349
        %v439 = vunpack.c.h.b16 %v349
        %v440 = vunpack.c.l.b16 %v350
        %v441 = vunpack.c.h.b16 %v350
        %v442 = vunpack.c.l.b16 %v351
        %v443 = vunpack.c.h.b16 %v351
        %v444 = vunpack.c.l.b16 %v352
        %v445 = vunpack.c.h.b16 %v352
        %v446 = vunpack.c.l.b16 %v353
        %v447 = vunpack.c.h.b16 %v353
        %v448 = vunpack.c.l.b16 %v354
        %v449 = vunpack.c.h.b16 %v354
        %v450 = vunpack.c.l.b16 %v355
        %v451 = vunpack.c.h.b16 %v355
        %v452 = vunpack.c.l.b16 %v356
        %v453 = vunpack.c.h.b16 %v356
        %v454 = vunpack.c.l.b16 %v357
        %v455 = vunpack.c.h.b16 %v357
        %v456 = vunpack.c.l.b16 %v358
        %v457 = vunpack.c.h.b16 %v358
        %v458 = vunpack.c.l.b16 %v359
        %v459 = vunpack.c.h.b16 %v359
        %v460 = vunpack.c.l.b16 %v360
        %v461 = vunpack.c.h.b16 %v360
        %v462 = vunpack.c.l.b16 %v361
        %v463 = vunpack.c.h.b16 %v361
        %v464 = vunpack.c.l.b16 %v362
        %v465 = vunpack.c.h.b16 %v362
        %v466 = vunpack.c.l.b16 %v363
        %v467 = vunpack.c.h.b16 %v363
        %v468 = vunpack.c.l.b16 %v364
        %v469 = vunpack.c.h.b16 %v364
        %v470 = vunpack.c.l.b16 %v365
        %v471 = vunpack.c.h.b16 %v365
        %v472 = vunpack.c.l.b16 %v366
        %v473 = vunpack.c.h.b16 %v366
        %v474 = vunpack.c.l.b16 %v367
        %v475 = vunpack.c.h.b16 %v367
        %v476 = vunpack.c.l.b16 %v368
        %v477 = vunpack.c.h.b16 %v368
        %v478 = vunpack.c.l.b16 %v369
        %v479 = vunpack.c.h.b16 %v369
        %v480 = vunpack.c.l.b16 %v370
        %v481 = vunpack.c.h.b16 %v370
        %v482 = vunpack.c.l.b16 %v371
        %v483 = vunpack.c.h.b16 %v371
        %v484 = vunpack.c.l.b16 %v372
        %v485 = vunpack.c.h.b16 %v372
        %v486 = vunpack.c.l.b16 %v373
        %v487 = vunpack.c.h.b16 %v373
        %v488 = vunpack.c.l.b16 %v374
        %v489 = vunpack.c.h.b16 %v374
        %v490 = vunpack.c.l.b16 %v375
        %v491 = vunpack.c.h.b16 %v375
        %v492 = vpack.c.b16 %v430, %v428
        %v493 = vpack.c.b16 %v431, %v429
        %v494 = vpack.c.b16 %v434, %v432
        %v495 = vpack.c.b16 %v435, %v433
        %v496 = vpack.c.b16 %v438, %v436
        %v497 = vpack.c.b16 %v439, %v437
        %v498 = vpack.c.b16 %v442, %v440
        %v499 = vpack.c.b16 %v443, %v441
        %v500 = vpack.c.b16 %v446, %v444
        %v501 = vpack.c.b16 %v447, %v445
        %v502 = vpack.c.b16 %v450, %v448
        %v503 = vpack.c.b16 %v451, %v449
        %v504 = vpack.c.b16 %v454, %v452
        %v505 = vpack.c.b16 %v455, %v453
        %v506 = vpack.c.b16 %v458, %v456
        %v507 = vpack.c.b16 %v459, %v457
        %v508 = vpack.c.b16 %v462, %v460
        %v509 = vpack.c.b16 %v463, %v461
        %v510 = vpack.c.b16 %v466, %v464
        %v511 = vpack.c.b16 %v467, %v465
        %v512 = vpack.c.b16 %v470, %v468
        %v513 = vpack.c.b16 %v471, %v469
        %v514 = vpack.c.b16 %v474, %v472
        %v515 = vpack.c.b16 %v475, %v473
        %v516 = vpack.c.b16 %v478, %v476
        %v517 = vpack.c.b16 %v479, %v477
        %v518 = vpack.c.b16 %v482, %v480
        %v519 = vpack.c.b16 %v483, %v481
        %v520 = vpack.c.b16 %v486, %v484
        %v521 = vpack.c.b16 %v487, %v485
        %v522 = vpack.c.b16 %v490, %v488
        %v523 = vpack.c.b16 %v491, %v489
        %556 = vmatprep.subr.bf16.mxu0 %v507
        %557 = vmatpush1.bf16.msra.mxu0 %v506
        %558 = vmatprep.subr.bf16.mxu0 %v505
        %559 = vmatpush1.bf16.msra.mxu0 %v504
        %560 = vmatprep.subr.bf16.mxu0 %v503
        %561 = vmatpush1.bf16.msra.mxu0 %v502
        %562 = vmatprep.subr.bf16.mxu0 %v501
        %563 = vmatpush1.bf16.msra.mxu0 %v500
        %564 = vmatprep.subr.bf16.mxu0 %v499
        %565 = vmatpush1.bf16.msra.mxu0 %v498
        %566 = vmatprep.subr.bf16.mxu0 %v497
        %567 = vmatpush1.bf16.msra.mxu0 %v496
        %568 = vmatprep.subr.bf16.mxu0 %v495
        %569 = vmatpush1.bf16.msra.mxu0 %v494
        %570 = vmatprep.subr.bf16.mxu0 %v493
        %571 = vmatpush1.bf16.msra.mxu0 %v492
        %572 = vmatprep.subr.bf16.mxu0 %v523
        %573 = vmatpush2.bf16.msra.mxu0 %v522
        %574 = vmatprep.subr.bf16.mxu0 %v521
        %575 = vmatpush2.bf16.msra.mxu0 %v520
        %576 = vmatprep.subr.bf16.mxu0 %v519
        %577 = vmatpush2.bf16.msra.mxu0 %v518
        %578 = vmatprep.subr.bf16.mxu0 %v517
        %579 = vmatpush2.bf16.msra.mxu0 %v516
        %580 = vmatprep.subr.bf16.mxu0 %v515
        %581 = vmatpush2.bf16.msra.mxu0 %v514
        %582 = vmatprep.subr.bf16.mxu0 %v513
        %583 = vmatpush2.bf16.msra.mxu0 %v512
        %584 = vmatprep.subr.bf16.mxu0 %v511
        %585 = vmatpush2.bf16.msra.mxu0 %v510
        %586 = vmatprep.subr.bf16.mxu0 %v509
        %587 = vmatpush2.bf16.msra.mxu0 %v508
        %588 = vmatprep.mubr.bf16.mxu0 %v389
        %589 = vmatmul.mubr.bf16.gmra.mxu0 %v388
        %v590 = vpop.f32.mrf.mxu0
        %v591 = vadd.f32 0.0, %v590
        %v592 = vpop.f32.mrf.mxu0
        %v593 = vadd.f32 0.0, %v592
        %v594 = vpop.f32.mrf.mxu0
        %v595 = vadd.f32 0.0, %v594
        %v596 = vpop.f32.mrf.mxu0
        %v597 = vadd.f32 0.0, %v596
        %598 = vmatprep.mubr.bf16.mxu0 %v391
        %599 = vmatmul.mubr.bf16.gmra.mxu0 %v390
        %v600 = vpop.f32.mrf.mxu0
        %v601 = vadd.f32 0.0, %v600
        %v602 = vpop.f32.mrf.mxu0
        %v603 = vadd.f32 0.0, %v602
        %v604 = vpop.f32.mrf.mxu0
        %v605 = vadd.f32 0.0, %v604
        %v606 = vpop.f32.mrf.mxu0
        %v607 = vadd.f32 0.0, %v606
        %608 = vdwg.mxu0
        %vm609 = vcmp.ge.f32.partialorder %v591, 0.0
        %vm610 = vcmp.ge.f32.partialorder %v593, 0.0
        %vm611 = vcmp.ge.f32.partialorder %v595, 0.0
        %vm612 = vcmp.ge.f32.partialorder %v597, 0.0
        %vm613 = vcmp.ge.f32.partialorder %v601, 0.0
        %vm614 = vcmp.ge.f32.partialorder %v603, 0.0
        %vm615 = vcmp.ge.f32.partialorder %v605, 0.0
        %vm616 = vcmp.ge.f32.partialorder %v607, 0.0
        %v617 = vmul.f32 %v591, 0.2
        %v618 = vmul.f32 %v593, 0.2
        %v619 = vmul.f32 %v595, 0.2
        %v620 = vmul.f32 %v597, 0.2
        %v621 = vmul.f32 %v601, 0.2
        %v622 = vmul.f32 %v603, 0.2
        %v623 = vmul.f32 %v605, 0.2
        %v624 = vmul.f32 %v607, 0.2
        %v625 = vsel %vm609, %v591, %v617
        %v626 = vsel %vm610, %v593, %v618
        %v627 = vsel %vm611, %v595, %v619
        %v628 = vsel %vm612, %v597, %v620
        %v629 = vsel %vm613, %v601, %v621
        %v630 = vsel %vm614, %v603, %v622
        %v631 = vsel %vm615, %v605, %v623
        %v632 = vsel %vm616, %v607, %v624
        %v633 = vpack.c.bf16 %v627, %v625
        %v634 = vpack.c.bf16 %v628, %v626
        %v635 = vpack.c.bf16 %v631, %v629
        %v636 = vpack.c.bf16 %v632, %v630
        %v641 = vunpack.c.l.b16 %v633
        %v642 = vunpack.c.l.b16 %v634
        %v643 = vunpack.c.h.b16 %v633
        %v644 = vunpack.c.h.b16 %v634
        %v645 = vunpack.c.l.b16 %v635
        %v646 = vunpack.c.l.b16 %v636
        %v647 = vunpack.c.h.b16 %v635
        %v648 = vunpack.c.h.b16 %v636
        %v649 = vpack.c.b16 %v642, %v641
        %v650 = vpack.c.b16 %v644, %v643
        %v651 = vpack.c.b16 %v646, %v645
        %v652 = vpack.c.b16 %v648, %v647
        %657 = vst [vmem:[%s329] sm:$0xff] %v649
        %658 = vst [vmem:[%s329 + $0x8] sm:$0xff] %v650
        %659 = vst [vmem:[%s329 + $0x10] sm:$0xff] %v651
        %660 = vst [vmem:[%s329 + $0x18] sm:$0xff] %v652
        %s661 = sand.u32 %s87, 1
        %s662 = sand.u32 %s87, 1
        %s663 = smul.addr %s662, 32
        %s664 = scalar_lea.vmem [#allocation3], %s663
        // Predicated region
        $region67: #{discriminator_forward.8} parent=61 // pred_check
          %p665 = pneg %p97
        $region68: #{discriminator_forward.8} parent=61 // pred_check_branch
          %667 = sbr.rel (%p665) target = $region70
        $region69: #{discriminator_forward.8} parent=61 // pred_region
          %s668 = smul.u32 4, %s17
          %s669 = smul.u32 2, %s18
          %s670 = smul.addr %s668, 4
          %s671 = sadd.s32 %s669, %s670
          %s672 = smul.addr %s671, 4
          %s673 = scalar_lea.vmem %s2, %s672
          // Predicated region
          $region71: #{discriminator_forward.8} parent=69 // pred_check
            _
          $region72: #{discriminator_forward.8} parent=69 // pred_check_branch
            %675 = sbr.rel (0) target = $region74
          $region73: #{discriminator_forward.8} parent=69 // pred_region
            // Predicated region
            $region75: #{discriminator_forward.8} parent=73 // pred_check
              _
            $region76: #{discriminator_forward.8} parent=73 // pred_check_branch
              %677 = sbr.rel (0) target = $region78
            $region77: #{discriminator_forward.8} parent=73 // pred_region
              // Predicated region
              $region90: #{discriminator_forward.8} parent=77 // pred_check
                _
              $region91: #{discriminator_forward.8} parent=77 // pred_check_branch
                %699 = sbr.rel (0) target = $region93
              $region92: #{discriminator_forward.8} parent=77 // pred_region
                loop: start=0, step=1, limit=1
                $region94: #{discriminator_forward.8} parent=92 // loop_pre_header
                  _
                $region95: #{discriminator_forward.8} parent=92 // loop_header
                  %s701 = sphi 0, %s705
                  %p702 = scmp.ge.s32.totalorder %s701, 1
                  %s706 = sphi %s664, %s664
                  %s707 = sphi %s673, %s673
                $region96: #{discriminator_forward.8} parent=92 // loop_header_branch
                  %704 = sbr.rel (%p702) target = $region100
                $region97: #{discriminator_forward.8} parent=92 // loop_body
                  %v708 = vld [vmem:[%s706] sm:$0xff]
                  %709 = vst [vmem:[%s707] sm:$0xff] %v708
                  %v710 = vld [vmem:[%s706 + $0x8] sm:$0xff]
                  %711 = vst [vmem:[%s707 + $0x10] sm:$0xff] %v710
                  %v712 = vld [vmem:[%s706 + $0x10] sm:$0xff]
                  %713 = vst [vmem:[%s707 + $0x20] sm:$0xff] %v712
                  %v714 = vld [vmem:[%s706 + $0x18] sm:$0xff]
                  %715 = vst [vmem:[%s707 + $0x30] sm:$0xff] %v714
                $region98: #{discriminator_forward.8} parent=92 // loop_footer
                  %s705 = sadd.s32 1, %s701
                $region99: #{discriminator_forward.8} parent=92 // loop_footer_branch
                  %700 = sbr.rel target = $region95
                $region100: #{discriminator_forward.8} parent=92 // loop_exit
                  _
              $region93: #{discriminator_forward.8} parent=77 // pred_fallthru
                _
              // Predicated region
              $region101: #{discriminator_forward.8} parent=77 // pred_check
                _
              $region102: #{discriminator_forward.8} parent=77 // pred_check_branch
                %717 = sbr.rel target = $region104
              $region103: #{discriminator_forward.8} parent=77 // pred_region
                _
              $region104: #{discriminator_forward.8} parent=77 // pred_fallthru
                _
            $region78: #{discriminator_forward.8} parent=73 // pred_fallthru
              _
            // Predicated region
            $region79: #{discriminator_forward.8} parent=73 // pred_check
              _
            $region80: #{discriminator_forward.8} parent=73 // pred_check_branch
              %679 = sbr.rel target = $region82
            $region81: #{discriminator_forward.8} parent=73 // pred_region
              %s681 = ssub.s32 256, 1
              loop: start=0, step=1, limit=1
              $region83: #{discriminator_forward.8} parent=81 // loop_pre_header
                _
              $region84: #{discriminator_forward.8} parent=81 // loop_header
                %s683 = sphi 0, %s687
                %p684 = scmp.ge.s32.totalorder %s683, 1
                %s688 = sphi %s664, %s664
                %s689 = sphi %s673, %s673
              $region85: #{discriminator_forward.8} parent=81 // loop_header_branch
                %686 = sbr.rel (%p684) target = $region89
              $region86: #{discriminator_forward.8} parent=81 // loop_body
                %v690 = vld [vmem:[%s688] sm:%s681]
                %691 = vst [vmem:[%s689] sm:%s681] %v690
                %v692 = vld [vmem:[%s688 + $0x8] sm:%s681]
                %693 = vst [vmem:[%s689 + $0x10] sm:%s681] %v692
                %v694 = vld [vmem:[%s688 + $0x10] sm:%s681]
                %695 = vst [vmem:[%s689 + $0x20] sm:%s681] %v694
                %v696 = vld [vmem:[%s688 + $0x18] sm:%s681]
                %697 = vst [vmem:[%s689 + $0x30] sm:%s681] %v696
              $region87: #{discriminator_forward.8} parent=81 // loop_footer
                %s687 = sadd.s32 1, %s683
              $region88: #{discriminator_forward.8} parent=81 // loop_footer_branch
                %682 = sbr.rel target = $region84
              $region89: #{discriminator_forward.8} parent=81 // loop_exit
                _
            $region82: #{discriminator_forward.8} parent=73 // pred_fallthru
              _
          $region74: #{discriminator_forward.8} parent=69 // pred_fallthru
            _
          %718 = vnop
        $region70: #{discriminator_forward.8} parent=61 // pred_fallthru
          _
      $region62: #{discriminator_forward.8} parent=5 // pred_fallthru
        _
      %p719 = scmp.le.s32.totalorder 2, %s8
      // Predicated region
      $region105: #{discriminator_forward.8} parent=5 // pred_check
        %p720 = pneg %p719
      $region106: #{discriminator_forward.8} parent=5 // pred_check_branch
        %722 = sbr.rel (%p720) target = $region108
      $region107: #{discriminator_forward.8} parent=5 // pred_region
        %s723 = ssub.s32 %s8, 2
        // Predicated region
        $region109: #{discriminator_forward.8} parent=107 // pred_check
          %p724 = pneg %p103
        $region110: #{discriminator_forward.8} parent=107 // pred_check_branch
          %726 = sbr.rel (%p724) target = $region112
        $region111: #{discriminator_forward.8} parent=107 // pred_region
          %s727 = sand.u32 %s88, 1
          %s728 = sand.u32 %s88, 1
          %s729 = smul.addr %s728, 32
          %s730 = scalar_lea.vmem [#allocation3], %s729
        $region112: #{discriminator_forward.8} parent=107 // pred_fallthru
          _
      $region108: #{discriminator_forward.8} parent=5 // pred_fallthru
        _
    $region6: #{discriminator_forward.8} parent=1 // loop_footer
      %s12 = sadd.s32 1, %s8
    $region7: #{discriminator_forward.8} parent=1 // loop_footer_branch
      %7 = sbr.rel target = $region3
    $region8: #{discriminator_forward.8} parent=1 // loop_exit
      _

// kernel: discriminator_forward.9
$region0: #{discriminator_forward.9}
  #allocation0 [shape = 'u32[]', space=smem, size = 0x4, offset = 0x4, fixed_abs, tag = 'smem constant byte address 0x4 - core index']
  #allocation1 [shape = 'u32[144,128]{1,0:T(1,128)}', space=vmem, size = 0x12000, scoped, tag = 'internal scratch']
  %s0 = inlined_call_operand.vmem [shape: bf16[64,512], index: 0, kind: input, shape index: {}]
  %s1 = inlined_call_operand.vmem [shape: bf16[512,128], index: 1, kind: input, shape index: {}]
  %s2 = inlined_call_operand.vmem [shape: bf16[64,128], index: 2, kind: output, shape index: {}]
  %s3 = sld [smem:[#allocation0]]
  $region18: #{discriminator_forward.9} parent=0
    _
  %s5 = ssub.s32 1, %s3
  %s6 = scalar_select 0, %s5, %s3
  // Predicated region
  $region2: #{discriminator_forward.9} parent=0 // pred_check
    _
  $region3: #{discriminator_forward.9} parent=0 // pred_check_branch
    %8 = sbr.rel (0) target = $region5
  $region4: #{discriminator_forward.9} parent=0 // pred_region
    _
  $region5: #{discriminator_forward.9} parent=0 // pred_fallthru
    _
  // Predicated region
  $region6: #{discriminator_forward.9} parent=0 // pred_check
    _
  $region7: #{discriminator_forward.9} parent=0 // pred_check_branch
    %10 = sbr.rel (0) target = $region9
  $region8: #{discriminator_forward.9} parent=0 // pred_region
    _
  $region9: #{discriminator_forward.9} parent=0 // pred_fallthru
    _
  %v12 = vld [vmem:[%s0] sm:$0xff]
  %v13 = vld [vmem:[%s0 + $0x8] sm:$0xff]
  %v14 = vld [vmem:[%s0 + $0x10] sm:$0xff]
  %v15 = vld [vmem:[%s0 + $0x18] sm:$0xff]
  %v16 = vld [vmem:[%s0 + $0x20] sm:$0xff]
  %v17 = vld [vmem:[%s0 + $0x28] sm:$0xff]
  %v18 = vld [vmem:[%s0 + $0x30] sm:$0xff]
  %v19 = vld [vmem:[%s0 + $0x38] sm:$0xff]
  %v20 = vld [vmem:[%s0 + $0x40] sm:$0xff]
  %v21 = vld [vmem:[%s0 + $0x48] sm:$0xff]
  %v22 = vld [vmem:[%s0 + $0x50] sm:$0xff]
  %v23 = vld [vmem:[%s0 + $0x58] sm:$0xff]
  %v24 = vld [vmem:[%s0 + $0x60] sm:$0xff]
  %v25 = vld [vmem:[%s0 + $0x68] sm:$0xff]
  %v26 = vld [vmem:[%s0 + $0x70] sm:$0xff]
  %v27 = vld [vmem:[%s0 + $0x78] sm:$0xff]
  %v28 = vld [vmem:[%s1] sm:$0xf]
  %v29 = vld [vmem:[%s1 + $0x4] sm:$0xf]
  %v30 = vld [vmem:[%s1 + $0x8] sm:$0xf]
  %v31 = vld [vmem:[%s1 + $0xc] sm:$0xf]
  %v32 = vld [vmem:[%s1 + $0x10] sm:$0xf]
  %v33 = vld [vmem:[%s1 + $0x14] sm:$0xf]
  %v34 = vld [vmem:[%s1 + $0x18] sm:$0xf]
  %v35 = vld [vmem:[%s1 + $0x1c] sm:$0xf]
  %v36 = vld [vmem:[%s1 + $0x20] sm:$0xf]
  %v37 = vld [vmem:[%s1 + $0x24] sm:$0xf]
  %v38 = vld [vmem:[%s1 + $0x28] sm:$0xf]
  %v39 = vld [vmem:[%s1 + $0x2c] sm:$0xf]
  %v40 = vld [vmem:[%s1 + $0x30] sm:$0xf]
  %v41 = vld [vmem:[%s1 + $0x34] sm:$0xf]
  %v42 = vld [vmem:[%s1 + $0x38] sm:$0xf]
  %v43 = vld [vmem:[%s1 + $0x3c] sm:$0xf]
  %v44 = vld [vmem:[%s1 + $0x40] sm:$0xf]
  %v45 = vld [vmem:[%s1 + $0x44] sm:$0xf]
  %v46 = vld [vmem:[%s1 + $0x48] sm:$0xf]
  %v47 = vld [vmem:[%s1 + $0x4c] sm:$0xf]
  %v48 = vld [vmem:[%s1 + $0x50] sm:$0xf]
  %v49 = vld [vmem:[%s1 + $0x54] sm:$0xf]
  %v50 = vld [vmem:[%s1 + $0x58] sm:$0xf]
  %v51 = vld [vmem:[%s1 + $0x5c] sm:$0xf]
  %v52 = vld [vmem:[%s1 + $0x60] sm:$0xf]
  %v53 = vld [vmem:[%s1 + $0x64] sm:$0xf]
  %v54 = vld [vmem:[%s1 + $0x68] sm:$0xf]
  %v55 = vld [vmem:[%s1 + $0x6c] sm:$0xf]
  %v56 = vld [vmem:[%s1 + $0x70] sm:$0xf]
  %v57 = vld [vmem:[%s1 + $0x74] sm:$0xf]
  %v58 = vld [vmem:[%s1 + $0x78] sm:$0xf]
  %v59 = vld [vmem:[%s1 + $0x7c] sm:$0xf]
  %v60 = vld [vmem:[%s1 + $0x80] sm:$0xf]
  %v61 = vld [vmem:[%s1 + $0x84] sm:$0xf]
  %v62 = vld [vmem:[%s1 + $0x88] sm:$0xf]
  %v63 = vld [vmem:[%s1 + $0x8c] sm:$0xf]
  %v64 = vld [vmem:[%s1 + $0x90] sm:$0xf]
  %v65 = vld [vmem:[%s1 + $0x94] sm:$0xf]
  %v66 = vld [vmem:[%s1 + $0x98] sm:$0xf]
  %v67 = vld [vmem:[%s1 + $0x9c] sm:$0xf]
  %v68 = vld [vmem:[%s1 + $0xa0] sm:$0xf]
  %v69 = vld [vmem:[%s1 + $0xa4] sm:$0xf]
  %v70 = vld [vmem:[%s1 + $0xa8] sm:$0xf]
  %v71 = vld [vmem:[%s1 + $0xac] sm:$0xf]
  %v72 = vld [vmem:[%s1 + $0xb0] sm:$0xf]
  %v73 = vld [vmem:[%s1 + $0xb4] sm:$0xf]
  %v74 = vld [vmem:[%s1 + $0xb8] sm:$0xf]
  %v75 = vld [vmem:[%s1 + $0xbc] sm:$0xf]
  %v76 = vld [vmem:[%s1 + $0xc0] sm:$0xf]
  %v77 = vld [vmem:[%s1 + $0xc4] sm:$0xf]
  %v78 = vld [vmem:[%s1 + $0xc8] sm:$0xf]
  %v79 = vld [vmem:[%s1 + $0xcc] sm:$0xf]
  %v80 = vld [vmem:[%s1 + $0xd0] sm:$0xf]
  %v81 = vld [vmem:[%s1 + $0xd4] sm:$0xf]
  %v82 = vld [vmem:[%s1 + $0xd8] sm:$0xf]
  %v83 = vld [vmem:[%s1 + $0xdc] sm:$0xf]
  %v84 = vld [vmem:[%s1 + $0xe0] sm:$0xf]
  %v85 = vld [vmem:[%s1 + $0xe4] sm:$0xf]
  %v86 = vld [vmem:[%s1 + $0xe8] sm:$0xf]
  %v87 = vld [vmem:[%s1 + $0xec] sm:$0xf]
  %v88 = vld [vmem:[%s1 + $0xf0] sm:$0xf]
  %v89 = vld [vmem:[%s1 + $0xf4] sm:$0xf]
  %v90 = vld [vmem:[%s1 + $0xf8] sm:$0xf]
  %v91 = vld [vmem:[%s1 + $0xfc] sm:$0xf]
  %v108 = vunpack.c.l.b16 %v12
  %v109 = vunpack.c.h.b16 %v12
  %v110 = vunpack.c.l.b16 %v13
  %v111 = vunpack.c.h.b16 %v13
  %v112 = vunpack.c.l.b16 %v14
  %v113 = vunpack.c.h.b16 %v14
  %v114 = vunpack.c.l.b16 %v15
  %v115 = vunpack.c.h.b16 %v15
  %v116 = vunpack.c.l.b16 %v16
  %v117 = vunpack.c.h.b16 %v16
  %v118 = vunpack.c.l.b16 %v17
  %v119 = vunpack.c.h.b16 %v17
  %v120 = vunpack.c.l.b16 %v18
  %v121 = vunpack.c.h.b16 %v18
  %v122 = vunpack.c.l.b16 %v19
  %v123 = vunpack.c.h.b16 %v19
  %v124 = vunpack.c.l.b16 %v20
  %v125 = vunpack.c.h.b16 %v20
  %v126 = vunpack.c.l.b16 %v21
  %v127 = vunpack.c.h.b16 %v21
  %v128 = vunpack.c.l.b16 %v22
  %v129 = vunpack.c.h.b16 %v22
  %v130 = vunpack.c.l.b16 %v23
  %v131 = vunpack.c.h.b16 %v23
  %v132 = vunpack.c.l.b16 %v24
  %v133 = vunpack.c.h.b16 %v24
  %v134 = vunpack.c.l.b16 %v25
  %v135 = vunpack.c.h.b16 %v25
  %v136 = vunpack.c.l.b16 %v26
  %v137 = vunpack.c.h.b16 %v26
  %v138 = vunpack.c.l.b16 %v27
  %v139 = vunpack.c.h.b16 %v27
  %v140 = vpack.c.b16 %v112, %v108
  %v141 = vpack.c.b16 %v113, %v109
  %v142 = vpack.c.b16 %v114, %v110
  %v143 = vpack.c.b16 %v115, %v111
  %v144 = vpack.c.b16 %v120, %v116
  %v145 = vpack.c.b16 %v121, %v117
  %v146 = vpack.c.b16 %v122, %v118
  %v147 = vpack.c.b16 %v123, %v119
  %v148 = vpack.c.b16 %v128, %v124
  %v149 = vpack.c.b16 %v129, %v125
  %v150 = vpack.c.b16 %v130, %v126
  %v151 = vpack.c.b16 %v131, %v127
  %v152 = vpack.c.b16 %v136, %v132
  %v153 = vpack.c.b16 %v137, %v133
  %v154 = vpack.c.b16 %v138, %v134
  %v155 = vpack.c.b16 %v139, %v135
  %v236 = vunpack.c.l.b16 %v28
  %v237 = vunpack.c.l.b16 %v29
  %v238 = vunpack.c.l.b16 %v30
  %v239 = vunpack.c.l.b16 %v31
  %v240 = vunpack.c.l.b16 %v32
  %v241 = vunpack.c.l.b16 %v33
  %v242 = vunpack.c.l.b16 %v34
  %v243 = vunpack.c.l.b16 %v35
  %v244 = vunpack.c.l.b16 %v36
  %v245 = vunpack.c.l.b16 %v37
  %v246 = vunpack.c.l.b16 %v38
  %v247 = vunpack.c.l.b16 %v39
  %v248 = vunpack.c.l.b16 %v40
  %v249 = vunpack.c.l.b16 %v41
  %v250 = vunpack.c.l.b16 %v42
  %v251 = vunpack.c.l.b16 %v43
  %v252 = vunpack.c.l.b16 %v44
  %v253 = vunpack.c.l.b16 %v45
  %v254 = vunpack.c.l.b16 %v46
  %v255 = vunpack.c.l.b16 %v47
  %v256 = vunpack.c.l.b16 %v48
  %v257 = vunpack.c.l.b16 %v49
  %v258 = vunpack.c.l.b16 %v50
  %v259 = vunpack.c.l.b16 %v51
  %v260 = vunpack.c.l.b16 %v52
  %v261 = vunpack.c.l.b16 %v53
  %v262 = vunpack.c.l.b16 %v54
  %v263 = vunpack.c.l.b16 %v55
  %v264 = vunpack.c.l.b16 %v56
  %v265 = vunpack.c.l.b16 %v57
  %v266 = vunpack.c.l.b16 %v58
  %v267 = vunpack.c.l.b16 %v59
  %v268 = vunpack.c.l.b16 %v60
  %v269 = vunpack.c.l.b16 %v61
  %v270 = vunpack.c.l.b16 %v62
  %v271 = vunpack.c.l.b16 %v63
  %v272 = vunpack.c.l.b16 %v64
  %v273 = vunpack.c.l.b16 %v65
  %v274 = vunpack.c.l.b16 %v66
  %v275 = vunpack.c.l.b16 %v67
  %v276 = vunpack.c.l.b16 %v68
  %v277 = vunpack.c.l.b16 %v69
  %v278 = vunpack.c.l.b16 %v70
  %v279 = vunpack.c.l.b16 %v71
  %v280 = vunpack.c.l.b16 %v72
  %v281 = vunpack.c.l.b16 %v73
  %v282 = vunpack.c.l.b16 %v74
  %v283 = vunpack.c.l.b16 %v75
  %v284 = vunpack.c.l.b16 %v76
  %v285 = vunpack.c.l.b16 %v77
  %v286 = vunpack.c.l.b16 %v78
  %v287 = vunpack.c.l.b16 %v79
  %v288 = vunpack.c.l.b16 %v80
  %v289 = vunpack.c.l.b16 %v81
  %v290 = vunpack.c.l.b16 %v82
  %v291 = vunpack.c.l.b16 %v83
  %v292 = vunpack.c.l.b16 %v84
  %v293 = vunpack.c.l.b16 %v85
  %v294 = vunpack.c.l.b16 %v86
  %v295 = vunpack.c.l.b16 %v87
  %v296 = vunpack.c.l.b16 %v88
  %v297 = vunpack.c.l.b16 %v89
  %v298 = vunpack.c.l.b16 %v90
  %v299 = vunpack.c.l.b16 %v91
  %v300 = vpack.c.b16 %v237, %v236
  %v301 = vpack.c.b16 %v239, %v238
  %v302 = vpack.c.b16 %v241, %v240
  %v303 = vpack.c.b16 %v243, %v242
  %v304 = vpack.c.b16 %v245, %v244
  %v305 = vpack.c.b16 %v247, %v246
  %v306 = vpack.c.b16 %v249, %v248
  %v307 = vpack.c.b16 %v251, %v250
  %v308 = vpack.c.b16 %v253, %v252
  %v309 = vpack.c.b16 %v255, %v254
  %v310 = vpack.c.b16 %v257, %v256
  %v311 = vpack.c.b16 %v259, %v258
  %v312 = vpack.c.b16 %v261, %v260
  %v313 = vpack.c.b16 %v263, %v262
  %v314 = vpack.c.b16 %v265, %v264
  %v315 = vpack.c.b16 %v267, %v266
  %v316 = vpack.c.b16 %v269, %v268
  %v317 = vpack.c.b16 %v271, %v270
  %v318 = vpack.c.b16 %v273, %v272
  %v319 = vpack.c.b16 %v275, %v274
  %v320 = vpack.c.b16 %v277, %v276
  %v321 = vpack.c.b16 %v279, %v278
  %v322 = vpack.c.b16 %v281, %v280
  %v323 = vpack.c.b16 %v283, %v282
  %v324 = vpack.c.b16 %v285, %v284
  %v325 = vpack.c.b16 %v287, %v286
  %v326 = vpack.c.b16 %v289, %v288
  %v327 = vpack.c.b16 %v291, %v290
  %v328 = vpack.c.b16 %v293, %v292
  %v329 = vpack.c.b16 %v295, %v294
  %v330 = vpack.c.b16 %v297, %v296
  %v331 = vpack.c.b16 %v299, %v298
  %364 = vmatprep.subr.bf16.mxu0 0
  %365 = vmatpush1.bf16.msra.mxu0 %v307
  %366 = vmatprep.subr.bf16.mxu0 0
  %367 = vmatpush1.bf16.msra.mxu0 %v306
  %368 = vmatprep.subr.bf16.mxu0 0
  %369 = vmatpush1.bf16.msra.mxu0 %v305
  %370 = vmatprep.subr.bf16.mxu0 0
  %371 = vmatpush1.bf16.msra.mxu0 %v304
  %372 = vmatprep.subr.bf16.mxu0 0
  %373 = vmatpush1.bf16.msra.mxu0 %v303
  %374 = vmatprep.subr.bf16.mxu0 0
  %375 = vmatpush1.bf16.msra.mxu0 %v302
  %376 = vmatprep.subr.bf16.mxu0 0
  %377 = vmatpush1.bf16.msra.mxu0 %v301
  %378 = vmatprep.subr.bf16.mxu0 0
  %379 = vmatpush1.bf16.msra.mxu0 %v300
  %380 = vmatprep.subr.bf16.mxu0 0
  %381 = vmatpush2.bf16.msra.mxu0 %v315
  %382 = vmatprep.subr.bf16.mxu0 0
  %383 = vmatpush2.bf16.msra.mxu0 %v314
  %384 = vmatprep.subr.bf16.mxu0 0
  %385 = vmatpush2.bf16.msra.mxu0 %v313
  %386 = vmatprep.subr.bf16.mxu0 0
  %387 = vmatpush2.bf16.msra.mxu0 %v312
  %388 = vmatprep.subr.bf16.mxu0 0
  %389 = vmatpush2.bf16.msra.mxu0 %v311
  %390 = vmatprep.subr.bf16.mxu0 0
  %391 = vmatpush2.bf16.msra.mxu0 %v310
  %392 = vmatprep.subr.bf16.mxu0 0
  %393 = vmatpush2.bf16.msra.mxu0 %v309
  %394 = vmatprep.subr.bf16.mxu0 0
  %395 = vmatpush2.bf16.msra.mxu0 %v308
  %396 = vmatprep.mubr.bf16.mxu0 %v141
  %397 = vmatmul.mubr.bf16.gmra.mxu0 %v140
  %v398 = vpop.f32.mrf.mxu0
  %v399 = vadd.f32 0.0, %v398
  %v400 = vpop.f32.mrf.mxu0
  %v401 = vpop.f32.mrf.mxu0
  %v402 = vadd.f32 0.0, %v401
  %v403 = vpop.f32.mrf.mxu0
  %404 = vmatprep.mubr.bf16.mxu0 %v145
  %405 = vmatmul.mubr.bf16.gmra.mxu0 %v144
  %v406 = vpop.f32.mrf.mxu0
  %v407 = vadd.f32 0.0, %v406
  %v408 = vpop.f32.mrf.mxu0
  %v409 = vpop.f32.mrf.mxu0
  %v410 = vadd.f32 0.0, %v409
  %v411 = vpop.f32.mrf.mxu0
  %412 = vmatprep.mubr.bf16.mxu0 %v149
  %413 = vmatmul.mubr.bf16.gmra.mxu0 %v148
  %v414 = vpop.f32.mrf.mxu0
  %v415 = vadd.f32 0.0, %v414
  %v416 = vpop.f32.mrf.mxu0
  %v417 = vpop.f32.mrf.mxu0
  %v418 = vadd.f32 0.0, %v417
  %v419 = vpop.f32.mrf.mxu0
  %420 = vmatprep.mubr.bf16.mxu0 %v153
  %421 = vmatmul.mubr.bf16.gmra.mxu0 %v152
  %v422 = vpop.f32.mrf.mxu0
  %v423 = vadd.f32 0.0, %v422
  %v424 = vpop.f32.mrf.mxu0
  %v425 = vpop.f32.mrf.mxu0
  %v426 = vadd.f32 0.0, %v425
  %v427 = vpop.f32.mrf.mxu0
  %428 = vdwg.mxu0
  %429 = vmatprep.subr.bf16.mxu0 0
  %430 = vmatpush1.bf16.msra.mxu0 %v323
  %431 = vmatprep.subr.bf16.mxu0 0
  %432 = vmatpush1.bf16.msra.mxu0 %v322
  %433 = vmatprep.subr.bf16.mxu0 0
  %434 = vmatpush1.bf16.msra.mxu0 %v321
  %435 = vmatprep.subr.bf16.mxu0 0
  %436 = vmatpush1.bf16.msra.mxu0 %v320
  %437 = vmatprep.subr.bf16.mxu0 0
  %438 = vmatpush1.bf16.msra.mxu0 %v319
  %439 = vmatprep.subr.bf16.mxu0 0
  %440 = vmatpush1.bf16.msra.mxu0 %v318
  %441 = vmatprep.subr.bf16.mxu0 0
  %442 = vmatpush1.bf16.msra.mxu0 %v317
  %443 = vmatprep.subr.bf16.mxu0 0
  %444 = vmatpush1.bf16.msra.mxu0 %v316
  %445 = vmatprep.subr.bf16.mxu0 0
  %446 = vmatpush2.bf16.msra.mxu0 %v331
  %447 = vmatprep.subr.bf16.mxu0 0
  %448 = vmatpush2.bf16.msra.mxu0 %v330
  %449 = vmatprep.subr.bf16.mxu0 0
  %450 = vmatpush2.bf16.msra.mxu0 %v329
  %451 = vmatprep.subr.bf16.mxu0 0
  %452 = vmatpush2.bf16.msra.mxu0 %v328
  %453 = vmatprep.subr.bf16.mxu0 0
  %454 = vmatpush2.bf16.msra.mxu0 %v327
  %455 = vmatprep.subr.bf16.mxu0 0
  %456 = vmatpush2.bf16.msra.mxu0 %v326
  %457 = vmatprep.subr.bf16.mxu0 0
  %458 = vmatpush2.bf16.msra.mxu0 %v325
  %459 = vmatprep.subr.bf16.mxu0 0
  %460 = vmatpush2.bf16.msra.mxu0 %v324
  %461 = vmatprep.mubr.bf16.mxu0 %v143
  %462 = vmatmul.mubr.bf16.gmra.mxu0 %v142
  %v463 = vpop.f32.mrf.mxu0
  %v464 = vadd.f32 %v399, %v463
  %v465 = vpop.f32.mrf.mxu0
  %v466 = vpop.f32.mrf.mxu0
  %v467 = vadd.f32 %v402, %v466
  %v468 = vpop.f32.mrf.mxu0
  %469 = vmatprep.mubr.bf16.mxu0 %v147
  %470 = vmatmul.mubr.bf16.gmra.mxu0 %v146
  %v471 = vpop.f32.mrf.mxu0
  %v472 = vadd.f32 %v407, %v471
  %v473 = vpop.f32.mrf.mxu0
  %v474 = vpop.f32.mrf.mxu0
  %v475 = vadd.f32 %v410, %v474
  %v476 = vpop.f32.mrf.mxu0
  %477 = vmatprep.mubr.bf16.mxu0 %v151
  %478 = vmatmul.mubr.bf16.gmra.mxu0 %v150
  %v479 = vpop.f32.mrf.mxu0
  %v480 = vadd.f32 %v415, %v479
  %v481 = vpop.f32.mrf.mxu0
  %v482 = vpop.f32.mrf.mxu0
  %v483 = vadd.f32 %v418, %v482
  %v484 = vpop.f32.mrf.mxu0
  %485 = vmatprep.mubr.bf16.mxu0 %v155
  %486 = vmatmul.mubr.bf16.gmra.mxu0 %v154
  %v487 = vpop.f32.mrf.mxu0
  %v488 = vadd.f32 %v423, %v487
  %v489 = vpop.f32.mrf.mxu0
  %v490 = vpop.f32.mrf.mxu0
  %v491 = vadd.f32 %v426, %v490
  %v492 = vpop.f32.mrf.mxu0
  %493 = vdwg.mxu0
  %vm494 = vcmp.ge.f32.partialorder %v464, 0.0
  %vm495 = vcmp.ge.f32.partialorder %v467, 0.0
  %vm496 = vcmp.ge.f32.partialorder %v472, 0.0
  %vm497 = vcmp.ge.f32.partialorder %v475, 0.0
  %vm498 = vcmp.ge.f32.partialorder %v480, 0.0
  %vm499 = vcmp.ge.f32.partialorder %v483, 0.0
  %vm500 = vcmp.ge.f32.partialorder %v488, 0.0
  %vm501 = vcmp.ge.f32.partialorder %v491, 0.0
  %v502 = vmul.f32 %v464, 0.2
  %v503 = vmul.f32 %v467, 0.2
  %v504 = vmul.f32 %v472, 0.2
  %v505 = vmul.f32 %v475, 0.2
  %v506 = vmul.f32 %v480, 0.2
  %v507 = vmul.f32 %v483, 0.2
  %v508 = vmul.f32 %v488, 0.2
  %v509 = vmul.f32 %v491, 0.2
  %v510 = vsel %vm494, %v464, %v502
  %v511 = vsel %vm495, %v467, %v503
  %v512 = vsel %vm496, %v472, %v504
  %v513 = vsel %vm497, %v475, %v505
  %v514 = vsel %vm498, %v480, %v506
  %v515 = vsel %vm499, %v483, %v507
  %v516 = vsel %vm500, %v488, %v508
  %v517 = vsel %vm501, %v491, %v509
  %v518 = vpack.c.bf16 %v511, %v510
  %v519 = vpack.c.bf16 %v513, %v512
  %v520 = vpack.c.bf16 %v515, %v514
  %v521 = vpack.c.bf16 %v517, %v516
  %v526 = vunpack.c.l.b16 %v518
  %v527 = vunpack.c.h.b16 %v518
  %v528 = vunpack.c.l.b16 %v519
  %v529 = vunpack.c.h.b16 %v519
  %v530 = vunpack.c.l.b16 %v520
  %v531 = vunpack.c.h.b16 %v520
  %v532 = vunpack.c.l.b16 %v521
  %v533 = vunpack.c.h.b16 %v521
  %v534 = vpack.c.b16 %v526, %v526
  %v535 = vpack.c.b16 %v527, %v527
  %v536 = vpack.c.b16 %v528, %v528
  %v537 = vpack.c.b16 %v529, %v529
  %v538 = vpack.c.b16 %v530, %v530
  %v539 = vpack.c.b16 %v531, %v531
  %v540 = vpack.c.b16 %v532, %v532
  %v541 = vpack.c.b16 %v533, %v533
  %550 = vst [vmem:[%s2] sm:$0xf] %v534
  %551 = vst [vmem:[%s2 + $0x4] sm:$0xf] %v535
  %552 = vst [vmem:[%s2 + $0x8] sm:$0xf] %v536
  %553 = vst [vmem:[%s2 + $0xc] sm:$0xf] %v537
  %554 = vst [vmem:[%s2 + $0x10] sm:$0xf] %v538
  %555 = vst [vmem:[%s2 + $0x14] sm:$0xf] %v539
  %556 = vst [vmem:[%s2 + $0x18] sm:$0xf] %v540
  %557 = vst [vmem:[%s2 + $0x1c] sm:$0xf] %v541
  // Predicated region
  $region10: #{discriminator_forward.9} parent=0 // pred_check
    _
  $region11: #{discriminator_forward.9} parent=0 // pred_check_branch
    %559 = sbr.rel (0) target = $region13
  $region12: #{discriminator_forward.9} parent=0 // pred_region
    _
  $region13: #{discriminator_forward.9} parent=0 // pred_fallthru
    _
  // Predicated region
  $region14: #{discriminator_forward.9} parent=0 // pred_check
    _
  $region15: #{discriminator_forward.9} parent=0 // pred_check_branch
    %561 = sbr.rel (0) target = $region17
  $region16: #{discriminator_forward.9} parent=0 // pred_region
    _
  $region17: #{discriminator_forward.9} parent=0 // pred_fallthru
    _

</llo_original>
